<compile_context>
chip_gen: v6e
topology: v6e:2x2x1
jax: 0.10.0
libtpu: 0.0.40
codegen_flags: <defaults>
</compile_context>

<pallas_src>
import functools

import jax
import jax.numpy as jnp
from jax.experimental import pallas as pl
from jax.experimental.pallas import tpu as pltpu


# ----------------------------- Pallas kernel ------------------------------- #

def _bottleneck_kernel(x_ref, w1_ref, b1_ref, w2_ref, b2_ref, w3_ref, b3_ref,
                       o_ref, t1p_ref, *, H, W, d):
    """Fused Bottleneck forward for one image (grid iterates over batch).

    x_ref : (H*W, Cin)      bf16 flattened NHWC input (also the residual)
    w1_ref: (Cin, P)        bf16, BN1 scale folded in
    w2_ref: (9, P, P)       bf16, BN2 scale folded in (tap = 3*ki + kj)
    w3_ref: (P, Cout)       bf16, BN3 scale folded in
    b*_ref: (1, C)          f32 folded BN biases
    o_ref : (H*W, Cout)     output (input dtype)
    t1p_ref: (H+2d, W+2d, P) f32 VMEM scratch — zero-padded conv1 activations
    """
    P = w1_ref.shape[1]
    xm = x_ref[...]                                          # (H*W, Cin) bf16

    # ---- conv1 (1x1) + folded-BN bias + relu --------------------------------
    y1 = jnp.dot(xm, w1_ref[...], preferred_element_type=jnp.float32)
    y1 = jnp.maximum(y1 + b1_ref[...], 0.0)                  # (H*W, P) f32

    # Zero-padded activation frame in VMEM == conv2's zero padding.
    t1p_ref[...] = jnp.zeros_like(t1p_ref)
    t1p_ref[pl.ds(d, H), pl.ds(d, W), :] = y1.reshape(H, W, P)

    # ---- conv2 (3x3, stride=1, dilation=d) as 9 accumulating matmuls --------
    acc = jnp.zeros((H * W, P), jnp.float32)
    for ki in range(3):
        for kj in range(3):
            win = t1p_ref[pl.ds(ki * d, H), pl.ds(kj * d, W), :]  # (H, W, P)
            win = win.reshape(H * W, P).astype(w2_ref.dtype)      # -> bf16
            acc = acc + jnp.dot(win, w2_ref[3 * ki + kj],
                                preferred_element_type=jnp.float32)
    y2 = jnp.maximum(acc + b2_ref[...], 0.0)                 # (H*W, P) f32

    # ---- conv3 (1x1) + folded-BN bias + residual + relu ---------------------
    y3 = jnp.dot(y2.astype(w3_ref.dtype), w3_ref[...],
                 preferred_element_type=jnp.float32)
    y3 = y3 + b3_ref[...] + xm.astype(jnp.float32)           # identity residual
    # NOTE: with Cout < 128 this store is lane-masked; real ResNet stages
    # (Cout in {256,512,1024,2048}) are lane-dense.
    o_ref[...] = jnp.maximum(y3, 0.0).astype(o_ref.dtype)


# ------------------------------- wrappers ----------------------------------- #

def _fold_bn(gamma, beta, mean, var, eps=1e-5):
    scale = gamma / jnp.sqrt(var + eps)
    bias = beta - mean * scale
    return scale, bias


def bottleneck_forward_nhwc(x_nhwc, params, stride=1, dilation=1,
                            compute_dtype=jnp.bfloat16):
    """NHWC-native fused Bottleneck (downsample=None)."""
    N, H, W, Cin = x_nhwc.shape
    P = params["w1"].shape[1]
    Cout = params["w3"].shape[1]
    if stride != 1 or Cin != Cout:
        raise ValueError(
            "Bottleneck with downsample=None requires stride == 1 and "
            "inplanes == planes * 4 (residual shapes must match).")
    d = int(dilation)

    # Fold eval-mode BN scale into the weight columns (trace-time, free);
    # only a per-channel bias survives into the kernel epilogue.
    s1, b1 = _fold_bn(*params["bn1"])
    s2, b2 = _fold_bn(*params["bn2"])
    s3, b3 = _fold_bn(*params["bn3"])
    w1 = (params["w1"] * s1[None, :]).astype(compute_dtype)                # (Cin, P)
    w2 = (params["w2"] * s2[None, :]).astype(compute_dtype).reshape(9, P, P)
    w3 = (params["w3"] * s3[None, :]).astype(compute_dtype)                # (P, Cout)
    b1 = b1.reshape(1, P).astype(jnp.float32)
    b2 = b2.reshape(1, P).astype(jnp.float32)
    b3 = b3.reshape(1, Cout).astype(jnp.float32)

    # bf16 activations halve HBM read traffic; flatten spatial dims (free).
    xm = x_nhwc.astype(compute_dtype).reshape(N, H * W, Cin)

    kernel = functools.partial(_bottleneck_kernel, H=H, W=W, d=d)
    out = pl.pallas_call(
        kernel,
        out_shape=jax.ShapeDtypeStruct((N, H * W, Cout), x_nhwc.dtype),
        grid=(N,),
        in_specs=[
            pl.BlockSpec((None, H * W, Cin), lambda n: (n, 0, 0)),   # x / residual
            pl.BlockSpec((Cin, P), lambda n: (0, 0)),                # w1 (resident)
            pl.BlockSpec((1, P), lambda n: (0, 0)),                  # b1
            pl.BlockSpec((9, P, P), lambda n: (0, 0, 0)),            # w2 (resident)
            pl.BlockSpec((1, P), lambda n: (0, 0)),                  # b2
            pl.BlockSpec((P, Cout), lambda n: (0, 0)),               # w3 (resident)
            pl.BlockSpec((1, Cout), lambda n: (0, 0)),               # b3
        ],
        out_specs=pl.BlockSpec((None, H * W, Cout), lambda n: (n, 0, 0)),
        scratch_shapes=[pltpu.VMEM((H + 2 * d, W + 2 * d, P), jnp.float32)],
        compiler_params=pltpu.CompilerParams(
            dimension_semantics=("parallel",),          # batch shards over TCs
            vmem_limit_bytes=48 * 1024 * 1024),         # < v7x 64 MiB physical
    )(xm, w1, b1, w2, b2, w3, b3)
    return out.reshape(N, H, W, Cout)


def bottleneck_forward(x_nchw, params, stride=1, dilation=1):
    """PyTorch-parity wrapper: NCHW in / NCHW out (one transpose each way)."""
    x = jnp.transpose(x_nchw, (0, 2, 3, 1))
    out = bottleneck_forward_nhwc(x, params, stride=stride, dilation=dilation)
    return jnp.transpose(out, (0, 3, 1, 2))


# ----------------------------- references ----------------------------------- #

def _conv_nhwc(x, w, stride, dilation, pad):
    return jax.lax.conv_general_dilated(
        x, w, window_strides=(stride, stride),
        padding=[(pad, pad), (pad, pad)], rhs_dilation=(dilation, dilation),
        dimension_numbers=("NHWC", "HWIO", "NHWC"),
        preferred_element_type=jnp.float32)


def bottleneck_reference_folded(x_nchw, params, dilation=1,
                                compute_dtype=jnp.bfloat16):
    """Same math as the kernel (folded BN, bf16 operands, f32 accumulation)."""
    x = jnp.transpose(x_nchw, (0, 2, 3, 1)).astype(compute_dtype)
    Cin = x.shape[-1]
    P = params["w1"].shape[1]
    Cout = params["w3"].shape[1]
    s1, b1 = _fold_bn(*params["bn1"])
    s2, b2 = _fold_bn(*params["bn2"])
    s3, b3 = _fold_bn(*params["bn3"])
    w1 = (params["w1"] * s1[None, :]).astype(compute_dtype).reshape(1, 1, Cin, P)
    w2 = (params["w2"] * s2[None, :]).astype(compute_dtype).reshape(3, 3, P, P)
    w3 = (params["w3"] * s3[None, :]).astype(compute_dtype).reshape(1, 1, P, Cout)
    a = jnp.maximum(_conv_nhwc(x, w1, 1, 1, 0) + b1, 0.0).astype(compute_dtype)
    a = jnp.maximum(_conv_nhwc(a, w2, 1, dilation, dilation) + b2,
                    0.0).astype(compute_dtype)
    y = _conv_nhwc(a, w3, 1, 1, 0) + b3 + x.astype(jnp.float32)
    out = jnp.maximum(y, 0.0).astype(x_nchw.dtype)
    return jnp.transpose(out, (0, 3, 1, 2))


def bottleneck_reference_f32(x_nchw, params, stride=1, dilation=1):
    """Full-precision unfused reference of the PyTorch module (eval-mode BN)."""
    x = jnp.transpose(x_nchw, (0, 2, 3, 1))
    Cin = x.shape[-1]
    P = params["w1"].shape[1]
    Cout = params["w3"].shape[1]
    w1 = params["w1"].reshape(1, 1, Cin, P)
    w2 = params["w2"].reshape(3, 3, P, P)
    w3 = params["w3"].reshape(1, 1, P, Cout)

    def bn(y, gamma, beta, mean, var, eps=1e-5):
        return (y - mean) / jnp.sqrt(var + eps) * gamma + beta

    out = jax.nn.relu(bn(_conv_nhwc(x, w1, 1, 1, 0), *params["bn1"]))
    out = jax.nn.relu(bn(_conv_nhwc(out, w2, stride, dilation, dilation),
                         *params["bn2"]))
    out = bn(_conv_nhwc(out, w3, 1, 1, 0), *params["bn3"])
    out = jax.nn.relu(out + x)
    return jnp.transpose(out, (0, 3, 1, 2))


# --------------------------------- main ------------------------------------- #

def make_params(key, inplanes, planes):
    ks = jax.random.split(key, 6)

    def bn(k, c):
        k1, k2, k3, k4 = jax.random.split(k, 4)
        gamma = 1.0 + 0.1 * jax.random.normal(k1, (c,), jnp.float32)
        beta = 0.1 * jax.random.normal(k2, (c,), jnp.float32)
        mean = 0.1 * jax.random.normal(k3, (c,), jnp.float32)
        var = jnp.abs(jax.random.normal(k4, (c,), jnp.float32)) + 0.5
        return (gamma, beta, mean, var)

    # Weights stored channels-last: 1x1 as (Cin, Cout); 3x3 as (3*3*Cin, Cout)
    # with row index (ki*3 + kj)*Cin + cin  (== PyTorch OIHW -> HWIO flattened).
    return {
        "w1": 0.1 * jax.random.normal(ks[0], (inplanes, planes), jnp.float32),
        "w2": 0.1 * jax.random.normal(ks[1], (9 * planes, planes), jnp.float32),
        "w3": 0.1 * jax.random.normal(ks[2], (planes, 4 * planes), jnp.float32),
        "bn1": bn(ks[3], planes),
        "bn2": bn(ks[4], planes),
        "bn3": bn(ks[5], 4 * planes),
    }


if __name__ == "__main__":
    # Bottleneck with downsample=None => inplanes == planes*4, stride == 1.
    N, planes, H, W = 2, 4, 16, 16
    inplanes = planes * 4            # 16

    key = jax.random.PRNGKey(0)
    kx, kp = jax.random.split(key)
    x = jax.random.normal(kx, (N, inplanes, H, W), jnp.float32)   # NCHW
    params = make_params(kp, inplanes, planes)

    for dilation in (1, 2):
        fwd = jax.jit(functools.partial(bottleneck_forward,
                                        stride=1, dilation=dilation))
        out = jax.block_until_ready(fwd(x, params))
        assert out.shape == (N, inplanes, H, W)

        # Tight check vs. an XLA-conv reference doing the *same* math
        # (folded BN, bf16 operands, f32 accumulation).
        ref_bf16 = bottleneck_reference_folded(x, params, dilation=dilation)
        err = float(jnp.max(jnp.abs(out - ref_bf16)))
        assert err < 2e-2, f"dilation={dilation}: folded-bf16 ref max err {err}"

        # Loose sanity check vs. the full-precision unfused module semantics
        # (difference is only bf16 operand rounding).
        ref_f32 = bottleneck_reference_f32(x, params, stride=1,
                                           dilation=dilation)
        err32 = float(jnp.max(jnp.abs(out - ref_f32)))
        assert err32 < 0.1, f"dilation={dilation}: f32 ref max err {err32}"

    print("KERNEL_OK")
</pallas_src>

<mosaic_0001>
module attributes {stable_mosaic.version = 11 : i64} {
  func.func @_bottleneck_kernel(%arg0: i32, %arg1: memref<1x256x16xbf16, #tpu.memory_space<vmem>>, %arg2: memref<16x4xbf16, #tpu.memory_space<vmem>>, %arg3: memref<1x4xf32, #tpu.memory_space<vmem>>, %arg4: memref<9x4x4xbf16, #tpu.memory_space<vmem>>, %arg5: memref<1x4xf32, #tpu.memory_space<vmem>>, %arg6: memref<4x16xbf16, #tpu.memory_space<vmem>>, %arg7: memref<1x16xf32, #tpu.memory_space<vmem>>, %arg8: memref<1x256x16xf32, #tpu.memory_space<vmem>>, %arg9: memref<18x18x4xf32, #tpu.memory_space<vmem>>) attributes {dimension_semantics = [#tpu.dimension_semantics<parallel>], iteration_bounds = array<i64: 2>, scalar_prefetch = 0 : i64, scratch_operands = 1 : i64, tpu.core_type = #tpu.core_type<tc>, window_params = [{transform_indices = @transform_0, window_bounds = array<i64: 1, 256, 16>}, {pipeline_mode = #tpu.pipeline_mode<synchronous>, transform_indices = @transform_1, window_bounds = array<i64: 16, 4>}, {pipeline_mode = #tpu.pipeline_mode<synchronous>, transform_indices = @transform_2, window_bounds = array<i64: 1, 4>}, {pipeline_mode = #tpu.pipeline_mode<synchronous>, transform_indices = @transform_3, window_bounds = array<i64: 9, 4, 4>}, {pipeline_mode = #tpu.pipeline_mode<synchronous>, transform_indices = @transform_4, window_bounds = array<i64: 1, 4>}, {pipeline_mode = #tpu.pipeline_mode<synchronous>, transform_indices = @transform_5, window_bounds = array<i64: 4, 16>}, {pipeline_mode = #tpu.pipeline_mode<synchronous>, transform_indices = @transform_6, window_bounds = array<i64: 1, 16>}, {transform_indices = @transform_7, window_bounds = array<i64: 1, 256, 16>}]} {
    %c0 = arith.constant 0 : index
    %c0_0 = arith.constant 0 : index
    %c0_1 = arith.constant 0 : index
    %0 = vector.load %arg1[%c0, %c0_0, %c0_1] : memref<1x256x16xbf16, #tpu.memory_space<vmem>>, vector<1x256x16xbf16>
    %1 = vector.shape_cast %0 : vector<1x256x16xbf16> to vector<256x16xbf16>
    %c0_2 = arith.constant 0 : index
    %c0_3 = arith.constant 0 : index
    %2 = vector.load %arg2[%c0_2, %c0_3] : memref<16x4xbf16, #tpu.memory_space<vmem>>, vector<16x4xbf16>
    %cst = arith.constant dense<0.000000e+00> : vector<256x4xf32>
    %3 = tpu.matmul %1, %2, %cst {dimension_numbers = #tpu.dot_dimension_numbers<[1], [0], [0], [1], [0, 0, 1, 1], [], []>} : vector<256x16xbf16>, vector<16x4xbf16>, vector<256x4xf32> -> vector<256x4xf32>
    %c0_4 = arith.constant 0 : index
    %c0_5 = arith.constant 0 : index
    %4 = vector.load %arg3[%c0_4, %c0_5] : memref<1x4xf32, #tpu.memory_space<vmem>>, vector<1x4xf32>
    %5 = vector.broadcast %4 : vector<1x4xf32> to vector<256x4xf32>
    %6 = arith.addf %3, %5 : vector<256x4xf32>
    %cst_6 = arith.constant 0.000000e+00 : f32
    %7 = vector.broadcast %cst_6 : f32 to vector<256x4xf32>
    %8 = arith.maximumf %6, %7 : vector<256x4xf32>
    %cst_7 = arith.constant 0.000000e+00 : f32
    %9 = vector.broadcast %cst_7 : f32 to vector<18x18x4xf32>
    %c0_8 = arith.constant 0 : index
    %c0_9 = arith.constant 0 : index
    %c0_10 = arith.constant 0 : index
    %10 = vector.load %arg9[%c0_8, %c0_9, %c0_10] : memref<18x18x4xf32, #tpu.memory_space<vmem>>, vector<18x18x4xf32>
    tpu.vector_store %arg9[%c0_8, %c0_9, %c0_10], %9 {strides = array<i32>} : memref<18x18x4xf32, #tpu.memory_space<vmem>>, vector<18x18x4xf32>,
    %11 = vector.shape_cast %8 : vector<256x4xf32> to vector<16x16x4xf32>
    %c1 = arith.constant 1 : index
    %c1_11 = arith.constant 1 : index
    %c0_12 = arith.constant 0 : index
    %12 = vector.load %arg9[%c1, %c1_11, %c0_12] : memref<18x18x4xf32, #tpu.memory_space<vmem>>, vector<16x16x4xf32>
    tpu.vector_store %arg9[%c1, %c1_11, %c0_12], %11 {strides = array<i32>} : memref<18x18x4xf32, #tpu.memory_space<vmem>>, vector<16x16x4xf32>,
    %cst_13 = arith.constant 0.000000e+00 : f32
    %13 = vector.broadcast %cst_13 : f32 to vector<256x4xf32>
    %c0_14 = arith.constant 0 : index
    %c0_15 = arith.constant 0 : index
    %c0_16 = arith.constant 0 : index
    %14 = vector.load %arg9[%c0_14, %c0_15, %c0_16] : memref<18x18x4xf32, #tpu.memory_space<vmem>>, vector<16x16x4xf32>
    %15 = vector.shape_cast %14 : vector<16x16x4xf32> to vector<256x4xf32>
    %16 = arith.truncf %15 : vector<256x4xf32> to vector<256x4xbf16>
    %c0_17 = arith.constant 0 : index
    %c0_18 = arith.constant 0 : index
    %c0_19 = arith.constant 0 : index
    %17 = vector.load %arg4[%c0_17, %c0_18, %c0_19] : memref<9x4x4xbf16, #tpu.memory_space<vmem>>, vector<1x4x4xbf16>
    %18 = vector.shape_cast %17 : vector<1x4x4xbf16> to vector<4x4xbf16>
    %cst_20 = arith.constant dense<0.000000e+00> : vector<256x4xf32>
    %19 = tpu.matmul %16, %18, %cst_20 {dimension_numbers = #tpu.dot_dimension_numbers<[1], [0], [0], [1], [0, 0, 1, 1], [], []>} : vector<256x4xbf16>, vector<4x4xbf16>, vector<256x4xf32> -> vector<256x4xf32>
    %20 = arith.addf %13, %19 : vector<256x4xf32>
    %c0_21 = arith.constant 0 : index
    %c1_22 = arith.constant 1 : index
    %c0_23 = arith.constant 0 : index
    %21 = vector.load %arg9[%c0_21, %c1_22, %c0_23] : memref<18x18x4xf32, #tpu.memory_space<vmem>>, vector<16x16x4xf32>
    %22 = vector.shape_cast %21 : vector<16x16x4xf32> to vector<256x4xf32>
    %23 = arith.truncf %22 : vector<256x4xf32> to vector<256x4xbf16>
    %c1_24 = arith.constant 1 : index
    %c0_25 = arith.constant 0 : index
    %c0_26 = arith.constant 0 : index
    %24 = vector.load %arg4[%c1_24, %c0_25, %c0_26] : memref<9x4x4xbf16, #tpu.memory_space<vmem>>, vector<1x4x4xbf16>
    %25 = vector.shape_cast %24 : vector<1x4x4xbf16> to vector<4x4xbf16>
    %cst_27 = arith.constant dense<0.000000e+00> : vector<256x4xf32>
    %26 = tpu.matmul %23, %25, %cst_27 {dimension_numbers = #tpu.dot_dimension_numbers<[1], [0], [0], [1], [0, 0, 1, 1], [], []>} : vector<256x4xbf16>, vector<4x4xbf16>, vector<256x4xf32> -> vector<256x4xf32>
    %27 = arith.addf %20, %26 : vector<256x4xf32>
    %c0_28 = arith.constant 0 : index
    %c2 = arith.constant 2 : index
    %c0_29 = arith.constant 0 : index
    %28 = vector.load %arg9[%c0_28, %c2, %c0_29] : memref<18x18x4xf32, #tpu.memory_space<vmem>>, vector<16x16x4xf32>
    %29 = vector.shape_cast %28 : vector<16x16x4xf32> to vector<256x4xf32>
    %30 = arith.truncf %29 : vector<256x4xf32> to vector<256x4xbf16>
    %c2_30 = arith.constant 2 : index
    %c0_31 = arith.constant 0 : index
    %c0_32 = arith.constant 0 : index
    %31 = vector.load %arg4[%c2_30, %c0_31, %c0_32] : memref<9x4x4xbf16, #tpu.memory_space<vmem>>, vector<1x4x4xbf16>
    %32 = vector.shape_cast %31 : vector<1x4x4xbf16> to vector<4x4xbf16>
    %cst_33 = arith.constant dense<0.000000e+00> : vector<256x4xf32>
    %33 = tpu.matmul %30, %32, %cst_33 {dimension_numbers = #tpu.dot_dimension_numbers<[1], [0], [0], [1], [0, 0, 1, 1], [], []>} : vector<256x4xbf16>, vector<4x4xbf16>, vector<256x4xf32> -> vector<256x4xf32>
    %34 = arith.addf %27, %33 : vector<256x4xf32>
    %c1_34 = arith.constant 1 : index
    %c0_35 = arith.constant 0 : index
    %c0_36 = arith.constant 0 : index
    %35 = vector.load %arg9[%c1_34, %c0_35, %c0_36] : memref<18x18x4xf32, #tpu.memory_space<vmem>>, vector<16x16x4xf32>
    %36 = vector.shape_cast %35 : vector<16x16x4xf32> to vector<256x4xf32>
    %37 = arith.truncf %36 : vector<256x4xf32> to vector<256x4xbf16>
    %c3 = arith.constant 3 : index
    %c0_37 = arith.constant 0 : index
    %c0_38 = arith.constant 0 : index
    %38 = vector.load %arg4[%c3, %c0_37, %c0_38] : memref<9x4x4xbf16, #tpu.memory_space<vmem>>, vector<1x4x4xbf16>
    %39 = vector.shape_cast %38 : vector<1x4x4xbf16> to vector<4x4xbf16>
    %cst_39 = arith.constant dense<0.000000e+00> : vector<256x4xf32>
    %40 = tpu.matmul %37, %39, %cst_39 {dimension_numbers = #tpu.dot_dimension_numbers<[1], [0], [0], [1], [0, 0, 1, 1], [], []>} : vector<256x4xbf16>, vector<4x4xbf16>, vector<256x4xf32> -> vector<256x4xf32>
    %41 = arith.addf %34, %40 : vector<256x4xf32>
    %c1_40 = arith.constant 1 : index
    %c1_41 = arith.constant 1 : index
    %c0_42 = arith.constant 0 : index
    %42 = vector.load %arg9[%c1_40, %c1_41, %c0_42] : memref<18x18x4xf32, #tpu.memory_space<vmem>>, vector<16x16x4xf32>
    %43 = vector.shape_cast %42 : vector<16x16x4xf32> to vector<256x4xf32>
    %44 = arith.truncf %43 : vector<256x4xf32> to vector<256x4xbf16>
    %c4 = arith.constant 4 : index
    %c0_43 = arith.constant 0 : index
    %c0_44 = arith.constant 0 : index
    %45 = vector.load %arg4[%c4, %c0_43, %c0_44] : memref<9x4x4xbf16, #tpu.memory_space<vmem>>, vector<1x4x4xbf16>
    %46 = vector.shape_cast %45 : vector<1x4x4xbf16> to vector<4x4xbf16>
    %cst_45 = arith.constant dense<0.000000e+00> : vector<256x4xf32>
    %47 = tpu.matmul %44, %46, %cst_45 {dimension_numbers = #tpu.dot_dimension_numbers<[1], [0], [0], [1], [0, 0, 1, 1], [], []>} : vector<256x4xbf16>, vector<4x4xbf16>, vector<256x4xf32> -> vector<256x4xf32>
    %48 = arith.addf %41, %47 : vector<256x4xf32>
    %c1_46 = arith.constant 1 : index
    %c2_47 = arith.constant 2 : index
    %c0_48 = arith.constant 0 : index
    %49 = vector.load %arg9[%c1_46, %c2_47, %c0_48] : memref<18x18x4xf32, #tpu.memory_space<vmem>>, vector<16x16x4xf32>
    %50 = vector.shape_cast %49 : vector<16x16x4xf32> to vector<256x4xf32>
    %51 = arith.truncf %50 : vector<256x4xf32> to vector<256x4xbf16>
    %c5 = arith.constant 5 : index
    %c0_49 = arith.constant 0 : index
    %c0_50 = arith.constant 0 : index
    %52 = vector.load %arg4[%c5, %c0_49, %c0_50] : memref<9x4x4xbf16, #tpu.memory_space<vmem>>, vector<1x4x4xbf16>
    %53 = vector.shape_cast %52 : vector<1x4x4xbf16> to vector<4x4xbf16>
    %cst_51 = arith.constant dense<0.000000e+00> : vector<256x4xf32>
    %54 = tpu.matmul %51, %53, %cst_51 {dimension_numbers = #tpu.dot_dimension_numbers<[1], [0], [0], [1], [0, 0, 1, 1], [], []>} : vector<256x4xbf16>, vector<4x4xbf16>, vector<256x4xf32> -> vector<256x4xf32>
    %55 = arith.addf %48, %54 : vector<256x4xf32>
    %c2_52 = arith.constant 2 : index
    %c0_53 = arith.constant 0 : index
    %c0_54 = arith.constant 0 : index
    %56 = vector.load %arg9[%c2_52, %c0_53, %c0_54] : memref<18x18x4xf32, #tpu.memory_space<vmem>>, vector<16x16x4xf32>
    %57 = vector.shape_cast %56 : vector<16x16x4xf32> to vector<256x4xf32>
    %58 = arith.truncf %57 : vector<256x4xf32> to vector<256x4xbf16>
    %c6 = arith.constant 6 : index
    %c0_55 = arith.constant 0 : index
    %c0_56 = arith.constant 0 : index
    %59 = vector.load %arg4[%c6, %c0_55, %c0_56] : memref<9x4x4xbf16, #tpu.memory_space<vmem>>, vector<1x4x4xbf16>
    %60 = vector.shape_cast %59 : vector<1x4x4xbf16> to vector<4x4xbf16>
    %cst_57 = arith.constant dense<0.000000e+00> : vector<256x4xf32>
    %61 = tpu.matmul %58, %60, %cst_57 {dimension_numbers = #tpu.dot_dimension_numbers<[1], [0], [0], [1], [0, 0, 1, 1], [], []>} : vector<256x4xbf16>, vector<4x4xbf16>, vector<256x4xf32> -> vector<256x4xf32>
    %62 = arith.addf %55, %61 : vector<256x4xf32>
    %c2_58 = arith.constant 2 : index
    %c1_59 = arith.constant 1 : index
    %c0_60 = arith.constant 0 : index
    %63 = vector.load %arg9[%c2_58, %c1_59, %c0_60] : memref<18x18x4xf32, #tpu.memory_space<vmem>>, vector<16x16x4xf32>
    %64 = vector.shape_cast %63 : vector<16x16x4xf32> to vector<256x4xf32>
    %65 = arith.truncf %64 : vector<256x4xf32> to vector<256x4xbf16>
    %c7 = arith.constant 7 : index
    %c0_61 = arith.constant 0 : index
    %c0_62 = arith.constant 0 : index
    %66 = vector.load %arg4[%c7, %c0_61, %c0_62] : memref<9x4x4xbf16, #tpu.memory_space<vmem>>, vector<1x4x4xbf16>
    %67 = vector.shape_cast %66 : vector<1x4x4xbf16> to vector<4x4xbf16>
    %cst_63 = arith.constant dense<0.000000e+00> : vector<256x4xf32>
    %68 = tpu.matmul %65, %67, %cst_63 {dimension_numbers = #tpu.dot_dimension_numbers<[1], [0], [0], [1], [0, 0, 1, 1], [], []>} : vector<256x4xbf16>, vector<4x4xbf16>, vector<256x4xf32> -> vector<256x4xf32>
    %69 = arith.addf %62, %68 : vector<256x4xf32>
    %c2_64 = arith.constant 2 : index
    %c2_65 = arith.constant 2 : index
    %c0_66 = arith.constant 0 : index
    %70 = vector.load %arg9[%c2_64, %c2_65, %c0_66] : memref<18x18x4xf32, #tpu.memory_space<vmem>>, vector<16x16x4xf32>
    %71 = vector.shape_cast %70 : vector<16x16x4xf32> to vector<256x4xf32>
    %72 = arith.truncf %71 : vector<256x4xf32> to vector<256x4xbf16>
    %c8 = arith.constant 8 : index
    %c0_67 = arith.constant 0 : index
    %c0_68 = arith.constant 0 : index
    %73 = vector.load %arg4[%c8, %c0_67, %c0_68] : memref<9x4x4xbf16, #tpu.memory_space<vmem>>, vector<1x4x4xbf16>
    %74 = vector.shape_cast %73 : vector<1x4x4xbf16> to vector<4x4xbf16>
    %cst_69 = arith.constant dense<0.000000e+00> : vector<256x4xf32>
    %75 = tpu.matmul %72, %74, %cst_69 {dimension_numbers = #tpu.dot_dimension_numbers<[1], [0], [0], [1], [0, 0, 1, 1], [], []>} : vector<256x4xbf16>, vector<4x4xbf16>, vector<256x4xf32> -> vector<256x4xf32>
    %76 = arith.addf %69, %75 : vector<256x4xf32>
    %c0_70 = arith.constant 0 : index
    %c0_71 = arith.constant 0 : index
    %77 = vector.load %arg5[%c0_70, %c0_71] : memref<1x4xf32, #tpu.memory_space<vmem>>, vector<1x4xf32>
    %78 = vector.broadcast %77 : vector<1x4xf32> to vector<256x4xf32>
    %79 = arith.addf %76, %78 : vector<256x4xf32>
    %cst_72 = arith.constant 0.000000e+00 : f32
    %80 = vector.broadcast %cst_72 : f32 to vector<256x4xf32>
    %81 = arith.maximumf %79, %80 : vector<256x4xf32>
    %82 = arith.truncf %81 : vector<256x4xf32> to vector<256x4xbf16>
    %c0_73 = arith.constant 0 : index
    %c0_74 = arith.constant 0 : index
    %83 = vector.load %arg6[%c0_73, %c0_74] : memref<4x16xbf16, #tpu.memory_space<vmem>>, vector<4x16xbf16>
    %cst_75 = arith.constant dense<0.000000e+00> : vector<256x16xf32>
    %84 = tpu.matmul %82, %83, %cst_75 {dimension_numbers = #tpu.dot_dimension_numbers<[1], [0], [0], [1], [0, 0, 1, 1], [], []>} : vector<256x4xbf16>, vector<4x16xbf16>, vector<256x16xf32> -> vector<256x16xf32>
    %c0_76 = arith.constant 0 : index
    %c0_77 = arith.constant 0 : index
    %85 = vector.load %arg7[%c0_76, %c0_77] : memref<1x16xf32, #tpu.memory_space<vmem>>, vector<1x16xf32>
    %86 = vector.broadcast %85 : vector<1x16xf32> to vector<256x16xf32>
    %87 = arith.addf %84, %86 : vector<256x16xf32>
    %88 = arith.extf %1 : vector<256x16xbf16> to vector<256x16xf32>
    %89 = arith.addf %87, %88 : vector<256x16xf32>
    %cst_78 = arith.constant 0.000000e+00 : f32
    %90 = vector.broadcast %cst_78 : f32 to vector<256x16xf32>
    %91 = arith.maximumf %89, %90 : vector<256x16xf32>
    %c0_79 = arith.constant 0 : index
    %c0_80 = arith.constant 0 : index
    %c0_81 = arith.constant 0 : index
    %92 = vector.load %arg8[%c0_79, %c0_80, %c0_81] : memref<1x256x16xf32, #tpu.memory_space<vmem>>, vector<1x256x16xf32>
    %93 = vector.shape_cast %92 : vector<1x256x16xf32> to vector<256x16xf32>
    %94 = vector.shape_cast %91 : vector<256x16xf32> to vector<1x256x16xf32>
    tpu.vector_store %arg8[%c0_79, %c0_80, %c0_81], %94 {strides = array<i32>} : memref<1x256x16xf32, #tpu.memory_space<vmem>>, vector<1x256x16xf32>,
    return
  }
  func.func @transform_0(%arg0: i32) -> (i32, i32, i32) {
    %c0_i32 = arith.constant 0 : i32
    %c0_i32_0 = arith.constant 0 : i32
    %c0_i32_1 = arith.constant 0 : i32
    return %arg0, %c0_i32, %c0_i32_0 : i32, i32, i32
  }
  func.func @transform_1(%arg0: i32) -> (i32, i32) {
    %c0_i32 = arith.constant 0 : i32
    %c0_i32_0 = arith.constant 0 : i32
    %c0_i32_1 = arith.constant 0 : i32
    return %c0_i32, %c0_i32_0 : i32, i32
  }
  func.func @transform_2(%arg0: i32) -> (i32, i32) {
    %c0_i32 = arith.constant 0 : i32
    %c0_i32_0 = arith.constant 0 : i32
    %c0_i32_1 = arith.constant 0 : i32
    return %c0_i32, %c0_i32_0 : i32, i32
  }
  func.func @transform_3(%arg0: i32) -> (i32, i32, i32) {
    %c0_i32 = arith.constant 0 : i32
    %c0_i32_0 = arith.constant 0 : i32
    %c0_i32_1 = arith.constant 0 : i32
    %c0_i32_2 = arith.constant 0 : i32
    return %c0_i32, %c0_i32_0, %c0_i32_1 : i32, i32, i32
  }
  func.func @transform_4(%arg0: i32) -> (i32, i32) {
    %c0_i32 = arith.constant 0 : i32
    %c0_i32_0 = arith.constant 0 : i32
    %c0_i32_1 = arith.constant 0 : i32
    return %c0_i32, %c0_i32_0 : i32, i32
  }
  func.func @transform_5(%arg0: i32) -> (i32, i32) {
    %c0_i32 = arith.constant 0 : i32
    %c0_i32_0 = arith.constant 0 : i32
    %c0_i32_1 = arith.constant 0 : i32
    return %c0_i32, %c0_i32_0 : i32, i32
  }
  func.func @transform_6(%arg0: i32) -> (i32, i32) {
    %c0_i32 = arith.constant 0 : i32
    %c0_i32_0 = arith.constant 0 : i32
    %c0_i32_1 = arith.constant 0 : i32
    return %c0_i32, %c0_i32_0 : i32, i32
  }
  func.func @transform_7(%arg0: i32) -> (i32, i32, i32) {
    %c0_i32 = arith.constant 0 : i32
    %c0_i32_0 = arith.constant 0 : i32
    %c0_i32_1 = arith.constant 0 : i32
    return %arg0, %c0_i32, %c0_i32_0 : i32, i32, i32
  }
}

</mosaic_0001>

<llo_original>
// kernel: bottleneck_forward.1
$region0: #{bottleneck_forward.1}
  #allocation0 [shape = 'u32[]', space=smem, size = 0x4, offset = 0x4, fixed_abs, tag = 'smem constant byte address 0x4 - core index']
  #allocation1 [shape = 'u32[144,128]{1,0:T(1,128)}', space=vmem, size = 0x12000, scoped, tag = 'internal scratch']
  #allocation2 [shape = 'f32[18,18,4]{2,1,0:T(8,128)}', space=vmem, size = 0x36000, scoped, tag = 'scratch operand']
  %s0 = inlined_call_operand.vmem [shape: bf16[2,256,16], index: 0, kind: input, shape index: {}]
  %s1 = inlined_call_operand.vmem [shape: bf16[16,4], index: 1, kind: input, shape index: {}]
  %s2 = inlined_call_operand.vmem [shape: f32[1,4], index: 2, kind: input, shape index: {}]
  %s3 = inlined_call_operand.vmem [shape: bf16[9,4,4], index: 3, kind: input, shape index: {}]
  %s4 = inlined_call_operand.vmem [shape: f32[1,4], index: 4, kind: input, shape index: {}]
  %s5 = inlined_call_operand.vmem [shape: bf16[4,16], index: 5, kind: input, shape index: {}]
  %s6 = inlined_call_operand.vmem [shape: f32[1,16], index: 6, kind: input, shape index: {}]
  %s7 = inlined_call_operand.vmem [shape: f32[2,256,16], index: 7, kind: output, shape index: {}]
  %s8 = sld [smem:[#allocation0]]
  $region61: #{bottleneck_forward.1} parent=0
    _
  %s10 = ssub.s32 1, %s8
  %s11 = scalar_select 0, %s10, %s8
  loop: start=0, step=1, limit=4
  $region2: #{bottleneck_forward.1} parent=0 // loop_pre_header
    _
  $region3: #{bottleneck_forward.1} parent=0 // loop_header
    %s13 = sphi 0, %s17
    %p14 = scmp.ge.s32.totalorder %s13, 4
    %s23 = sphi 0, %s25
    %s26 = sphi 0, %s23
    %s27 = sphi 0, %s26
    %s43 = sphi 0, %s27
    %s47 = sphi 0, %s47
    %s49 = sphi 0, %s47
    %s50 = sphi 0, %s49
    %s64 = sphi 0, %s50
    %s68 = sphi 0, %s68
    %s70 = sphi 0, %s68
    %s71 = sphi 0, %s70
    %s85 = sphi 0, %s71
    %s89 = sphi 0, %s89
    %s91 = sphi 0, %s89
    %s92 = sphi 0, %s91
    %s106 = sphi 0, %s92
    %s110 = sphi 0, %s110
    %s112 = sphi 0, %s110
    %s113 = sphi 0, %s112
    %s127 = sphi 0, %s113
    %s131 = sphi 0, %s131
    %s133 = sphi 0, %s131
    %s134 = sphi 0, %s133
    %s148 = sphi 0, %s134
    %s152 = sphi 0, %s152
    %s154 = sphi 0, %s152
    %s155 = sphi 0, %s154
    %s169 = sphi 0, %s155
    %s175 = sphi 0, %s177
    %s178 = sphi 0, %s175
    %s179 = sphi 0, %s178
    %s195 = sphi 0, %s179
  $region4: #{bottleneck_forward.1} parent=0 // loop_header_branch
    %16 = sbr.rel (%p14) target = $region8
  $region5: #{bottleneck_forward.1} parent=0 // loop_body
    %s18 = ssub.s32 %s13, 1
    %s19 = ssub.s32 %s13, 2
    %s20 = sadd.s32 %s13, 1
    %s21 = ssub.s32 %s13, %s20
    %p22 = scmp.eq.s32.totalorder %s21, 0
    %s24 = sadd.s32 %s23, 1
    %s25 = scalar_select %p22, %s23, %s24
    %p28 = pneg %p22
    %p29 = scmp.eq.s32.totalorder %s13, 1
    %p30 = por %p28, %p29
    %p31 = scmp.ne.s32.totalorder %s23, %s26
    %p32 = scmp.eq.s32.totalorder %s13, 0
    %p33 = por %p31, %p32
    %p34 = scmp.ne.s32.totalorder %s23, %s26
    %p35 = scmp.eq.s32.totalorder %s18, 1
    %p36 = por %p34, %p35
    %p37 = scmp.ne.s32.totalorder %s26, %s27
    %p38 = scmp.eq.s32.totalorder %s18, 0
    %p39 = por %p37, %p38
    %p40 = scmp.ne.s32.totalorder %s26, %s27
    %p41 = scmp.eq.s32.totalorder %s19, 1
    %p42 = por %p40, %p41
    %p44 = scmp.ne.s32.totalorder %s27, %s43
    %p45 = scmp.eq.s32.totalorder %s19, 0
    %p46 = por %p44, %p45
    %s48 = sadd.s32 %s47, 1
    %p51 = scmp.eq.s32.totalorder %s13, 1
    %p52 = scmp.ne.s32.totalorder %s47, %s49
    %p53 = scmp.eq.s32.totalorder %s13, 0
    %p54 = por %p52, %p53
    %p55 = scmp.ne.s32.totalorder %s47, %s49
    %p56 = scmp.eq.s32.totalorder %s18, 1
    %p57 = por %p55, %p56
    %p58 = scmp.ne.s32.totalorder %s49, %s50
    %p59 = scmp.eq.s32.totalorder %s18, 0
    %p60 = por %p58, %p59
    %p61 = scmp.ne.s32.totalorder %s49, %s50
    %p62 = scmp.eq.s32.totalorder %s19, 1
    %p63 = por %p61, %p62
    %p65 = scmp.ne.s32.totalorder %s50, %s64
    %p66 = scmp.eq.s32.totalorder %s19, 0
    %p67 = por %p65, %p66
    %s69 = sadd.s32 %s68, 1
    %p72 = scmp.eq.s32.totalorder %s13, 1
    %p73 = scmp.ne.s32.totalorder %s68, %s70
    %p74 = scmp.eq.s32.totalorder %s13, 0
    %p75 = por %p73, %p74
    %p76 = scmp.ne.s32.totalorder %s68, %s70
    %p77 = scmp.eq.s32.totalorder %s18, 1
    %p78 = por %p76, %p77
    %p79 = scmp.ne.s32.totalorder %s70, %s71
    %p80 = scmp.eq.s32.totalorder %s18, 0
    %p81 = por %p79, %p80
    %p82 = scmp.ne.s32.totalorder %s70, %s71
    %p83 = scmp.eq.s32.totalorder %s19, 1
    %p84 = por %p82, %p83
    %p86 = scmp.ne.s32.totalorder %s71, %s85
    %p87 = scmp.eq.s32.totalorder %s19, 0
    %p88 = por %p86, %p87
    %s90 = sadd.s32 %s89, 1
    %p93 = scmp.eq.s32.totalorder %s13, 1
    %p94 = scmp.ne.s32.totalorder %s89, %s91
    %p95 = scmp.eq.s32.totalorder %s13, 0
    %p96 = por %p94, %p95
    %p97 = scmp.ne.s32.totalorder %s89, %s91
    %p98 = scmp.eq.s32.totalorder %s18, 1
    %p99 = por %p97, %p98
    %p100 = scmp.ne.s32.totalorder %s91, %s92
    %p101 = scmp.eq.s32.totalorder %s18, 0
    %p102 = por %p100, %p101
    %p103 = scmp.ne.s32.totalorder %s91, %s92
    %p104 = scmp.eq.s32.totalorder %s19, 1
    %p105 = por %p103, %p104
    %p107 = scmp.ne.s32.totalorder %s92, %s106
    %p108 = scmp.eq.s32.totalorder %s19, 0
    %p109 = por %p107, %p108
    %s111 = sadd.s32 %s110, 1
    %p114 = scmp.eq.s32.totalorder %s13, 1
    %p115 = scmp.ne.s32.totalorder %s110, %s112
    %p116 = scmp.eq.s32.totalorder %s13, 0
    %p117 = por %p115, %p116
    %p118 = scmp.ne.s32.totalorder %s110, %s112
    %p119 = scmp.eq.s32.totalorder %s18, 1
    %p120 = por %p118, %p119
    %p121 = scmp.ne.s32.totalorder %s112, %s113
    %p122 = scmp.eq.s32.totalorder %s18, 0
    %p123 = por %p121, %p122
    %p124 = scmp.ne.s32.totalorder %s112, %s113
    %p125 = scmp.eq.s32.totalorder %s19, 1
    %p126 = por %p124, %p125
    %p128 = scmp.ne.s32.totalorder %s113, %s127
    %p129 = scmp.eq.s32.totalorder %s19, 0
    %p130 = por %p128, %p129
    %s132 = sadd.s32 %s131, 1
    %p135 = scmp.eq.s32.totalorder %s13, 1
    %p136 = scmp.ne.s32.totalorder %s131, %s133
    %p137 = scmp.eq.s32.totalorder %s13, 0
    %p138 = por %p136, %p137
    %p139 = scmp.ne.s32.totalorder %s131, %s133
    %p140 = scmp.eq.s32.totalorder %s18, 1
    %p141 = por %p139, %p140
    %p142 = scmp.ne.s32.totalorder %s133, %s134
    %p143 = scmp.eq.s32.totalorder %s18, 0
    %p144 = por %p142, %p143
    %p145 = scmp.ne.s32.totalorder %s133, %s134
    %p146 = scmp.eq.s32.totalorder %s19, 1
    %p147 = por %p145, %p146
    %p149 = scmp.ne.s32.totalorder %s134, %s148
    %p150 = scmp.eq.s32.totalorder %s19, 0
    %p151 = por %p149, %p150
    %s153 = sadd.s32 %s152, 1
    %p156 = scmp.eq.s32.totalorder %s13, 1
    %p157 = scmp.ne.s32.totalorder %s152, %s154
    %p158 = scmp.eq.s32.totalorder %s13, 0
    %p159 = por %p157, %p158
    %p160 = scmp.ne.s32.totalorder %s152, %s154
    %p161 = scmp.eq.s32.totalorder %s18, 1
    %p162 = por %p160, %p161
    %p163 = scmp.ne.s32.totalorder %s154, %s155
    %p164 = scmp.eq.s32.totalorder %s18, 0
    %p165 = por %p163, %p164
    %p166 = scmp.ne.s32.totalorder %s154, %s155
    %p167 = scmp.eq.s32.totalorder %s19, 1
    %p168 = por %p166, %p167
    %p170 = scmp.ne.s32.totalorder %s155, %s169
    %p171 = scmp.eq.s32.totalorder %s19, 0
    %p172 = por %p170, %p171
    %s173 = ssub.s32 %s13, %s20
    %p174 = scmp.eq.s32.totalorder %s173, 0
    %s176 = sadd.s32 %s175, 1
    %s177 = scalar_select %p174, %s175, %s176
    %p180 = pneg %p174
    %p181 = scmp.eq.s32.totalorder %s13, 1
    %p182 = por %p180, %p181
    %p183 = scmp.ne.s32.totalorder %s175, %s178
    %p184 = scmp.eq.s32.totalorder %s13, 0
    %p185 = por %p183, %p184
    %p186 = scmp.ne.s32.totalorder %s175, %s178
    %p187 = scmp.eq.s32.totalorder %s18, 1
    %p188 = por %p186, %p187
    %p189 = scmp.ne.s32.totalorder %s178, %s179
    %p190 = scmp.eq.s32.totalorder %s18, 0
    %p191 = por %p189, %p190
    %p192 = scmp.ne.s32.totalorder %s178, %s179
    %p193 = scmp.eq.s32.totalorder %s19, 1
    %p194 = por %p192, %p193
    %p196 = scmp.ne.s32.totalorder %s179, %s195
    %p197 = scmp.eq.s32.totalorder %s19, 0
    %p198 = por %p196, %p197
    %p199 = scmp.le.s32.totalorder 1, %s13
    %p200 = scmp.lt.s32.totalorder %s13, 3
    %p201 = pnand %p199, %p200
    %p202 = pneg %p201
    // Predicated region
    $region9: #{bottleneck_forward.1} parent=5 // pred_check
      _
    $region10: #{bottleneck_forward.1} parent=5 // pred_check_branch
      %204 = sbr.rel (%p201) target = $region12
    $region11: #{bottleneck_forward.1} parent=5 // pred_region
      %s205 = ssub.s32 %s13, 1
      // Predicated region
      $region13: #{bottleneck_forward.1} parent=11 // pred_check
        %p206 = pneg %p60
      $region14: #{bottleneck_forward.1} parent=11 // pred_check_branch
        %208 = sbr.rel (%p206) target = $region16
      $region15: #{bottleneck_forward.1} parent=11 // pred_region
        _
      $region16: #{bottleneck_forward.1} parent=11 // pred_fallthru
        _
      // Predicated region
      $region17: #{bottleneck_forward.1} parent=11 // pred_check
        %p209 = pneg %p81
      $region18: #{bottleneck_forward.1} parent=11 // pred_check_branch
        %211 = sbr.rel (%p209) target = $region20
      $region19: #{bottleneck_forward.1} parent=11 // pred_region
        _
      $region20: #{bottleneck_forward.1} parent=11 // pred_fallthru
        _
      // Predicated region
      $region21: #{bottleneck_forward.1} parent=11 // pred_check
        %p212 = pneg %p102
      $region22: #{bottleneck_forward.1} parent=11 // pred_check_branch
        %214 = sbr.rel (%p212) target = $region24
      $region23: #{bottleneck_forward.1} parent=11 // pred_region
        _
      $region24: #{bottleneck_forward.1} parent=11 // pred_fallthru
        _
      // Predicated region
      $region25: #{bottleneck_forward.1} parent=11 // pred_check
        %p215 = pneg %p123
      $region26: #{bottleneck_forward.1} parent=11 // pred_check_branch
        %217 = sbr.rel (%p215) target = $region28
      $region27: #{bottleneck_forward.1} parent=11 // pred_region
        _
      $region28: #{bottleneck_forward.1} parent=11 // pred_fallthru
        _
      // Predicated region
      $region29: #{bottleneck_forward.1} parent=11 // pred_check
        %p218 = pneg %p144
      $region30: #{bottleneck_forward.1} parent=11 // pred_check_branch
        %220 = sbr.rel (%p218) target = $region32
      $region31: #{bottleneck_forward.1} parent=11 // pred_region
        _
      $region32: #{bottleneck_forward.1} parent=11 // pred_fallthru
        _
      // Predicated region
      $region33: #{bottleneck_forward.1} parent=11 // pred_check
        %p221 = pneg %p165
      $region34: #{bottleneck_forward.1} parent=11 // pred_check_branch
        %223 = sbr.rel (%p221) target = $region36
      $region35: #{bottleneck_forward.1} parent=11 // pred_region
        _
      $region36: #{bottleneck_forward.1} parent=11 // pred_fallthru
        _
    $region12: #{bottleneck_forward.1} parent=5 // pred_fallthru
      _
    %p224 = scmp.lt.s32.totalorder %s13, 2
    // Predicated region
    $region37: #{bottleneck_forward.1} parent=5 // pred_check
      %p225 = pneg %p224
    $region38: #{bottleneck_forward.1} parent=5 // pred_check_branch
      %227 = sbr.rel (%p225) target = $region40
    $region39: #{bottleneck_forward.1} parent=5 // pred_region
      // Predicated region
      $region41: #{bottleneck_forward.1} parent=39 // pred_check
        %p228 = pneg %p33
      $region42: #{bottleneck_forward.1} parent=39 // pred_check_branch
        %230 = sbr.rel (%p228) target = $region44
      $region43: #{bottleneck_forward.1} parent=39 // pred_region
        %p231 = scmp.lt.s32.totalorder %s13, 1
        %s232 = scalar_select %p231, %s13, 1
        %s233 = smul.addr %s232, 32
        %s234 = smul.addr %s233, 4
        %s235 = scalar_lea.vmem %s0, %s234
      $region44: #{bottleneck_forward.1} parent=39 // pred_fallthru
        _
    $region40: #{bottleneck_forward.1} parent=5 // pred_fallthru
      _
    %p236 = scmp.le.s32.totalorder 1, %s13
    %p237 = scmp.lt.s32.totalorder %s13, 3
    %p238 = pnand %p236, %p237
    %p239 = pneg %p238
    // Predicated region
    $region45: #{bottleneck_forward.1} parent=5 // pred_check
      _
    $region46: #{bottleneck_forward.1} parent=5 // pred_check_branch
      %241 = sbr.rel (%p238) target = $region48
    $region47: #{bottleneck_forward.1} parent=5 // pred_region
      %s242 = ssub.s32 %s13, 1
      %p243 = scmp.lt.s32.totalorder %s18, 1
      %s244 = scalar_select %p243, %s18, 1
      %s245 = smul.addr %s244, 32
      %s246 = smul.addr %s245, 4
      %s247 = scalar_lea.vmem %s0, %s246
      %p248 = pneg %p39
      %p249 = pneg %p36
      %p250 = pneg %p60
      %p251 = pneg %p57
      %p252 = pneg %p81
      %p253 = pneg %p78
      %p254 = pneg %p102
      %p255 = pneg %p99
      %p256 = pneg %p123
      %p257 = pneg %p120
      %p258 = pneg %p144
      %p259 = pneg %p141
      %p260 = pneg %p165
      %p261 = pneg %p162
      %p262 = pneg %p191
      %p263 = pneg %p188
      %p264 = scmp.lt.s32.totalorder %s18, 1
      %s265 = scalar_select %p264, %s18, 1
      %s266 = smul.addr %s265, 32
      %s267 = smul.addr %s266, 8
      %s268 = scalar_lea.vmem %s7, %s267
      %p269 = scmp.lt.s32.totalorder %s18, 1
      %s270 = scalar_select %p269, %s18, 1
      %s271 = smul.addr %s270, 32
      %s272 = smul.addr %s271, 4
      %s273 = scalar_lea.vmem %s0, %s272
      %p274 = scmp.lt.s32.totalorder %s18, 1
      %s275 = scalar_select %p274, %s18, 1
      %s276 = smul.addr %s275, 32
      %s277 = smul.addr %s276, 8
      %s278 = scalar_lea.vmem %s7, %s277
      %v280 = vld [vmem:[%s273] sm:$0xf]
      %v281 = vld [vmem:[%s273 + $0x4] sm:$0xf]
      %v282 = vld [vmem:[%s273 + $0x8] sm:$0xf]
      %v283 = vld [vmem:[%s273 + $0xc] sm:$0xf]
      %v284 = vld [vmem:[%s273 + $0x10] sm:$0xf]
      %v285 = vld [vmem:[%s273 + $0x14] sm:$0xf]
      %v286 = vld [vmem:[%s273 + $0x18] sm:$0xf]
      %v287 = vld [vmem:[%s273 + $0x1c] sm:$0xf]
      %v288 = vld [vmem:[%s273 + $0x20] sm:$0xf]
      %v289 = vld [vmem:[%s273 + $0x24] sm:$0xf]
      %v290 = vld [vmem:[%s273 + $0x28] sm:$0xf]
      %v291 = vld [vmem:[%s273 + $0x2c] sm:$0xf]
      %v292 = vld [vmem:[%s273 + $0x30] sm:$0xf]
      %v293 = vld [vmem:[%s273 + $0x34] sm:$0xf]
      %v294 = vld [vmem:[%s273 + $0x38] sm:$0xf]
      %v295 = vld [vmem:[%s273 + $0x3c] sm:$0xf]
      %v296 = vld [vmem:[%s273 + $0x40] sm:$0xf]
      %v297 = vld [vmem:[%s273 + $0x44] sm:$0xf]
      %v298 = vld [vmem:[%s273 + $0x48] sm:$0xf]
      %v299 = vld [vmem:[%s273 + $0x4c] sm:$0xf]
      %v300 = vld [vmem:[%s273 + $0x50] sm:$0xf]
      %v301 = vld [vmem:[%s273 + $0x54] sm:$0xf]
      %v302 = vld [vmem:[%s273 + $0x58] sm:$0xf]
      %v303 = vld [vmem:[%s273 + $0x5c] sm:$0xf]
      %v304 = vld [vmem:[%s273 + $0x60] sm:$0xf]
      %v305 = vld [vmem:[%s273 + $0x64] sm:$0xf]
      %v306 = vld [vmem:[%s273 + $0x68] sm:$0xf]
      %v307 = vld [vmem:[%s273 + $0x6c] sm:$0xf]
      %v308 = vld [vmem:[%s273 + $0x70] sm:$0xf]
      %v309 = vld [vmem:[%s273 + $0x74] sm:$0xf]
      %v310 = vld [vmem:[%s273 + $0x78] sm:$0xf]
      %v311 = vld [vmem:[%s273 + $0x7c] sm:$0xf]
      %v312 = vld [vmem:[%s1] sm:$0xf]
      %v313 = vld [vmem:[%s1 + $0x4] sm:$0xf]
      %v314 = vld [vmem:[%s2] sm:$0x1]
      %v316 = vlaneseq
      %v317 = vshrl.u32 %v316, 7
      %v318 = vsub.s32 0, %v317
      %v319 = vrot.slane %v314, %v318
      %v353 = vunpack.c.l.b16 %v280
      %v354 = vunpack.c.l.b16 %v281
      %v355 = vunpack.c.l.b16 %v282
      %v356 = vunpack.c.l.b16 %v283
      %v357 = vunpack.c.l.b16 %v284
      %v358 = vunpack.c.l.b16 %v285
      %v359 = vunpack.c.l.b16 %v286
      %v360 = vunpack.c.l.b16 %v287
      %v361 = vunpack.c.l.b16 %v288
      %v362 = vunpack.c.l.b16 %v289
      %v363 = vunpack.c.l.b16 %v290
      %v364 = vunpack.c.l.b16 %v291
      %v365 = vunpack.c.l.b16 %v292
      %v366 = vunpack.c.l.b16 %v293
      %v367 = vunpack.c.l.b16 %v294
      %v368 = vunpack.c.l.b16 %v295
      %v369 = vunpack.c.l.b16 %v296
      %v370 = vunpack.c.l.b16 %v297
      %v371 = vunpack.c.l.b16 %v298
      %v372 = vunpack.c.l.b16 %v299
      %v373 = vunpack.c.l.b16 %v300
      %v374 = vunpack.c.l.b16 %v301
      %v375 = vunpack.c.l.b16 %v302
      %v376 = vunpack.c.l.b16 %v303
      %v377 = vunpack.c.l.b16 %v304
      %v378 = vunpack.c.l.b16 %v305
      %v379 = vunpack.c.l.b16 %v306
      %v380 = vunpack.c.l.b16 %v307
      %v381 = vunpack.c.l.b16 %v308
      %v382 = vunpack.c.l.b16 %v309
      %v383 = vunpack.c.l.b16 %v310
      %v384 = vunpack.c.l.b16 %v311
      %v385 = vpack.c.b16 %v354, %v353
      %v386 = vpack.c.b16 %v356, %v355
      %v387 = vpack.c.b16 %v358, %v357
      %v388 = vpack.c.b16 %v360, %v359
      %v389 = vpack.c.b16 %v362, %v361
      %v390 = vpack.c.b16 %v364, %v363
      %v391 = vpack.c.b16 %v366, %v365
      %v392 = vpack.c.b16 %v368, %v367
      %v393 = vpack.c.b16 %v370, %v369
      %v394 = vpack.c.b16 %v372, %v371
      %v395 = vpack.c.b16 %v374, %v373
      %v396 = vpack.c.b16 %v376, %v375
      %v397 = vpack.c.b16 %v378, %v377
      %v398 = vpack.c.b16 %v380, %v379
      %v399 = vpack.c.b16 %v382, %v381
      %v400 = vpack.c.b16 %v384, %v383
      %v403 = vunpack.c.l.b16 %v312
      %v404 = vunpack.c.l.b16 %v313
      %v405 = vpack.c.b16 %v404, %v403
      %vm407 = vcmask 130048
      %v409 = vsel %vm407, %v385, 0
      %v412 = vsel %vm407, %v386, 0
      %v415 = vsel %vm407, %v387, 0
      %v418 = vsel %vm407, %v388, 0
      %v421 = vsel %vm407, %v389, 0
      %v424 = vsel %vm407, %v390, 0
      %v427 = vsel %vm407, %v391, 0
      %v430 = vsel %vm407, %v392, 0
      %v433 = vsel %vm407, %v393, 0
      %v436 = vsel %vm407, %v394, 0
      %v439 = vsel %vm407, %v395, 0
      %v442 = vsel %vm407, %v396, 0
      %v445 = vsel %vm407, %v397, 0
      %v448 = vsel %vm407, %v398, 0
      %v451 = vsel %vm407, %v399, 0
      %v454 = vsel %vm407, %v400, 0
      %456 = vmatprep.subr.bf16.mxu0 0
      %457 = vmatpush1.bf16.msra.mxu0 0
      %458 = vmatprep.subr.bf16.mxu0 0
      %459 = vmatpush1.bf16.msra.mxu0 0
      %460 = vmatprep.subr.bf16.mxu0 0
      %461 = vmatpush1.bf16.msra.mxu0 0
      %462 = vmatprep.subr.bf16.mxu0 0
      %463 = vmatpush1.bf16.msra.mxu0 0
      %464 = vmatprep.subr.bf16.mxu0 0
      %465 = vmatpush1.bf16.msra.mxu0 0
      %466 = vmatprep.subr.bf16.mxu0 0
      %467 = vmatpush1.bf16.msra.mxu0 0
      %468 = vmatprep.subr.bf16.mxu0 0
      %469 = vmatpush1.bf16.msra.mxu0 0
      %470 = vmatprep.subr.bf16.mxu0 0
      %471 = vmatpush1.bf16.msra.mxu0 %v405
      %472 = vmatprep.subr.bf16.mxu0 0
      %473 = vmatpush2.bf16.msra.mxu0 0
      %474 = vmatprep.subr.bf16.mxu0 0
      %475 = vmatpush2.bf16.msra.mxu0 0
      %476 = vmatprep.subr.bf16.mxu0 0
      %477 = vmatpush2.bf16.msra.mxu0 0
      %478 = vmatprep.subr.bf16.mxu0 0
      %479 = vmatpush2.bf16.msra.mxu0 0
      %480 = vmatprep.subr.bf16.mxu0 0
      %481 = vmatpush2.bf16.msra.mxu0 0
      %482 = vmatprep.subr.bf16.mxu0 0
      %483 = vmatpush2.bf16.msra.mxu0 0
      %484 = vmatprep.subr.bf16.mxu0 0
      %485 = vmatpush2.bf16.msra.mxu0 0
      %486 = vmatprep.subr.bf16.mxu0 0
      %487 = vmatpush2.bf16.msra.mxu0 0
      %488 = vmatprep.mubr.bf16.mxu0 0
      %489 = vmatmul.mubr.bf16.gmra.mxu0 %v409
      %v490 = vpop.f32.mrf.mxu0
      %v491 = vadd.f32 %v319, %v490
      %v492 = vpop.f32.mrf.mxu0
      %v493 = vpop.f32.mrf.mxu0
      %v494 = vadd.f32 %v319, %v493
      %v495 = vpop.f32.mrf.mxu0
      %496 = vmatprep.mubr.bf16.mxu0 0
      %497 = vmatmul.mubr.bf16.gmra.mxu0 %v412
      %v498 = vpop.f32.mrf.mxu0
      %v499 = vadd.f32 %v319, %v498
      %v500 = vpop.f32.mrf.mxu0
      %v501 = vpop.f32.mrf.mxu0
      %v502 = vadd.f32 %v319, %v501
      %v503 = vpop.f32.mrf.mxu0
      %504 = vmatprep.mubr.bf16.mxu0 0
      %505 = vmatmul.mubr.bf16.gmra.mxu0 %v415
      %v506 = vpop.f32.mrf.mxu0
      %v507 = vadd.f32 %v319, %v506
      %v508 = vpop.f32.mrf.mxu0
      %v509 = vpop.f32.mrf.mxu0
      %v510 = vadd.f32 %v319, %v509
      %v511 = vpop.f32.mrf.mxu0
      %512 = vmatprep.mubr.bf16.mxu0 0
      %513 = vmatmul.mubr.bf16.gmra.mxu0 %v418
      %v514 = vpop.f32.mrf.mxu0
      %v515 = vadd.f32 %v319, %v514
      %v516 = vpop.f32.mrf.mxu0
      %v517 = vpop.f32.mrf.mxu0
      %v518 = vadd.f32 %v319, %v517
      %v519 = vpop.f32.mrf.mxu0
      %520 = vmatprep.mubr.bf16.mxu0 0
      %521 = vmatmul.mubr.bf16.gmra.mxu0 %v421
      %v522 = vpop.f32.mrf.mxu0
      %v523 = vadd.f32 %v319, %v522
      %v524 = vpop.f32.mrf.mxu0
      %v525 = vpop.f32.mrf.mxu0
      %v526 = vadd.f32 %v319, %v525
      %v527 = vpop.f32.mrf.mxu0
      %528 = vmatprep.mubr.bf16.mxu0 0
      %529 = vmatmul.mubr.bf16.gmra.mxu0 %v424
      %v530 = vpop.f32.mrf.mxu0
      %v531 = vadd.f32 %v319, %v530
      %v532 = vpop.f32.mrf.mxu0
      %v533 = vpop.f32.mrf.mxu0
      %v534 = vadd.f32 %v319, %v533
      %v535 = vpop.f32.mrf.mxu0
      %536 = vmatprep.mubr.bf16.mxu0 0
      %537 = vmatmul.mubr.bf16.gmra.mxu0 %v427
      %v538 = vpop.f32.mrf.mxu0
      %v539 = vadd.f32 %v319, %v538
      %v540 = vpop.f32.mrf.mxu0
      %v541 = vpop.f32.mrf.mxu0
      %v542 = vadd.f32 %v319, %v541
      %v543 = vpop.f32.mrf.mxu0
      %544 = vmatprep.mubr.bf16.mxu0 0
      %545 = vmatmul.mubr.bf16.gmra.mxu0 %v430
      %v546 = vpop.f32.mrf.mxu0
      %v547 = vadd.f32 %v319, %v546
      %v548 = vpop.f32.mrf.mxu0
      %v549 = vpop.f32.mrf.mxu0
      %v550 = vadd.f32 %v319, %v549
      %v551 = vpop.f32.mrf.mxu0
      %552 = vmatprep.mubr.bf16.mxu0 0
      %553 = vmatmul.mubr.bf16.gmra.mxu0 %v433
      %v554 = vpop.f32.mrf.mxu0
      %v555 = vadd.f32 %v319, %v554
      %v556 = vpop.f32.mrf.mxu0
      %v557 = vpop.f32.mrf.mxu0
      %v558 = vadd.f32 %v319, %v557
      %v559 = vpop.f32.mrf.mxu0
      %560 = vmatprep.mubr.bf16.mxu0 0
      %561 = vmatmul.mubr.bf16.gmra.mxu0 %v436
      %v562 = vpop.f32.mrf.mxu0
      %v563 = vadd.f32 %v319, %v562
      %v564 = vpop.f32.mrf.mxu0
      %v565 = vpop.f32.mrf.mxu0
      %v566 = vadd.f32 %v319, %v565
      %v567 = vpop.f32.mrf.mxu0
      %568 = vmatprep.mubr.bf16.mxu0 0
      %569 = vmatmul.mubr.bf16.gmra.mxu0 %v439
      %v570 = vpop.f32.mrf.mxu0
      %v571 = vadd.f32 %v319, %v570
      %v572 = vpop.f32.mrf.mxu0
      %v573 = vpop.f32.mrf.mxu0
      %v574 = vadd.f32 %v319, %v573
      %v575 = vpop.f32.mrf.mxu0
      %576 = vmatprep.mubr.bf16.mxu0 0
      %577 = vmatmul.mubr.bf16.gmra.mxu0 %v442
      %v578 = vpop.f32.mrf.mxu0
      %v579 = vadd.f32 %v319, %v578
      %v580 = vpop.f32.mrf.mxu0
      %v581 = vpop.f32.mrf.mxu0
      %v582 = vadd.f32 %v319, %v581
      %v583 = vpop.f32.mrf.mxu0
      %584 = vmatprep.mubr.bf16.mxu0 0
      %585 = vmatmul.mubr.bf16.gmra.mxu0 %v445
      %v586 = vpop.f32.mrf.mxu0
      %v587 = vadd.f32 %v319, %v586
      %v588 = vpop.f32.mrf.mxu0
      %v589 = vpop.f32.mrf.mxu0
      %v590 = vadd.f32 %v319, %v589
      %v591 = vpop.f32.mrf.mxu0
      %592 = vmatprep.mubr.bf16.mxu0 0
      %593 = vmatmul.mubr.bf16.gmra.mxu0 %v448
      %v594 = vpop.f32.mrf.mxu0
      %v595 = vadd.f32 %v319, %v594
      %v596 = vpop.f32.mrf.mxu0
      %v597 = vpop.f32.mrf.mxu0
      %v598 = vadd.f32 %v319, %v597
      %v599 = vpop.f32.mrf.mxu0
      %600 = vmatprep.mubr.bf16.mxu0 0
      %601 = vmatmul.mubr.bf16.gmra.mxu0 %v451
      %v602 = vpop.f32.mrf.mxu0
      %v603 = vadd.f32 %v319, %v602
      %v604 = vpop.f32.mrf.mxu0
      %v605 = vpop.f32.mrf.mxu0
      %v606 = vadd.f32 %v319, %v605
      %v607 = vpop.f32.mrf.mxu0
      %608 = vmatprep.mubr.bf16.mxu0 0
      %609 = vmatmul.mubr.bf16.gmra.mxu0 %v454
      %v610 = vpop.f32.mrf.mxu0
      %v611 = vadd.f32 %v319, %v610
      %v612 = vpop.f32.mrf.mxu0
      %v613 = vpop.f32.mrf.mxu0
      %v614 = vadd.f32 %v319, %v613
      %v615 = vpop.f32.mrf.mxu0
      %616 = vdwg.mxu0
      %v617 = vmax.f32 %v491, 0.0
      %v618 = vmax.f32 %v494, 0.0
      %v619 = vmax.f32 %v499, 0.0
      %v620 = vmax.f32 %v502, 0.0
      %v621 = vmax.f32 %v507, 0.0
      %v622 = vmax.f32 %v510, 0.0
      %v623 = vmax.f32 %v515, 0.0
      %v624 = vmax.f32 %v518, 0.0
      %v625 = vmax.f32 %v523, 0.0
      %v626 = vmax.f32 %v526, 0.0
      %v627 = vmax.f32 %v531, 0.0
      %v628 = vmax.f32 %v534, 0.0
      %v629 = vmax.f32 %v539, 0.0
      %v630 = vmax.f32 %v542, 0.0
      %v631 = vmax.f32 %v547, 0.0
      %v632 = vmax.f32 %v550, 0.0
      %v633 = vmax.f32 %v555, 0.0
      %v634 = vmax.f32 %v558, 0.0
      %v635 = vmax.f32 %v563, 0.0
      %v636 = vmax.f32 %v566, 0.0
      %v637 = vmax.f32 %v571, 0.0
      %v638 = vmax.f32 %v574, 0.0
      %v639 = vmax.f32 %v579, 0.0
      %v640 = vmax.f32 %v582, 0.0
      %v641 = vmax.f32 %v587, 0.0
      %v642 = vmax.f32 %v590, 0.0
      %v643 = vmax.f32 %v595, 0.0
      %v644 = vmax.f32 %v598, 0.0
      %v645 = vmax.f32 %v603, 0.0
      %v646 = vmax.f32 %v606, 0.0
      %v647 = vmax.f32 %v611, 0.0
      %v648 = vmax.f32 %v614, 0.0
      %vm649 = vcmask 31744
      %650 = vst.msk [vmem:[#allocation2] sm:$0xff] %vm649, 0.0
      %651 = vst.msk [vmem:[#allocation2 + $0x8] sm:$0xff] %vm649, 0.0
      %vm652 = vcmask 25600
      %653 = vst.msk [vmem:[#allocation2 + $0x10] sm:$0x3] %vm652, 0.0
      %654 = vst.msk [vmem:[#allocation2 + $0x18] sm:$0xff] %vm649, 0.0
      %655 = vst.msk [vmem:[#allocation2 + $0x20] sm:$0xff] %vm649, 0.0
      %656 = vst.msk [vmem:[#allocation2 + $0x28] sm:$0x3] %vm652, 0.0
      %657 = vst.msk [vmem:[#allocation2 + $0x30] sm:$0xff] %vm649, 0.0
      %658 = vst.msk [vmem:[#allocation2 + $0x38] sm:$0xff] %vm649, 0.0
      %659 = vst.msk [vmem:[#allocation2 + $0x40] sm:$0x3] %vm652, 0.0
      %660 = vst.msk [vmem:[#allocation2 + $0x48] sm:$0xff] %vm649, 0.0
      %661 = vst.msk [vmem:[#allocation2 + $0x50] sm:$0xff] %vm649, 0.0
      %662 = vst.msk [vmem:[#allocation2 + $0x58] sm:$0x3] %vm652, 0.0
      %663 = vst.msk [vmem:[#allocation2 + $0x60] sm:$0xff] %vm649, 0.0
      %664 = vst.msk [vmem:[#allocation2 + $0x68] sm:$0xff] %vm649, 0.0
      %665 = vst.msk [vmem:[#allocation2 + $0x70] sm:$0x3] %vm652, 0.0
      %666 = vst.msk [vmem:[#allocation2 + $0x78] sm:$0xff] %vm649, 0.0
      %667 = vst.msk [vmem:[#allocation2 + $0x80] sm:$0xff] %vm649, 0.0
      %668 = vst.msk [vmem:[#allocation2 + $0x88] sm:$0x3] %vm652, 0.0
      %669 = vst.msk [vmem:[#allocation2 + $0x90] sm:$0xff] %vm649, 0.0
      %670 = vst.msk [vmem:[#allocation2 + $0x98] sm:$0xff] %vm649, 0.0
      %671 = vst.msk [vmem:[#allocation2 + $0xa0] sm:$0x3] %vm652, 0.0
      %672 = vst.msk [vmem:[#allocation2 + $0xa8] sm:$0xff] %vm649, 0.0
      %673 = vst.msk [vmem:[#allocation2 + $0xb0] sm:$0xff] %vm649, 0.0
      %674 = vst.msk [vmem:[#allocation2 + $0xb8] sm:$0x3] %vm652, 0.0
      %675 = vst.msk [vmem:[#allocation2 + $0xc0] sm:$0xff] %vm649, 0.0
      %676 = vst.msk [vmem:[#allocation2 + $0xc8] sm:$0xff] %vm649, 0.0
      %677 = vst.msk [vmem:[#allocation2 + $0xd0] sm:$0x3] %vm652, 0.0
      %678 = vst.msk [vmem:[#allocation2 + $0xd8] sm:$0xff] %vm649, 0.0
      %679 = vst.msk [vmem:[#allocation2 + $0xe0] sm:$0xff] %vm649, 0.0
      %680 = vst.msk [vmem:[#allocation2 + $0xe8] sm:$0x3] %vm652, 0.0
      %681 = vst.msk [vmem:[#allocation2 + $0xf0] sm:$0xff] %vm649, 0.0
      %682 = vst.msk [vmem:[#allocation2 + $0xf8] sm:$0xff] %vm649, 0.0
      %683 = vst.msk [vmem:[#allocation2 + $0x100] sm:$0x3] %vm652, 0.0
      %684 = vst.msk [vmem:[#allocation2 + $0x108] sm:$0xff] %vm649, 0.0
      %685 = vst.msk [vmem:[#allocation2 + $0x110] sm:$0xff] %vm649, 0.0
      %686 = vst.msk [vmem:[#allocation2 + $0x118] sm:$0x3] %vm652, 0.0
      %687 = vst.msk [vmem:[#allocation2 + $0x120] sm:$0xff] %vm649, 0.0
      %688 = vst.msk [vmem:[#allocation2 + $0x128] sm:$0xff] %vm649, 0.0
      %689 = vst.msk [vmem:[#allocation2 + $0x130] sm:$0x3] %vm652, 0.0
      %690 = vst.msk [vmem:[#allocation2 + $0x138] sm:$0xff] %vm649, 0.0
      %691 = vst.msk [vmem:[#allocation2 + $0x140] sm:$0xff] %vm649, 0.0
      %692 = vst.msk [vmem:[#allocation2 + $0x148] sm:$0x3] %vm652, 0.0
      %693 = vst.msk [vmem:[#allocation2 + $0x150] sm:$0xff] %vm649, 0.0
      %694 = vst.msk [vmem:[#allocation2 + $0x158] sm:$0xff] %vm649, 0.0
      %695 = vst.msk [vmem:[#allocation2 + $0x160] sm:$0x3] %vm652, 0.0
      %696 = vst.msk [vmem:[#allocation2 + $0x168] sm:$0xff] %vm649, 0.0
      %697 = vst.msk [vmem:[#allocation2 + $0x170] sm:$0xff] %vm649, 0.0
      %698 = vst.msk [vmem:[#allocation2 + $0x178] sm:$0x3] %vm652, 0.0
      %699 = vst.msk [vmem:[#allocation2 + $0x180] sm:$0xff] %vm649, 0.0
      %700 = vst.msk [vmem:[#allocation2 + $0x188] sm:$0xff] %vm649, 0.0
      %701 = vst.msk [vmem:[#allocation2 + $0x190] sm:$0x3] %vm652, 0.0
      %702 = vst.msk [vmem:[#allocation2 + $0x198] sm:$0xff] %vm649, 0.0
      %703 = vst.msk [vmem:[#allocation2 + $0x1a0] sm:$0xff] %vm649, 0.0
      %704 = vst.msk [vmem:[#allocation2 + $0x1a8] sm:$0x3] %vm652, 0.0
      %s705 = scalar_lea.vmem [#allocation2], 24
      %706 = vst.msk [vmem:[%s705 + $0x1] sm:$0xff] %vm649, %v617
      %707 = vst.msk [vmem:[%s705 + $0x9] sm:$0xff] %vm649, %v618
      %708 = vst.msk [vmem:[%s705 + $0x19] sm:$0xff] %vm649, %v619
      %709 = vst.msk [vmem:[%s705 + $0x21] sm:$0xff] %vm649, %v620
      %710 = vst.msk [vmem:[%s705 + $0x31] sm:$0xff] %vm649, %v621
      %711 = vst.msk [vmem:[%s705 + $0x39] sm:$0xff] %vm649, %v622
      %712 = vst.msk [vmem:[%s705 + $0x49] sm:$0xff] %vm649, %v623
      %713 = vst.msk [vmem:[%s705 + $0x51] sm:$0xff] %vm649, %v624
      %714 = vst.msk [vmem:[%s705 + $0x61] sm:$0xff] %vm649, %v625
      %715 = vst.msk [vmem:[%s705 + $0x69] sm:$0xff] %vm649, %v626
      %716 = vst.msk [vmem:[%s705 + $0x79] sm:$0xff] %vm649, %v627
      %717 = vst.msk [vmem:[%s705 + $0x81] sm:$0xff] %vm649, %v628
      %718 = vst.msk [vmem:[%s705 + $0x91] sm:$0xff] %vm649, %v629
      %719 = vst.msk [vmem:[%s705 + $0x99] sm:$0xff] %vm649, %v630
      %720 = vst.msk [vmem:[%s705 + $0xa9] sm:$0xff] %vm649, %v631
      %721 = vst.msk [vmem:[%s705 + $0xb1] sm:$0xff] %vm649, %v632
      %722 = vst.msk [vmem:[%s705 + $0xc1] sm:$0xff] %vm649, %v633
      %723 = vst.msk [vmem:[%s705 + $0xc9] sm:$0xff] %vm649, %v634
      %724 = vst.msk [vmem:[%s705 + $0xd9] sm:$0xff] %vm649, %v635
      %725 = vst.msk [vmem:[%s705 + $0xe1] sm:$0xff] %vm649, %v636
      %726 = vst.msk [vmem:[%s705 + $0xf1] sm:$0xff] %vm649, %v637
      %727 = vst.msk [vmem:[%s705 + $0xf9] sm:$0xff] %vm649, %v638
      %728 = vst.msk [vmem:[%s705 + $0x109] sm:$0xff] %vm649, %v639
      %729 = vst.msk [vmem:[%s705 + $0x111] sm:$0xff] %vm649, %v640
      %730 = vst.msk [vmem:[%s705 + $0x121] sm:$0xff] %vm649, %v641
      %731 = vst.msk [vmem:[%s705 + $0x129] sm:$0xff] %vm649, %v642
      %732 = vst.msk [vmem:[%s705 + $0x139] sm:$0xff] %vm649, %v643
      %733 = vst.msk [vmem:[%s705 + $0x141] sm:$0xff] %vm649, %v644
      %734 = vst.msk [vmem:[%s705 + $0x151] sm:$0xff] %vm649, %v645
      %735 = vst.msk [vmem:[%s705 + $0x159] sm:$0xff] %vm649, %v646
      %736 = vst.msk [vmem:[%s705 + $0x169] sm:$0xff] %vm649, %v647
      %737 = vst.msk [vmem:[%s705 + $0x171] sm:$0xff] %vm649, %v648
      %v738 = vld [vmem:[#allocation2] sm:$0xff]
      %v739 = vld [vmem:[#allocation2 + $0x8] sm:$0xff]
      %v740 = vld [vmem:[#allocation2 + $0x18] sm:$0xff]
      %v741 = vld [vmem:[#allocation2 + $0x20] sm:$0xff]
      %v742 = vld [vmem:[#allocation2 + $0x30] sm:$0xff]
      %v743 = vld [vmem:[#allocation2 + $0x38] sm:$0xff]
      %v744 = vld [vmem:[#allocation2 + $0x48] sm:$0xff]
      %v745 = vld [vmem:[#allocation2 + $0x50] sm:$0xff]
      %v746 = vld [vmem:[#allocation2 + $0x60] sm:$0xff]
      %v747 = vld [vmem:[#allocation2 + $0x68] sm:$0xff]
      %v748 = vld [vmem:[#allocation2 + $0x78] sm:$0xff]
      %v749 = vld [vmem:[#allocation2 + $0x80] sm:$0xff]
      %v750 = vld [vmem:[#allocation2 + $0x90] sm:$0xff]
      %v751 = vld [vmem:[#allocation2 + $0x98] sm:$0xff]
      %v752 = vld [vmem:[#allocation2 + $0xa8] sm:$0xff]
      %v753 = vld [vmem:[#allocation2 + $0xb0] sm:$0xff]
      %v754 = vld [vmem:[#allocation2 + $0xc0] sm:$0xff]
      %v755 = vld [vmem:[#allocation2 + $0xc8] sm:$0xff]
      %v756 = vld [vmem:[#allocation2 + $0xd8] sm:$0xff]
      %v757 = vld [vmem:[#allocation2 + $0xe0] sm:$0xff]
      %v758 = vld [vmem:[#allocation2 + $0xf0] sm:$0xff]
      %v759 = vld [vmem:[#allocation2 + $0xf8] sm:$0xff]
      %v760 = vld [vmem:[#allocation2 + $0x108] sm:$0xff]
      %v761 = vld [vmem:[#allocation2 + $0x110] sm:$0xff]
      %v762 = vld [vmem:[#allocation2 + $0x120] sm:$0xff]
      %v763 = vld [vmem:[#allocation2 + $0x128] sm:$0xff]
      %v764 = vld [vmem:[#allocation2 + $0x138] sm:$0xff]
      %v765 = vld [vmem:[#allocation2 + $0x140] sm:$0xff]
      %v766 = vld [vmem:[#allocation2 + $0x150] sm:$0xff]
      %v767 = vld [vmem:[#allocation2 + $0x158] sm:$0xff]
      %v768 = vld [vmem:[#allocation2 + $0x168] sm:$0xff]
      %v769 = vld [vmem:[#allocation2 + $0x170] sm:$0xff]
      %v770 = vpack.c.bf16 %v739, %v738
      %v771 = vpack.c.bf16 %v741, %v740
      %v772 = vpack.c.bf16 %v743, %v742
      %v773 = vpack.c.bf16 %v745, %v744
      %v774 = vpack.c.bf16 %v747, %v746
      %v775 = vpack.c.bf16 %v749, %v748
      %v776 = vpack.c.bf16 %v751, %v750
      %v777 = vpack.c.bf16 %v753, %v752
      %v778 = vpack.c.bf16 %v755, %v754
      %v779 = vpack.c.bf16 %v757, %v756
      %v780 = vpack.c.bf16 %v759, %v758
      %v781 = vpack.c.bf16 %v761, %v760
      %v782 = vpack.c.bf16 %v763, %v762
      %v783 = vpack.c.bf16 %v765, %v764
      %v784 = vpack.c.bf16 %v767, %v766
      %v785 = vpack.c.bf16 %v769, %v768
      %v786 = vld [vmem:[%s3] sm:$0x3]
      %v787 = vld [vmem:[#allocation2 + $0x1] sm:$0xff]
      %v788 = vld [vmem:[#allocation2 + $0x9] sm:$0xff]
      %v789 = vld [vmem:[#allocation2 + $0x19] sm:$0xff]
      %v790 = vld [vmem:[#allocation2 + $0x21] sm:$0xff]
      %v791 = vld [vmem:[#allocation2 + $0x31] sm:$0xff]
      %v792 = vld [vmem:[#allocation2 + $0x39] sm:$0xff]
      %v793 = vld [vmem:[#allocation2 + $0x49] sm:$0xff]
      %v794 = vld [vmem:[#allocation2 + $0x51] sm:$0xff]
      %v795 = vld [vmem:[#allocation2 + $0x61] sm:$0xff]
      %v796 = vld [vmem:[#allocation2 + $0x69] sm:$0xff]
      %v797 = vld [vmem:[#allocation2 + $0x79] sm:$0xff]
      %v798 = vld [vmem:[#allocation2 + $0x81] sm:$0xff]
      %v799 = vld [vmem:[#allocation2 + $0x91] sm:$0xff]
      %v800 = vld [vmem:[#allocation2 + $0x99] sm:$0xff]
      %v801 = vld [vmem:[#allocation2 + $0xa9] sm:$0xff]
      %v802 = vld [vmem:[#allocation2 + $0xb1] sm:$0xff]
      %v803 = vld [vmem:[#allocation2 + $0xc1] sm:$0xff]
      %v804 = vld [vmem:[#allocation2 + $0xc9] sm:$0xff]
      %v805 = vld [vmem:[#allocation2 + $0xd9] sm:$0xff]
      %v806 = vld [vmem:[#allocation2 + $0xe1] sm:$0xff]
      %v807 = vld [vmem:[#allocation2 + $0xf1] sm:$0xff]
      %v808 = vld [vmem:[#allocation2 + $0xf9] sm:$0xff]
      %v809 = vld [vmem:[#allocation2 + $0x109] sm:$0xff]
      %v810 = vld [vmem:[#allocation2 + $0x111] sm:$0xff]
      %v811 = vld [vmem:[#allocation2 + $0x121] sm:$0xff]
      %v812 = vld [vmem:[#allocation2 + $0x129] sm:$0xff]
      %v813 = vld [vmem:[#allocation2 + $0x139] sm:$0xff]
      %v814 = vld [vmem:[#allocation2 + $0x141] sm:$0xff]
      %v815 = vld [vmem:[#allocation2 + $0x151] sm:$0xff]
      %v816 = vld [vmem:[#allocation2 + $0x159] sm:$0xff]
      %v817 = vld [vmem:[#allocation2 + $0x169] sm:$0xff]
      %v818 = vld [vmem:[#allocation2 + $0x171] sm:$0xff]
      %v819 = vpack.c.bf16 %v788, %v787
      %v820 = vpack.c.bf16 %v790, %v789
      %v821 = vpack.c.bf16 %v792, %v791
      %v822 = vpack.c.bf16 %v794, %v793
      %v823 = vpack.c.bf16 %v796, %v795
      %v824 = vpack.c.bf16 %v798, %v797
      %v825 = vpack.c.bf16 %v800, %v799
      %v826 = vpack.c.bf16 %v802, %v801
      %v827 = vpack.c.bf16 %v804, %v803
      %v828 = vpack.c.bf16 %v806, %v805
      %v829 = vpack.c.bf16 %v808, %v807
      %v830 = vpack.c.bf16 %v810, %v809
      %v831 = vpack.c.bf16 %v812, %v811
      %v832 = vpack.c.bf16 %v814, %v813
      %v833 = vpack.c.bf16 %v816, %v815
      %v834 = vpack.c.bf16 %v818, %v817
      %s835 = scalar_lea.vmem %s3, 2
      %v836 = vld [vmem:[%s835] sm:$0x3]
      %v838 = vsel %vm649, %v819, 0
      %v841 = vsel %vm649, %v820, 0
      %v844 = vsel %vm649, %v821, 0
      %v847 = vsel %vm649, %v822, 0
      %v850 = vsel %vm649, %v823, 0
      %v853 = vsel %vm649, %v824, 0
      %v856 = vsel %vm649, %v825, 0
      %v859 = vsel %vm649, %v826, 0
      %v862 = vsel %vm649, %v827, 0
      %v865 = vsel %vm649, %v828, 0
      %v868 = vsel %vm649, %v829, 0
      %v871 = vsel %vm649, %v830, 0
      %v874 = vsel %vm649, %v831, 0
      %v877 = vsel %vm649, %v832, 0
      %v880 = vsel %vm649, %v833, 0
      %v883 = vsel %vm649, %v834, 0
      %vm885 = vcmask 1041408
      %v887 = vsel %vm885, %v836, 0
      %889 = vmatprep.subr.bf16.mxu0 0
      %890 = vmatpush1.bf16.msra.mxu0 0
      %891 = vmatprep.subr.bf16.mxu0 0
      %892 = vmatpush1.bf16.msra.mxu0 0
      %893 = vmatprep.subr.bf16.mxu0 0
      %894 = vmatpush1.bf16.msra.mxu0 0
      %895 = vmatprep.subr.bf16.mxu0 0
      %896 = vmatpush1.bf16.msra.mxu0 0
      %897 = vmatprep.subr.bf16.mxu0 0
      %898 = vmatpush1.bf16.msra.mxu0 0
      %899 = vmatprep.subr.bf16.mxu0 0
      %900 = vmatpush1.bf16.msra.mxu0 0
      %901 = vmatprep.subr.bf16.mxu0 0
      %902 = vmatpush1.bf16.msra.mxu0 0
      %903 = vmatprep.subr.bf16.mxu0 0
      %904 = vmatpush1.bf16.msra.mxu0 %v887
      %905 = vmatprep.subr.bf16.mxu0 0
      %906 = vmatpush2.bf16.msra.mxu0 0
      %907 = vmatprep.subr.bf16.mxu0 0
      %908 = vmatpush2.bf16.msra.mxu0 0
      %909 = vmatprep.subr.bf16.mxu0 0
      %910 = vmatpush2.bf16.msra.mxu0 0
      %911 = vmatprep.subr.bf16.mxu0 0
      %912 = vmatpush2.bf16.msra.mxu0 0
      %913 = vmatprep.subr.bf16.mxu0 0
      %914 = vmatpush2.bf16.msra.mxu0 0
      %915 = vmatprep.subr.bf16.mxu0 0
      %916 = vmatpush2.bf16.msra.mxu0 0
      %917 = vmatprep.subr.bf16.mxu0 0
      %918 = vmatpush2.bf16.msra.mxu0 0
      %919 = vmatprep.subr.bf16.mxu0 0
      %920 = vmatpush2.bf16.msra.mxu0 0
      %921 = vmatprep.mubr.bf16.mxu0 0
      %922 = vmatmul.mubr.bf16.gmra.mxu0 %v838
      %v923 = vpop.f32.mrf.mxu0
      %v924 = vadd.f32 0.0, %v923
      %v925 = vpop.f32.mrf.mxu0
      %v926 = vpop.f32.mrf.mxu0
      %v927 = vadd.f32 0.0, %v926
      %v928 = vpop.f32.mrf.mxu0
      %929 = vmatprep.mubr.bf16.mxu0 0
      %930 = vmatmul.mubr.bf16.gmra.mxu0 %v841
      %v931 = vpop.f32.mrf.mxu0
      %v932 = vadd.f32 0.0, %v931
      %v933 = vpop.f32.mrf.mxu0
      %v934 = vpop.f32.mrf.mxu0
      %v935 = vadd.f32 0.0, %v934
      %v936 = vpop.f32.mrf.mxu0
      %937 = vmatprep.mubr.bf16.mxu0 0
      %938 = vmatmul.mubr.bf16.gmra.mxu0 %v844
      %v939 = vpop.f32.mrf.mxu0
      %v940 = vadd.f32 0.0, %v939
      %v941 = vpop.f32.mrf.mxu0
      %v942 = vpop.f32.mrf.mxu0
      %v943 = vadd.f32 0.0, %v942
      %v944 = vpop.f32.mrf.mxu0
      %945 = vmatprep.mubr.bf16.mxu0 0
      %946 = vmatmul.mubr.bf16.gmra.mxu0 %v847
      %v947 = vpop.f32.mrf.mxu0
      %v948 = vadd.f32 0.0, %v947
      %v949 = vpop.f32.mrf.mxu0
      %v950 = vpop.f32.mrf.mxu0
      %v951 = vadd.f32 0.0, %v950
      %v952 = vpop.f32.mrf.mxu0
      %953 = vmatprep.mubr.bf16.mxu0 0
      %954 = vmatmul.mubr.bf16.gmra.mxu0 %v850
      %v955 = vpop.f32.mrf.mxu0
      %v956 = vadd.f32 0.0, %v955
      %v957 = vpop.f32.mrf.mxu0
      %v958 = vpop.f32.mrf.mxu0
      %v959 = vadd.f32 0.0, %v958
      %v960 = vpop.f32.mrf.mxu0
      %961 = vmatprep.mubr.bf16.mxu0 0
      %962 = vmatmul.mubr.bf16.gmra.mxu0 %v853
      %v963 = vpop.f32.mrf.mxu0
      %v964 = vadd.f32 0.0, %v963
      %v965 = vpop.f32.mrf.mxu0
      %v966 = vpop.f32.mrf.mxu0
      %v967 = vadd.f32 0.0, %v966
      %v968 = vpop.f32.mrf.mxu0
      %969 = vmatprep.mubr.bf16.mxu0 0
      %970 = vmatmul.mubr.bf16.gmra.mxu0 %v856
      %v971 = vpop.f32.mrf.mxu0
      %v972 = vadd.f32 0.0, %v971
      %v973 = vpop.f32.mrf.mxu0
      %v974 = vpop.f32.mrf.mxu0
      %v975 = vadd.f32 0.0, %v974
      %v976 = vpop.f32.mrf.mxu0
      %977 = vmatprep.mubr.bf16.mxu0 0
      %978 = vmatmul.mubr.bf16.gmra.mxu0 %v859
      %v979 = vpop.f32.mrf.mxu0
      %v980 = vadd.f32 0.0, %v979
      %v981 = vpop.f32.mrf.mxu0
      %v982 = vpop.f32.mrf.mxu0
      %v983 = vadd.f32 0.0, %v982
      %v984 = vpop.f32.mrf.mxu0
      %985 = vmatprep.mubr.bf16.mxu0 0
      %986 = vmatmul.mubr.bf16.gmra.mxu0 %v862
      %v987 = vpop.f32.mrf.mxu0
      %v988 = vadd.f32 0.0, %v987
      %v989 = vpop.f32.mrf.mxu0
      %v990 = vpop.f32.mrf.mxu0
      %v991 = vadd.f32 0.0, %v990
      %v992 = vpop.f32.mrf.mxu0
      %993 = vmatprep.mubr.bf16.mxu0 0
      %994 = vmatmul.mubr.bf16.gmra.mxu0 %v865
      %v995 = vpop.f32.mrf.mxu0
      %v996 = vadd.f32 0.0, %v995
      %v997 = vpop.f32.mrf.mxu0
      %v998 = vpop.f32.mrf.mxu0
      %v999 = vadd.f32 0.0, %v998
      %v1000 = vpop.f32.mrf.mxu0
      %1001 = vmatprep.mubr.bf16.mxu0 0
      %1002 = vmatmul.mubr.bf16.gmra.mxu0 %v868
      %v1003 = vpop.f32.mrf.mxu0
      %v1004 = vadd.f32 0.0, %v1003
      %v1005 = vpop.f32.mrf.mxu0
      %v1006 = vpop.f32.mrf.mxu0
      %v1007 = vadd.f32 0.0, %v1006
      %v1008 = vpop.f32.mrf.mxu0
      %1009 = vmatprep.mubr.bf16.mxu0 0
      %1010 = vmatmul.mubr.bf16.gmra.mxu0 %v871
      %v1011 = vpop.f32.mrf.mxu0
      %v1012 = vadd.f32 0.0, %v1011
      %v1013 = vpop.f32.mrf.mxu0
      %v1014 = vpop.f32.mrf.mxu0
      %v1015 = vadd.f32 0.0, %v1014
      %v1016 = vpop.f32.mrf.mxu0
      %1017 = vmatprep.mubr.bf16.mxu0 0
      %1018 = vmatmul.mubr.bf16.gmra.mxu0 %v874
      %v1019 = vpop.f32.mrf.mxu0
      %v1020 = vadd.f32 0.0, %v1019
      %v1021 = vpop.f32.mrf.mxu0
      %v1022 = vpop.f32.mrf.mxu0
      %v1023 = vadd.f32 0.0, %v1022
      %v1024 = vpop.f32.mrf.mxu0
      %1025 = vmatprep.mubr.bf16.mxu0 0
      %1026 = vmatmul.mubr.bf16.gmra.mxu0 %v877
      %v1027 = vpop.f32.mrf.mxu0
      %v1028 = vadd.f32 0.0, %v1027
      %v1029 = vpop.f32.mrf.mxu0
      %v1030 = vpop.f32.mrf.mxu0
      %v1031 = vadd.f32 0.0, %v1030
      %v1032 = vpop.f32.mrf.mxu0
      %1033 = vmatprep.mubr.bf16.mxu0 0
      %1034 = vmatmul.mubr.bf16.gmra.mxu0 %v880
      %v1035 = vpop.f32.mrf.mxu0
      %v1036 = vadd.f32 0.0, %v1035
      %v1037 = vpop.f32.mrf.mxu0
      %v1038 = vpop.f32.mrf.mxu0
      %v1039 = vadd.f32 0.0, %v1038
      %v1040 = vpop.f32.mrf.mxu0
      %1041 = vmatprep.mubr.bf16.mxu0 0
      %1042 = vmatmul.mubr.bf16.gmra.mxu0 %v883
      %v1043 = vpop.f32.mrf.mxu0
      %v1044 = vadd.f32 0.0, %v1043
      %v1045 = vpop.f32.mrf.mxu0
      %v1046 = vpop.f32.mrf.mxu0
      %v1047 = vadd.f32 0.0, %v1046
      %v1048 = vpop.f32.mrf.mxu0
      %1049 = vdwg.mxu0
      %v1051 = vsel %vm649, %v770, 0
      %v1054 = vsel %vm649, %v771, 0
      %v1057 = vsel %vm649, %v772, 0
      %v1060 = vsel %vm649, %v773, 0
      %v1063 = vsel %vm649, %v774, 0
      %v1066 = vsel %vm649, %v775, 0
      %v1069 = vsel %vm649, %v776, 0
      %v1072 = vsel %vm649, %v777, 0
      %v1075 = vsel %vm649, %v778, 0
      %v1078 = vsel %vm649, %v779, 0
      %v1081 = vsel %vm649, %v780, 0
      %v1084 = vsel %vm649, %v781, 0
      %v1087 = vsel %vm649, %v782, 0
      %v1090 = vsel %vm649, %v783, 0
      %v1093 = vsel %vm649, %v784, 0
      %v1096 = vsel %vm649, %v785, 0
      %v1099 = vsel %vm885, %v786, 0
      %1101 = vmatprep.subr.bf16.mxu0 0
      %1102 = vmatpush1.bf16.msra.mxu0 0
      %1103 = vmatprep.subr.bf16.mxu0 0
      %1104 = vmatpush1.bf16.msra.mxu0 0
      %1105 = vmatprep.subr.bf16.mxu0 0
      %1106 = vmatpush1.bf16.msra.mxu0 0
      %1107 = vmatprep.subr.bf16.mxu0 0
      %1108 = vmatpush1.bf16.msra.mxu0 0
      %1109 = vmatprep.subr.bf16.mxu0 0
      %1110 = vmatpush1.bf16.msra.mxu0 0
      %1111 = vmatprep.subr.bf16.mxu0 0
      %1112 = vmatpush1.bf16.msra.mxu0 0
      %1113 = vmatprep.subr.bf16.mxu0 0
      %1114 = vmatpush1.bf16.msra.mxu0 0
      %1115 = vmatprep.subr.bf16.mxu0 0
      %1116 = vmatpush1.bf16.msra.mxu0 %v1099
      %1117 = vmatprep.subr.bf16.mxu0 0
      %1118 = vmatpush2.bf16.msra.mxu0 0
      %1119 = vmatprep.subr.bf16.mxu0 0
      %1120 = vmatpush2.bf16.msra.mxu0 0
      %1121 = vmatprep.subr.bf16.mxu0 0
      %1122 = vmatpush2.bf16.msra.mxu0 0
      %1123 = vmatprep.subr.bf16.mxu0 0
      %1124 = vmatpush2.bf16.msra.mxu0 0
      %1125 = vmatprep.subr.bf16.mxu0 0
      %1126 = vmatpush2.bf16.msra.mxu0 0
      %1127 = vmatprep.subr.bf16.mxu0 0
      %1128 = vmatpush2.bf16.msra.mxu0 0
      %1129 = vmatprep.subr.bf16.mxu0 0
      %1130 = vmatpush2.bf16.msra.mxu0 0
      %1131 = vmatprep.subr.bf16.mxu0 0
      %1132 = vmatpush2.bf16.msra.mxu0 0
      %1133 = vmatprep.mubr.bf16.mxu0 0
      %1134 = vmatmul.mubr.bf16.gmra.mxu0 %v1051
      %v1135 = vpop.f32.mrf.mxu0
      %v1136 = vadd.f32 %v924, %v1135
      %v1137 = vpop.f32.mrf.mxu0
      %v1138 = vpop.f32.mrf.mxu0
      %v1139 = vadd.f32 %v927, %v1138
      %v1140 = vpop.f32.mrf.mxu0
      %1141 = vmatprep.mubr.bf16.mxu0 0
      %1142 = vmatmul.mubr.bf16.gmra.mxu0 %v1054
      %v1143 = vpop.f32.mrf.mxu0
      %v1144 = vadd.f32 %v932, %v1143
      %v1145 = vpop.f32.mrf.mxu0
      %v1146 = vpop.f32.mrf.mxu0
      %v1147 = vadd.f32 %v935, %v1146
      %v1148 = vpop.f32.mrf.mxu0
      %1149 = vmatprep.mubr.bf16.mxu0 0
      %1150 = vmatmul.mubr.bf16.gmra.mxu0 %v1057
      %v1151 = vpop.f32.mrf.mxu0
      %v1152 = vadd.f32 %v940, %v1151
      %v1153 = vpop.f32.mrf.mxu0
      %v1154 = vpop.f32.mrf.mxu0
      %v1155 = vadd.f32 %v943, %v1154
      %v1156 = vpop.f32.mrf.mxu0
      %1157 = vmatprep.mubr.bf16.mxu0 0
      %1158 = vmatmul.mubr.bf16.gmra.mxu0 %v1060
      %v1159 = vpop.f32.mrf.mxu0
      %v1160 = vadd.f32 %v948, %v1159
      %v1161 = vpop.f32.mrf.mxu0
      %v1162 = vpop.f32.mrf.mxu0
      %v1163 = vadd.f32 %v951, %v1162
      %v1164 = vpop.f32.mrf.mxu0
      %1165 = vmatprep.mubr.bf16.mxu0 0
      %1166 = vmatmul.mubr.bf16.gmra.mxu0 %v1063
      %v1167 = vpop.f32.mrf.mxu0
      %v1168 = vadd.f32 %v956, %v1167
      %v1169 = vpop.f32.mrf.mxu0
      %v1170 = vpop.f32.mrf.mxu0
      %v1171 = vadd.f32 %v959, %v1170
      %v1172 = vpop.f32.mrf.mxu0
      %1173 = vmatprep.mubr.bf16.mxu0 0
      %1174 = vmatmul.mubr.bf16.gmra.mxu0 %v1066
      %v1175 = vpop.f32.mrf.mxu0
      %v1176 = vadd.f32 %v964, %v1175
      %v1177 = vpop.f32.mrf.mxu0
      %v1178 = vpop.f32.mrf.mxu0
      %v1179 = vadd.f32 %v967, %v1178
      %v1180 = vpop.f32.mrf.mxu0
      %1181 = vmatprep.mubr.bf16.mxu0 0
      %1182 = vmatmul.mubr.bf16.gmra.mxu0 %v1069
      %v1183 = vpop.f32.mrf.mxu0
      %v1184 = vadd.f32 %v972, %v1183
      %v1185 = vpop.f32.mrf.mxu0
      %v1186 = vpop.f32.mrf.mxu0
      %v1187 = vadd.f32 %v975, %v1186
      %v1188 = vpop.f32.mrf.mxu0
      %1189 = vmatprep.mubr.bf16.mxu0 0
      %1190 = vmatmul.mubr.bf16.gmra.mxu0 %v1072
      %v1191 = vpop.f32.mrf.mxu0
      %v1192 = vadd.f32 %v980, %v1191
      %v1193 = vpop.f32.mrf.mxu0
      %v1194 = vpop.f32.mrf.mxu0
      %v1195 = vadd.f32 %v983, %v1194
      %v1196 = vpop.f32.mrf.mxu0
      %1197 = vmatprep.mubr.bf16.mxu0 0
      %1198 = vmatmul.mubr.bf16.gmra.mxu0 %v1075
      %v1199 = vpop.f32.mrf.mxu0
      %v1200 = vadd.f32 %v988, %v1199
      %v1201 = vpop.f32.mrf.mxu0
      %v1202 = vpop.f32.mrf.mxu0
      %v1203 = vadd.f32 %v991, %v1202
      %v1204 = vpop.f32.mrf.mxu0
      %1205 = vmatprep.mubr.bf16.mxu0 0
      %1206 = vmatmul.mubr.bf16.gmra.mxu0 %v1078
      %v1207 = vpop.f32.mrf.mxu0
      %v1208 = vadd.f32 %v996, %v1207
      %v1209 = vpop.f32.mrf.mxu0
      %v1210 = vpop.f32.mrf.mxu0
      %v1211 = vadd.f32 %v999, %v1210
      %v1212 = vpop.f32.mrf.mxu0
      %1213 = vmatprep.mubr.bf16.mxu0 0
      %1214 = vmatmul.mubr.bf16.gmra.mxu0 %v1081
      %v1215 = vpop.f32.mrf.mxu0
      %v1216 = vadd.f32 %v1004, %v1215
      %v1217 = vpop.f32.mrf.mxu0
      %v1218 = vpop.f32.mrf.mxu0
      %v1219 = vadd.f32 %v1007, %v1218
      %v1220 = vpop.f32.mrf.mxu0
      %1221 = vmatprep.mubr.bf16.mxu0 0
      %1222 = vmatmul.mubr.bf16.gmra.mxu0 %v1084
      %v1223 = vpop.f32.mrf.mxu0
      %v1224 = vadd.f32 %v1012, %v1223
      %v1225 = vpop.f32.mrf.mxu0
      %v1226 = vpop.f32.mrf.mxu0
      %v1227 = vadd.f32 %v1015, %v1226
      %v1228 = vpop.f32.mrf.mxu0
      %1229 = vmatprep.mubr.bf16.mxu0 0
      %1230 = vmatmul.mubr.bf16.gmra.mxu0 %v1087
      %v1231 = vpop.f32.mrf.mxu0
      %v1232 = vadd.f32 %v1020, %v1231
      %v1233 = vpop.f32.mrf.mxu0
      %v1234 = vpop.f32.mrf.mxu0
      %v1235 = vadd.f32 %v1023, %v1234
      %v1236 = vpop.f32.mrf.mxu0
      %1237 = vmatprep.mubr.bf16.mxu0 0
      %1238 = vmatmul.mubr.bf16.gmra.mxu0 %v1090
      %v1239 = vpop.f32.mrf.mxu0
      %v1240 = vadd.f32 %v1028, %v1239
      %v1241 = vpop.f32.mrf.mxu0
      %v1242 = vpop.f32.mrf.mxu0
      %v1243 = vadd.f32 %v1031, %v1242
      %v1244 = vpop.f32.mrf.mxu0
      %1245 = vmatprep.mubr.bf16.mxu0 0
      %1246 = vmatmul.mubr.bf16.gmra.mxu0 %v1093
      %v1247 = vpop.f32.mrf.mxu0
      %v1248 = vadd.f32 %v1036, %v1247
      %v1249 = vpop.f32.mrf.mxu0
      %v1250 = vpop.f32.mrf.mxu0
      %v1251 = vadd.f32 %v1039, %v1250
      %v1252 = vpop.f32.mrf.mxu0
      %1253 = vmatprep.mubr.bf16.mxu0 0
      %1254 = vmatmul.mubr.bf16.gmra.mxu0 %v1096
      %v1255 = vpop.f32.mrf.mxu0
      %v1256 = vadd.f32 %v1044, %v1255
      %v1257 = vpop.f32.mrf.mxu0
      %v1258 = vpop.f32.mrf.mxu0
      %v1259 = vadd.f32 %v1047, %v1258
      %v1260 = vpop.f32.mrf.mxu0
      %1261 = vdwg.mxu0
      %v1262 = vld [vmem:[#allocation2 + $0x2] sm:$0xff]
      %v1263 = vld [vmem:[#allocation2 + $0xa] sm:$0xff]
      %v1264 = vld [vmem:[#allocation2 + $0x1a] sm:$0xff]
      %v1265 = vld [vmem:[#allocation2 + $0x22] sm:$0xff]
      %v1266 = vld [vmem:[#allocation2 + $0x32] sm:$0xff]
      %v1267 = vld [vmem:[#allocation2 + $0x3a] sm:$0xff]
      %v1268 = vld [vmem:[#allocation2 + $0x4a] sm:$0xff]
      %v1269 = vld [vmem:[#allocation2 + $0x52] sm:$0xff]
      %v1270 = vld [vmem:[#allocation2 + $0x62] sm:$0xff]
      %v1271 = vld [vmem:[#allocation2 + $0x6a] sm:$0xff]
      %v1272 = vld [vmem:[#allocation2 + $0x7a] sm:$0xff]
      %v1273 = vld [vmem:[#allocation2 + $0x82] sm:$0xff]
      %v1274 = vld [vmem:[#allocation2 + $0x92] sm:$0xff]
      %v1275 = vld [vmem:[#allocation2 + $0x9a] sm:$0xff]
      %v1276 = vld [vmem:[#allocation2 + $0xaa] sm:$0xff]
      %v1277 = vld [vmem:[#allocation2 + $0xb2] sm:$0xff]
      %v1278 = vld [vmem:[#allocation2 + $0xc2] sm:$0xff]
      %v1279 = vld [vmem:[#allocation2 + $0xca] sm:$0xff]
      %v1280 = vld [vmem:[#allocation2 + $0xda] sm:$0xff]
      %v1281 = vld [vmem:[#allocation2 + $0xe2] sm:$0xff]
      %v1282 = vld [vmem:[#allocation2 + $0xf2] sm:$0xff]
      %v1283 = vld [vmem:[#allocation2 + $0xfa] sm:$0xff]
      %v1284 = vld [vmem:[#allocation2 + $0x10a] sm:$0xff]
      %v1285 = vld [vmem:[#allocation2 + $0x112] sm:$0xff]
      %v1286 = vld [vmem:[#allocation2 + $0x122] sm:$0xff]
      %v1287 = vld [vmem:[#allocation2 + $0x12a] sm:$0xff]
      %v1288 = vld [vmem:[#allocation2 + $0x13a] sm:$0xff]
      %v1289 = vld [vmem:[#allocation2 + $0x142] sm:$0xff]
      %v1290 = vld [vmem:[#allocation2 + $0x152] sm:$0xff]
      %v1291 = vld [vmem:[#allocation2 + $0x15a] sm:$0xff]
      %v1292 = vld [vmem:[#allocation2 + $0x16a] sm:$0xff]
      %v1293 = vld [vmem:[#allocation2 + $0x172] sm:$0xff]
      %v1294 = vpack.c.bf16 %v1263, %v1262
      %v1295 = vpack.c.bf16 %v1265, %v1264
      %v1296 = vpack.c.bf16 %v1267, %v1266
      %v1297 = vpack.c.bf16 %v1269, %v1268
      %v1298 = vpack.c.bf16 %v1271, %v1270
      %v1299 = vpack.c.bf16 %v1273, %v1272
      %v1300 = vpack.c.bf16 %v1275, %v1274
      %v1301 = vpack.c.bf16 %v1277, %v1276
      %v1302 = vpack.c.bf16 %v1279, %v1278
      %v1303 = vpack.c.bf16 %v1281, %v1280
      %v1304 = vpack.c.bf16 %v1283, %v1282
      %v1305 = vpack.c.bf16 %v1285, %v1284
      %v1306 = vpack.c.bf16 %v1287, %v1286
      %v1307 = vpack.c.bf16 %v1289, %v1288
      %v1308 = vpack.c.bf16 %v1291, %v1290
      %v1309 = vpack.c.bf16 %v1293, %v1292
      %s1310 = scalar_lea.vmem %s3, 4
      %v1311 = vld [vmem:[%s1310] sm:$0x3]
      %v1313 = vsel %vm649, %v1294, 0
      %v1316 = vsel %vm649, %v1295, 0
      %v1319 = vsel %vm649, %v1296, 0
      %v1322 = vsel %vm649, %v1297, 0
      %v1325 = vsel %vm649, %v1298, 0
      %v1328 = vsel %vm649, %v1299, 0
      %v1331 = vsel %vm649, %v1300, 0
      %v1334 = vsel %vm649, %v1301, 0
      %v1337 = vsel %vm649, %v1302, 0
      %v1340 = vsel %vm649, %v1303, 0
      %v1343 = vsel %vm649, %v1304, 0
      %v1346 = vsel %vm649, %v1305, 0
      %v1349 = vsel %vm649, %v1306, 0
      %v1352 = vsel %vm649, %v1307, 0
      %v1355 = vsel %vm649, %v1308, 0
      %v1358 = vsel %vm649, %v1309, 0
      %v1361 = vsel %vm885, %v1311, 0
      %1363 = vmatprep.subr.bf16.mxu0 0
      %1364 = vmatpush1.bf16.msra.mxu0 0
      %1365 = vmatprep.subr.bf16.mxu0 0
      %1366 = vmatpush1.bf16.msra.mxu0 0
      %1367 = vmatprep.subr.bf16.mxu0 0
      %1368 = vmatpush1.bf16.msra.mxu0 0
      %1369 = vmatprep.subr.bf16.mxu0 0
      %1370 = vmatpush1.bf16.msra.mxu0 0
      %1371 = vmatprep.subr.bf16.mxu0 0
      %1372 = vmatpush1.bf16.msra.mxu0 0
      %1373 = vmatprep.subr.bf16.mxu0 0
      %1374 = vmatpush1.bf16.msra.mxu0 0
      %1375 = vmatprep.subr.bf16.mxu0 0
      %1376 = vmatpush1.bf16.msra.mxu0 0
      %1377 = vmatprep.subr.bf16.mxu0 0
      %1378 = vmatpush1.bf16.msra.mxu0 %v1361
      %1379 = vmatprep.subr.bf16.mxu0 0
      %1380 = vmatpush2.bf16.msra.mxu0 0
      %1381 = vmatprep.subr.bf16.mxu0 0
      %1382 = vmatpush2.bf16.msra.mxu0 0
      %1383 = vmatprep.subr.bf16.mxu0 0
      %1384 = vmatpush2.bf16.msra.mxu0 0
      %1385 = vmatprep.subr.bf16.mxu0 0
      %1386 = vmatpush2.bf16.msra.mxu0 0
      %1387 = vmatprep.subr.bf16.mxu0 0
      %1388 = vmatpush2.bf16.msra.mxu0 0
      %1389 = vmatprep.subr.bf16.mxu0 0
      %1390 = vmatpush2.bf16.msra.mxu0 0
      %1391 = vmatprep.subr.bf16.mxu0 0
      %1392 = vmatpush2.bf16.msra.mxu0 0
      %1393 = vmatprep.subr.bf16.mxu0 0
      %1394 = vmatpush2.bf16.msra.mxu0 0
      %1395 = vmatprep.mubr.bf16.mxu0 0
      %1396 = vmatmul.mubr.bf16.gmra.mxu0 %v1313
      %v1397 = vpop.f32.mrf.mxu0
      %v1398 = vadd.f32 0.0, %v1397
      %v1399 = vpop.f32.mrf.mxu0
      %v1400 = vpop.f32.mrf.mxu0
      %v1401 = vadd.f32 0.0, %v1400
      %v1402 = vpop.f32.mrf.mxu0
      %1403 = vmatprep.mubr.bf16.mxu0 0
      %1404 = vmatmul.mubr.bf16.gmra.mxu0 %v1316
      %v1405 = vpop.f32.mrf.mxu0
      %v1406 = vadd.f32 0.0, %v1405
      %v1407 = vpop.f32.mrf.mxu0
      %v1408 = vpop.f32.mrf.mxu0
      %v1409 = vadd.f32 0.0, %v1408
      %v1410 = vpop.f32.mrf.mxu0
      %1411 = vmatprep.mubr.bf16.mxu0 0
      %1412 = vmatmul.mubr.bf16.gmra.mxu0 %v1319
      %v1413 = vpop.f32.mrf.mxu0
      %v1414 = vadd.f32 0.0, %v1413
      %v1415 = vpop.f32.mrf.mxu0
      %v1416 = vpop.f32.mrf.mxu0
      %v1417 = vadd.f32 0.0, %v1416
      %v1418 = vpop.f32.mrf.mxu0
      %1419 = vmatprep.mubr.bf16.mxu0 0
      %1420 = vmatmul.mubr.bf16.gmra.mxu0 %v1322
      %v1421 = vpop.f32.mrf.mxu0
      %v1422 = vadd.f32 0.0, %v1421
      %v1423 = vpop.f32.mrf.mxu0
      %v1424 = vpop.f32.mrf.mxu0
      %v1425 = vadd.f32 0.0, %v1424
      %v1426 = vpop.f32.mrf.mxu0
      %1427 = vmatprep.mubr.bf16.mxu0 0
      %1428 = vmatmul.mubr.bf16.gmra.mxu0 %v1325
      %v1429 = vpop.f32.mrf.mxu0
      %v1430 = vadd.f32 0.0, %v1429
      %v1431 = vpop.f32.mrf.mxu0
      %v1432 = vpop.f32.mrf.mxu0
      %v1433 = vadd.f32 0.0, %v1432
      %v1434 = vpop.f32.mrf.mxu0
      %1435 = vmatprep.mubr.bf16.mxu0 0
      %1436 = vmatmul.mubr.bf16.gmra.mxu0 %v1328
      %v1437 = vpop.f32.mrf.mxu0
      %v1438 = vadd.f32 0.0, %v1437
      %v1439 = vpop.f32.mrf.mxu0
      %v1440 = vpop.f32.mrf.mxu0
      %v1441 = vadd.f32 0.0, %v1440
      %v1442 = vpop.f32.mrf.mxu0
      %1443 = vmatprep.mubr.bf16.mxu0 0
      %1444 = vmatmul.mubr.bf16.gmra.mxu0 %v1331
      %v1445 = vpop.f32.mrf.mxu0
      %v1446 = vadd.f32 0.0, %v1445
      %v1447 = vpop.f32.mrf.mxu0
      %v1448 = vpop.f32.mrf.mxu0
      %v1449 = vadd.f32 0.0, %v1448
      %v1450 = vpop.f32.mrf.mxu0
      %1451 = vmatprep.mubr.bf16.mxu0 0
      %1452 = vmatmul.mubr.bf16.gmra.mxu0 %v1334
      %v1453 = vpop.f32.mrf.mxu0
      %v1454 = vadd.f32 0.0, %v1453
      %v1455 = vpop.f32.mrf.mxu0
      %v1456 = vpop.f32.mrf.mxu0
      %v1457 = vadd.f32 0.0, %v1456
      %v1458 = vpop.f32.mrf.mxu0
      %1459 = vmatprep.mubr.bf16.mxu0 0
      %1460 = vmatmul.mubr.bf16.gmra.mxu0 %v1337
      %v1461 = vpop.f32.mrf.mxu0
      %v1462 = vadd.f32 0.0, %v1461
      %v1463 = vpop.f32.mrf.mxu0
      %v1464 = vpop.f32.mrf.mxu0
      %v1465 = vadd.f32 0.0, %v1464
      %v1466 = vpop.f32.mrf.mxu0
      %1467 = vmatprep.mubr.bf16.mxu0 0
      %1468 = vmatmul.mubr.bf16.gmra.mxu0 %v1340
      %v1469 = vpop.f32.mrf.mxu0
      %v1470 = vadd.f32 0.0, %v1469
      %v1471 = vpop.f32.mrf.mxu0
      %v1472 = vpop.f32.mrf.mxu0
      %v1473 = vadd.f32 0.0, %v1472
      %v1474 = vpop.f32.mrf.mxu0
      %1475 = vmatprep.mubr.bf16.mxu0 0
      %1476 = vmatmul.mubr.bf16.gmra.mxu0 %v1343
      %v1477 = vpop.f32.mrf.mxu0
      %v1478 = vadd.f32 0.0, %v1477
      %v1479 = vpop.f32.mrf.mxu0
      %v1480 = vpop.f32.mrf.mxu0
      %v1481 = vadd.f32 0.0, %v1480
      %v1482 = vpop.f32.mrf.mxu0
      %1483 = vmatprep.mubr.bf16.mxu0 0
      %1484 = vmatmul.mubr.bf16.gmra.mxu0 %v1346
      %v1485 = vpop.f32.mrf.mxu0
      %v1486 = vadd.f32 0.0, %v1485
      %v1487 = vpop.f32.mrf.mxu0
      %v1488 = vpop.f32.mrf.mxu0
      %v1489 = vadd.f32 0.0, %v1488
      %v1490 = vpop.f32.mrf.mxu0
      %1491 = vmatprep.mubr.bf16.mxu0 0
      %1492 = vmatmul.mubr.bf16.gmra.mxu0 %v1349
      %v1493 = vpop.f32.mrf.mxu0
      %v1494 = vadd.f32 0.0, %v1493
      %v1495 = vpop.f32.mrf.mxu0
      %v1496 = vpop.f32.mrf.mxu0
      %v1497 = vadd.f32 0.0, %v1496
      %v1498 = vpop.f32.mrf.mxu0
      %1499 = vmatprep.mubr.bf16.mxu0 0
      %1500 = vmatmul.mubr.bf16.gmra.mxu0 %v1352
      %v1501 = vpop.f32.mrf.mxu0
      %v1502 = vadd.f32 0.0, %v1501
      %v1503 = vpop.f32.mrf.mxu0
      %v1504 = vpop.f32.mrf.mxu0
      %v1505 = vadd.f32 0.0, %v1504
      %v1506 = vpop.f32.mrf.mxu0
      %1507 = vmatprep.mubr.bf16.mxu0 0
      %1508 = vmatmul.mubr.bf16.gmra.mxu0 %v1355
      %v1509 = vpop.f32.mrf.mxu0
      %v1510 = vadd.f32 0.0, %v1509
      %v1511 = vpop.f32.mrf.mxu0
      %v1512 = vpop.f32.mrf.mxu0
      %v1513 = vadd.f32 0.0, %v1512
      %v1514 = vpop.f32.mrf.mxu0
      %1515 = vmatprep.mubr.bf16.mxu0 0
      %1516 = vmatmul.mubr.bf16.gmra.mxu0 %v1358
      %v1517 = vpop.f32.mrf.mxu0
      %v1518 = vadd.f32 0.0, %v1517
      %v1519 = vpop.f32.mrf.mxu0
      %v1520 = vpop.f32.mrf.mxu0
      %v1521 = vadd.f32 0.0, %v1520
      %v1522 = vpop.f32.mrf.mxu0
      %1523 = vdwg.mxu0
      %v1524 = vadd.f32 %v1136, %v1398
      %v1525 = vadd.f32 %v1139, %v1401
      %v1526 = vadd.f32 %v1144, %v1406
      %v1527 = vadd.f32 %v1147, %v1409
      %v1528 = vadd.f32 %v1152, %v1414
      %v1529 = vadd.f32 %v1155, %v1417
      %v1530 = vadd.f32 %v1160, %v1422
      %v1531 = vadd.f32 %v1163, %v1425
      %v1532 = vadd.f32 %v1168, %v1430
      %v1533 = vadd.f32 %v1171, %v1433
      %v1534 = vadd.f32 %v1176, %v1438
      %v1535 = vadd.f32 %v1179, %v1441
      %v1536 = vadd.f32 %v1184, %v1446
      %v1537 = vadd.f32 %v1187, %v1449
      %v1538 = vadd.f32 %v1192, %v1454
      %v1539 = vadd.f32 %v1195, %v1457
      %v1540 = vadd.f32 %v1200, %v1462
      %v1541 = vadd.f32 %v1203, %v1465
      %v1542 = vadd.f32 %v1208, %v1470
      %v1543 = vadd.f32 %v1211, %v1473
      %v1544 = vadd.f32 %v1216, %v1478
      %v1545 = vadd.f32 %v1219, %v1481
      %v1546 = vadd.f32 %v1224, %v1486
      %v1547 = vadd.f32 %v1227, %v1489
      %v1548 = vadd.f32 %v1232, %v1494
      %v1549 = vadd.f32 %v1235, %v1497
      %v1550 = vadd.f32 %v1240, %v1502
      %v1551 = vadd.f32 %v1243, %v1505
      %v1552 = vadd.f32 %v1248, %v1510
      %v1553 = vadd.f32 %v1251, %v1513
      %v1554 = vadd.f32 %v1256, %v1518
      %v1555 = vadd.f32 %v1259, %v1521
      %v1556 = vld [vmem:[%s705] sm:$0xff]
      %v1557 = vld [vmem:[%s705 + $0x8] sm:$0xff]
      %v1558 = vld [vmem:[%s705 + $0x18] sm:$0xff]
      %v1559 = vld [vmem:[%s705 + $0x20] sm:$0xff]
      %v1560 = vld [vmem:[%s705 + $0x30] sm:$0xff]
      %v1561 = vld [vmem:[%s705 + $0x38] sm:$0xff]
      %v1562 = vld [vmem:[%s705 + $0x48] sm:$0xff]
      %v1563 = vld [vmem:[%s705 + $0x50] sm:$0xff]
      %v1564 = vld [vmem:[%s705 + $0x60] sm:$0xff]
      %v1565 = vld [vmem:[%s705 + $0x68] sm:$0xff]
      %v1566 = vld [vmem:[%s705 + $0x78] sm:$0xff]
      %v1567 = vld [vmem:[%s705 + $0x80] sm:$0xff]
      %v1568 = vld [vmem:[%s705 + $0x90] sm:$0xff]
      %v1569 = vld [vmem:[%s705 + $0x98] sm:$0xff]
      %v1570 = vld [vmem:[%s705 + $0xa8] sm:$0xff]
      %v1571 = vld [vmem:[%s705 + $0xb0] sm:$0xff]
      %v1572 = vld [vmem:[%s705 + $0xc0] sm:$0xff]
      %v1573 = vld [vmem:[%s705 + $0xc8] sm:$0xff]
      %v1574 = vld [vmem:[%s705 + $0xd8] sm:$0xff]
      %v1575 = vld [vmem:[%s705 + $0xe0] sm:$0xff]
      %v1576 = vld [vmem:[%s705 + $0xf0] sm:$0xff]
      %v1577 = vld [vmem:[%s705 + $0xf8] sm:$0xff]
      %v1578 = vld [vmem:[%s705 + $0x108] sm:$0xff]
      %v1579 = vld [vmem:[%s705 + $0x110] sm:$0xff]
      %v1580 = vld [vmem:[%s705 + $0x120] sm:$0xff]
      %v1581 = vld [vmem:[%s705 + $0x128] sm:$0xff]
      %v1582 = vld [vmem:[%s705 + $0x138] sm:$0xff]
      %v1583 = vld [vmem:[%s705 + $0x140] sm:$0xff]
      %v1584 = vld [vmem:[%s705 + $0x150] sm:$0xff]
      %v1585 = vld [vmem:[%s705 + $0x158] sm:$0xff]
      %v1586 = vld [vmem:[%s705 + $0x168] sm:$0xff]
      %v1587 = vld [vmem:[%s705 + $0x170] sm:$0xff]
      %v1588 = vpack.c.bf16 %v1557, %v1556
      %v1589 = vpack.c.bf16 %v1559, %v1558
      %v1590 = vpack.c.bf16 %v1561, %v1560
      %v1591 = vpack.c.bf16 %v1563, %v1562
      %v1592 = vpack.c.bf16 %v1565, %v1564
      %v1593 = vpack.c.bf16 %v1567, %v1566
      %v1594 = vpack.c.bf16 %v1569, %v1568
      %v1595 = vpack.c.bf16 %v1571, %v1570
      %v1596 = vpack.c.bf16 %v1573, %v1572
      %v1597 = vpack.c.bf16 %v1575, %v1574
      %v1598 = vpack.c.bf16 %v1577, %v1576
      %v1599 = vpack.c.bf16 %v1579, %v1578
      %v1600 = vpack.c.bf16 %v1581, %v1580
      %v1601 = vpack.c.bf16 %v1583, %v1582
      %v1602 = vpack.c.bf16 %v1585, %v1584
      %v1603 = vpack.c.bf16 %v1587, %v1586
      %s1604 = scalar_lea.vmem %s3, 6
      %v1605 = vld [vmem:[%s1604] sm:$0x3]
      %v1607 = vsel %vm649, %v1588, 0
      %v1610 = vsel %vm649, %v1589, 0
      %v1613 = vsel %vm649, %v1590, 0
      %v1616 = vsel %vm649, %v1591, 0
      %v1619 = vsel %vm649, %v1592, 0
      %v1622 = vsel %vm649, %v1593, 0
      %v1625 = vsel %vm649, %v1594, 0
      %v1628 = vsel %vm649, %v1595, 0
      %v1631 = vsel %vm649, %v1596, 0
      %v1634 = vsel %vm649, %v1597, 0
      %v1637 = vsel %vm649, %v1598, 0
      %v1640 = vsel %vm649, %v1599, 0
      %v1643 = vsel %vm649, %v1600, 0
      %v1646 = vsel %vm649, %v1601, 0
      %v1649 = vsel %vm649, %v1602, 0
      %v1652 = vsel %vm649, %v1603, 0
      %v1655 = vsel %vm885, %v1605, 0
      %1657 = vmatprep.subr.bf16.mxu0 0
      %1658 = vmatpush1.bf16.msra.mxu0 0
      %1659 = vmatprep.subr.bf16.mxu0 0
      %1660 = vmatpush1.bf16.msra.mxu0 0
      %1661 = vmatprep.subr.bf16.mxu0 0
      %1662 = vmatpush1.bf16.msra.mxu0 0
      %1663 = vmatprep.subr.bf16.mxu0 0
      %1664 = vmatpush1.bf16.msra.mxu0 0
      %1665 = vmatprep.subr.bf16.mxu0 0
      %1666 = vmatpush1.bf16.msra.mxu0 0
      %1667 = vmatprep.subr.bf16.mxu0 0
      %1668 = vmatpush1.bf16.msra.mxu0 0
      %1669 = vmatprep.subr.bf16.mxu0 0
      %1670 = vmatpush1.bf16.msra.mxu0 0
      %1671 = vmatprep.subr.bf16.mxu0 0
      %1672 = vmatpush1.bf16.msra.mxu0 %v1655
      %1673 = vmatprep.subr.bf16.mxu0 0
      %1674 = vmatpush2.bf16.msra.mxu0 0
      %1675 = vmatprep.subr.bf16.mxu0 0
      %1676 = vmatpush2.bf16.msra.mxu0 0
      %1677 = vmatprep.subr.bf16.mxu0 0
      %1678 = vmatpush2.bf16.msra.mxu0 0
      %1679 = vmatprep.subr.bf16.mxu0 0
      %1680 = vmatpush2.bf16.msra.mxu0 0
      %1681 = vmatprep.subr.bf16.mxu0 0
      %1682 = vmatpush2.bf16.msra.mxu0 0
      %1683 = vmatprep.subr.bf16.mxu0 0
      %1684 = vmatpush2.bf16.msra.mxu0 0
      %1685 = vmatprep.subr.bf16.mxu0 0
      %1686 = vmatpush2.bf16.msra.mxu0 0
      %1687 = vmatprep.subr.bf16.mxu0 0
      %1688 = vmatpush2.bf16.msra.mxu0 0
      %1689 = vmatprep.mubr.bf16.mxu0 0
      %1690 = vmatmul.mubr.bf16.gmra.mxu0 %v1607
      %v1691 = vpop.f32.mrf.mxu0
      %v1692 = vadd.f32 0.0, %v1691
      %v1693 = vpop.f32.mrf.mxu0
      %v1694 = vpop.f32.mrf.mxu0
      %v1695 = vadd.f32 0.0, %v1694
      %v1696 = vpop.f32.mrf.mxu0
      %1697 = vmatprep.mubr.bf16.mxu0 0
      %1698 = vmatmul.mubr.bf16.gmra.mxu0 %v1610
      %v1699 = vpop.f32.mrf.mxu0
      %v1700 = vadd.f32 0.0, %v1699
      %v1701 = vpop.f32.mrf.mxu0
      %v1702 = vpop.f32.mrf.mxu0
      %v1703 = vadd.f32 0.0, %v1702
      %v1704 = vpop.f32.mrf.mxu0
      %1705 = vmatprep.mubr.bf16.mxu0 0
      %1706 = vmatmul.mubr.bf16.gmra.mxu0 %v1613
      %v1707 = vpop.f32.mrf.mxu0
      %v1708 = vadd.f32 0.0, %v1707
      %v1709 = vpop.f32.mrf.mxu0
      %v1710 = vpop.f32.mrf.mxu0
      %v1711 = vadd.f32 0.0, %v1710
      %v1712 = vpop.f32.mrf.mxu0
      %1713 = vmatprep.mubr.bf16.mxu0 0
      %1714 = vmatmul.mubr.bf16.gmra.mxu0 %v1616
      %v1715 = vpop.f32.mrf.mxu0
      %v1716 = vadd.f32 0.0, %v1715
      %v1717 = vpop.f32.mrf.mxu0
      %v1718 = vpop.f32.mrf.mxu0
      %v1719 = vadd.f32 0.0, %v1718
      %v1720 = vpop.f32.mrf.mxu0
      %1721 = vmatprep.mubr.bf16.mxu0 0
      %1722 = vmatmul.mubr.bf16.gmra.mxu0 %v1619
      %v1723 = vpop.f32.mrf.mxu0
      %v1724 = vadd.f32 0.0, %v1723
      %v1725 = vpop.f32.mrf.mxu0
      %v1726 = vpop.f32.mrf.mxu0
      %v1727 = vadd.f32 0.0, %v1726
      %v1728 = vpop.f32.mrf.mxu0
      %1729 = vmatprep.mubr.bf16.mxu0 0
      %1730 = vmatmul.mubr.bf16.gmra.mxu0 %v1622
      %v1731 = vpop.f32.mrf.mxu0
      %v1732 = vadd.f32 0.0, %v1731
      %v1733 = vpop.f32.mrf.mxu0
      %v1734 = vpop.f32.mrf.mxu0
      %v1735 = vadd.f32 0.0, %v1734
      %v1736 = vpop.f32.mrf.mxu0
      %1737 = vmatprep.mubr.bf16.mxu0 0
      %1738 = vmatmul.mubr.bf16.gmra.mxu0 %v1625
      %v1739 = vpop.f32.mrf.mxu0
      %v1740 = vadd.f32 0.0, %v1739
      %v1741 = vpop.f32.mrf.mxu0
      %v1742 = vpop.f32.mrf.mxu0
      %v1743 = vadd.f32 0.0, %v1742
      %v1744 = vpop.f32.mrf.mxu0
      %1745 = vmatprep.mubr.bf16.mxu0 0
      %1746 = vmatmul.mubr.bf16.gmra.mxu0 %v1628
      %v1747 = vpop.f32.mrf.mxu0
      %v1748 = vadd.f32 0.0, %v1747
      %v1749 = vpop.f32.mrf.mxu0
      %v1750 = vpop.f32.mrf.mxu0
      %v1751 = vadd.f32 0.0, %v1750
      %v1752 = vpop.f32.mrf.mxu0
      %1753 = vmatprep.mubr.bf16.mxu0 0
      %1754 = vmatmul.mubr.bf16.gmra.mxu0 %v1631
      %v1755 = vpop.f32.mrf.mxu0
      %v1756 = vadd.f32 0.0, %v1755
      %v1757 = vpop.f32.mrf.mxu0
      %v1758 = vpop.f32.mrf.mxu0
      %v1759 = vadd.f32 0.0, %v1758
      %v1760 = vpop.f32.mrf.mxu0
      %1761 = vmatprep.mubr.bf16.mxu0 0
      %1762 = vmatmul.mubr.bf16.gmra.mxu0 %v1634
      %v1763 = vpop.f32.mrf.mxu0
      %v1764 = vadd.f32 0.0, %v1763
      %v1765 = vpop.f32.mrf.mxu0
      %v1766 = vpop.f32.mrf.mxu0
      %v1767 = vadd.f32 0.0, %v1766
      %v1768 = vpop.f32.mrf.mxu0
      %1769 = vmatprep.mubr.bf16.mxu0 0
      %1770 = vmatmul.mubr.bf16.gmra.mxu0 %v1637
      %v1771 = vpop.f32.mrf.mxu0
      %v1772 = vadd.f32 0.0, %v1771
      %v1773 = vpop.f32.mrf.mxu0
      %v1774 = vpop.f32.mrf.mxu0
      %v1775 = vadd.f32 0.0, %v1774
      %v1776 = vpop.f32.mrf.mxu0
      %1777 = vmatprep.mubr.bf16.mxu0 0
      %1778 = vmatmul.mubr.bf16.gmra.mxu0 %v1640
      %v1779 = vpop.f32.mrf.mxu0
      %v1780 = vadd.f32 0.0, %v1779
      %v1781 = vpop.f32.mrf.mxu0
      %v1782 = vpop.f32.mrf.mxu0
      %v1783 = vadd.f32 0.0, %v1782
      %v1784 = vpop.f32.mrf.mxu0
      %1785 = vmatprep.mubr.bf16.mxu0 0
      %1786 = vmatmul.mubr.bf16.gmra.mxu0 %v1643
      %v1787 = vpop.f32.mrf.mxu0
      %v1788 = vadd.f32 0.0, %v1787
      %v1789 = vpop.f32.mrf.mxu0
      %v1790 = vpop.f32.mrf.mxu0
      %v1791 = vadd.f32 0.0, %v1790
      %v1792 = vpop.f32.mrf.mxu0
      %1793 = vmatprep.mubr.bf16.mxu0 0
      %1794 = vmatmul.mubr.bf16.gmra.mxu0 %v1646
      %v1795 = vpop.f32.mrf.mxu0
      %v1796 = vadd.f32 0.0, %v1795
      %v1797 = vpop.f32.mrf.mxu0
      %v1798 = vpop.f32.mrf.mxu0
      %v1799 = vadd.f32 0.0, %v1798
      %v1800 = vpop.f32.mrf.mxu0
      %1801 = vmatprep.mubr.bf16.mxu0 0
      %1802 = vmatmul.mubr.bf16.gmra.mxu0 %v1649
      %v1803 = vpop.f32.mrf.mxu0
      %v1804 = vadd.f32 0.0, %v1803
      %v1805 = vpop.f32.mrf.mxu0
      %v1806 = vpop.f32.mrf.mxu0
      %v1807 = vadd.f32 0.0, %v1806
      %v1808 = vpop.f32.mrf.mxu0
      %1809 = vmatprep.mubr.bf16.mxu0 0
      %1810 = vmatmul.mubr.bf16.gmra.mxu0 %v1652
      %v1811 = vpop.f32.mrf.mxu0
      %v1812 = vadd.f32 0.0, %v1811
      %v1813 = vpop.f32.mrf.mxu0
      %v1814 = vpop.f32.mrf.mxu0
      %v1815 = vadd.f32 0.0, %v1814
      %v1816 = vpop.f32.mrf.mxu0
      %1817 = vdwg.mxu0
      %v1818 = vadd.f32 %v1524, %v1692
      %v1819 = vadd.f32 %v1525, %v1695
      %v1820 = vadd.f32 %v1526, %v1700
      %v1821 = vadd.f32 %v1527, %v1703
      %v1822 = vadd.f32 %v1528, %v1708
      %v1823 = vadd.f32 %v1529, %v1711
      %v1824 = vadd.f32 %v1530, %v1716
      %v1825 = vadd.f32 %v1531, %v1719
      %v1826 = vadd.f32 %v1532, %v1724
      %v1827 = vadd.f32 %v1533, %v1727
      %v1828 = vadd.f32 %v1534, %v1732
      %v1829 = vadd.f32 %v1535, %v1735
      %v1830 = vadd.f32 %v1536, %v1740
      %v1831 = vadd.f32 %v1537, %v1743
      %v1832 = vadd.f32 %v1538, %v1748
      %v1833 = vadd.f32 %v1539, %v1751
      %v1834 = vadd.f32 %v1540, %v1756
      %v1835 = vadd.f32 %v1541, %v1759
      %v1836 = vadd.f32 %v1542, %v1764
      %v1837 = vadd.f32 %v1543, %v1767
      %v1838 = vadd.f32 %v1544, %v1772
      %v1839 = vadd.f32 %v1545, %v1775
      %v1840 = vadd.f32 %v1546, %v1780
      %v1841 = vadd.f32 %v1547, %v1783
      %v1842 = vadd.f32 %v1548, %v1788
      %v1843 = vadd.f32 %v1549, %v1791
      %v1844 = vadd.f32 %v1550, %v1796
      %v1845 = vadd.f32 %v1551, %v1799
      %v1846 = vadd.f32 %v1552, %v1804
      %v1847 = vadd.f32 %v1553, %v1807
      %v1848 = vadd.f32 %v1554, %v1812
      %v1849 = vadd.f32 %v1555, %v1815
      %v1850 = vld [vmem:[%s705 + $0x1] sm:$0xff]
      %v1851 = vld [vmem:[%s705 + $0x9] sm:$0xff]
      %v1852 = vld [vmem:[%s705 + $0x19] sm:$0xff]
      %v1853 = vld [vmem:[%s705 + $0x21] sm:$0xff]
      %v1854 = vld [vmem:[%s705 + $0x31] sm:$0xff]
      %v1855 = vld [vmem:[%s705 + $0x39] sm:$0xff]
      %v1856 = vld [vmem:[%s705 + $0x49] sm:$0xff]
      %v1857 = vld [vmem:[%s705 + $0x51] sm:$0xff]
      %v1858 = vld [vmem:[%s705 + $0x61] sm:$0xff]
      %v1859 = vld [vmem:[%s705 + $0x69] sm:$0xff]
      %v1860 = vld [vmem:[%s705 + $0x79] sm:$0xff]
      %v1861 = vld [vmem:[%s705 + $0x81] sm:$0xff]
      %v1862 = vld [vmem:[%s705 + $0x91] sm:$0xff]
      %v1863 = vld [vmem:[%s705 + $0x99] sm:$0xff]
      %v1864 = vld [vmem:[%s705 + $0xa9] sm:$0xff]
      %v1865 = vld [vmem:[%s705 + $0xb1] sm:$0xff]
      %v1866 = vld [vmem:[%s705 + $0xc1] sm:$0xff]
      %v1867 = vld [vmem:[%s705 + $0xc9] sm:$0xff]
      %v1868 = vld [vmem:[%s705 + $0xd9] sm:$0xff]
      %v1869 = vld [vmem:[%s705 + $0xe1] sm:$0xff]
      %v1870 = vld [vmem:[%s705 + $0xf1] sm:$0xff]
      %v1871 = vld [vmem:[%s705 + $0xf9] sm:$0xff]
      %v1872 = vld [vmem:[%s705 + $0x109] sm:$0xff]
      %v1873 = vld [vmem:[%s705 + $0x111] sm:$0xff]
      %v1874 = vld [vmem:[%s705 + $0x121] sm:$0xff]
      %v1875 = vld [vmem:[%s705 + $0x129] sm:$0xff]
      %v1876 = vld [vmem:[%s705 + $0x139] sm:$0xff]
      %v1877 = vld [vmem:[%s705 + $0x141] sm:$0xff]
      %v1878 = vld [vmem:[%s705 + $0x151] sm:$0xff]
      %v1879 = vld [vmem:[%s705 + $0x159] sm:$0xff]
      %v1880 = vld [vmem:[%s705 + $0x169] sm:$0xff]
      %v1881 = vld [vmem:[%s705 + $0x171] sm:$0xff]
      %v1882 = vpack.c.bf16 %v1851, %v1850
      %v1883 = vpack.c.bf16 %v1853, %v1852
      %v1884 = vpack.c.bf16 %v1855, %v1854
      %v1885 = vpack.c.bf16 %v1857, %v1856
      %v1886 = vpack.c.bf16 %v1859, %v1858
      %v1887 = vpack.c.bf16 %v1861, %v1860
      %v1888 = vpack.c.bf16 %v1863, %v1862
      %v1889 = vpack.c.bf16 %v1865, %v1864
      %v1890 = vpack.c.bf16 %v1867, %v1866
      %v1891 = vpack.c.bf16 %v1869, %v1868
      %v1892 = vpack.c.bf16 %v1871, %v1870
      %v1893 = vpack.c.bf16 %v1873, %v1872
      %v1894 = vpack.c.bf16 %v1875, %v1874
      %v1895 = vpack.c.bf16 %v1877, %v1876
      %v1896 = vpack.c.bf16 %v1879, %v1878
      %v1897 = vpack.c.bf16 %v1881, %v1880
      %s1898 = scalar_lea.vmem %s3, 8
      %v1899 = vld [vmem:[%s1898] sm:$0x3]
      %v1901 = vsel %vm649, %v1882, 0
      %v1904 = vsel %vm649, %v1883, 0
      %v1907 = vsel %vm649, %v1884, 0
      %v1910 = vsel %vm649, %v1885, 0
      %v1913 = vsel %vm649, %v1886, 0
      %v1916 = vsel %vm649, %v1887, 0
      %v1919 = vsel %vm649, %v1888, 0
      %v1922 = vsel %vm649, %v1889, 0
      %v1925 = vsel %vm649, %v1890, 0
      %v1928 = vsel %vm649, %v1891, 0
      %v1931 = vsel %vm649, %v1892, 0
      %v1934 = vsel %vm649, %v1893, 0
      %v1937 = vsel %vm649, %v1894, 0
      %v1940 = vsel %vm649, %v1895, 0
      %v1943 = vsel %vm649, %v1896, 0
      %v1946 = vsel %vm649, %v1897, 0
      %v1949 = vsel %vm885, %v1899, 0
      %1951 = vmatprep.subr.bf16.mxu0 0
      %1952 = vmatpush1.bf16.msra.mxu0 0
      %1953 = vmatprep.subr.bf16.mxu0 0
      %1954 = vmatpush1.bf16.msra.mxu0 0
      %1955 = vmatprep.subr.bf16.mxu0 0
      %1956 = vmatpush1.bf16.msra.mxu0 0
      %1957 = vmatprep.subr.bf16.mxu0 0
      %1958 = vmatpush1.bf16.msra.mxu0 0
      %1959 = vmatprep.subr.bf16.mxu0 0
      %1960 = vmatpush1.bf16.msra.mxu0 0
      %1961 = vmatprep.subr.bf16.mxu0 0
      %1962 = vmatpush1.bf16.msra.mxu0 0
      %1963 = vmatprep.subr.bf16.mxu0 0
      %1964 = vmatpush1.bf16.msra.mxu0 0
      %1965 = vmatprep.subr.bf16.mxu0 0
      %1966 = vmatpush1.bf16.msra.mxu0 %v1949
      %1967 = vmatprep.subr.bf16.mxu0 0
      %1968 = vmatpush2.bf16.msra.mxu0 0
      %1969 = vmatprep.subr.bf16.mxu0 0
      %1970 = vmatpush2.bf16.msra.mxu0 0
      %1971 = vmatprep.subr.bf16.mxu0 0
      %1972 = vmatpush2.bf16.msra.mxu0 0
      %1973 = vmatprep.subr.bf16.mxu0 0
      %1974 = vmatpush2.bf16.msra.mxu0 0
      %1975 = vmatprep.subr.bf16.mxu0 0
      %1976 = vmatpush2.bf16.msra.mxu0 0
      %1977 = vmatprep.subr.bf16.mxu0 0
      %1978 = vmatpush2.bf16.msra.mxu0 0
      %1979 = vmatprep.subr.bf16.mxu0 0
      %1980 = vmatpush2.bf16.msra.mxu0 0
      %1981 = vmatprep.subr.bf16.mxu0 0
      %1982 = vmatpush2.bf16.msra.mxu0 0
      %1983 = vmatprep.mubr.bf16.mxu0 0
      %1984 = vmatmul.mubr.bf16.gmra.mxu0 %v1901
      %v1985 = vpop.f32.mrf.mxu0
      %v1986 = vadd.f32 0.0, %v1985
      %v1987 = vpop.f32.mrf.mxu0
      %v1988 = vpop.f32.mrf.mxu0
      %v1989 = vadd.f32 0.0, %v1988
      %v1990 = vpop.f32.mrf.mxu0
      %1991 = vmatprep.mubr.bf16.mxu0 0
      %1992 = vmatmul.mubr.bf16.gmra.mxu0 %v1904
      %v1993 = vpop.f32.mrf.mxu0
      %v1994 = vadd.f32 0.0, %v1993
      %v1995 = vpop.f32.mrf.mxu0
      %v1996 = vpop.f32.mrf.mxu0
      %v1997 = vadd.f32 0.0, %v1996
      %v1998 = vpop.f32.mrf.mxu0
      %1999 = vmatprep.mubr.bf16.mxu0 0
      %2000 = vmatmul.mubr.bf16.gmra.mxu0 %v1907
      %v2001 = vpop.f32.mrf.mxu0
      %v2002 = vadd.f32 0.0, %v2001
      %v2003 = vpop.f32.mrf.mxu0
      %v2004 = vpop.f32.mrf.mxu0
      %v2005 = vadd.f32 0.0, %v2004
      %v2006 = vpop.f32.mrf.mxu0
      %2007 = vmatprep.mubr.bf16.mxu0 0
      %2008 = vmatmul.mubr.bf16.gmra.mxu0 %v1910
      %v2009 = vpop.f32.mrf.mxu0
      %v2010 = vadd.f32 0.0, %v2009
      %v2011 = vpop.f32.mrf.mxu0
      %v2012 = vpop.f32.mrf.mxu0
      %v2013 = vadd.f32 0.0, %v2012
      %v2014 = vpop.f32.mrf.mxu0
      %2015 = vmatprep.mubr.bf16.mxu0 0
      %2016 = vmatmul.mubr.bf16.gmra.mxu0 %v1913
      %v2017 = vpop.f32.mrf.mxu0
      %v2018 = vadd.f32 0.0, %v2017
      %v2019 = vpop.f32.mrf.mxu0
      %v2020 = vpop.f32.mrf.mxu0
      %v2021 = vadd.f32 0.0, %v2020
      %v2022 = vpop.f32.mrf.mxu0
      %2023 = vmatprep.mubr.bf16.mxu0 0
      %2024 = vmatmul.mubr.bf16.gmra.mxu0 %v1916
      %v2025 = vpop.f32.mrf.mxu0
      %v2026 = vadd.f32 0.0, %v2025
      %v2027 = vpop.f32.mrf.mxu0
      %v2028 = vpop.f32.mrf.mxu0
      %v2029 = vadd.f32 0.0, %v2028
      %v2030 = vpop.f32.mrf.mxu0
      %2031 = vmatprep.mubr.bf16.mxu0 0
      %2032 = vmatmul.mubr.bf16.gmra.mxu0 %v1919
      %v2033 = vpop.f32.mrf.mxu0
      %v2034 = vadd.f32 0.0, %v2033
      %v2035 = vpop.f32.mrf.mxu0
      %v2036 = vpop.f32.mrf.mxu0
      %v2037 = vadd.f32 0.0, %v2036
      %v2038 = vpop.f32.mrf.mxu0
      %2039 = vmatprep.mubr.bf16.mxu0 0
      %2040 = vmatmul.mubr.bf16.gmra.mxu0 %v1922
      %v2041 = vpop.f32.mrf.mxu0
      %v2042 = vadd.f32 0.0, %v2041
      %v2043 = vpop.f32.mrf.mxu0
      %v2044 = vpop.f32.mrf.mxu0
      %v2045 = vadd.f32 0.0, %v2044
      %v2046 = vpop.f32.mrf.mxu0
      %2047 = vmatprep.mubr.bf16.mxu0 0
      %2048 = vmatmul.mubr.bf16.gmra.mxu0 %v1925
      %v2049 = vpop.f32.mrf.mxu0
      %v2050 = vadd.f32 0.0, %v2049
      %v2051 = vpop.f32.mrf.mxu0
      %v2052 = vpop.f32.mrf.mxu0
      %v2053 = vadd.f32 0.0, %v2052
      %v2054 = vpop.f32.mrf.mxu0
      %2055 = vmatprep.mubr.bf16.mxu0 0
      %2056 = vmatmul.mubr.bf16.gmra.mxu0 %v1928
      %v2057 = vpop.f32.mrf.mxu0
      %v2058 = vadd.f32 0.0, %v2057
      %v2059 = vpop.f32.mrf.mxu0
      %v2060 = vpop.f32.mrf.mxu0
      %v2061 = vadd.f32 0.0, %v2060
      %v2062 = vpop.f32.mrf.mxu0
      %2063 = vmatprep.mubr.bf16.mxu0 0
      %2064 = vmatmul.mubr.bf16.gmra.mxu0 %v1931
      %v2065 = vpop.f32.mrf.mxu0
      %v2066 = vadd.f32 0.0, %v2065
      %v2067 = vpop.f32.mrf.mxu0
      %v2068 = vpop.f32.mrf.mxu0
      %v2069 = vadd.f32 0.0, %v2068
      %v2070 = vpop.f32.mrf.mxu0
      %2071 = vmatprep.mubr.bf16.mxu0 0
      %2072 = vmatmul.mubr.bf16.gmra.mxu0 %v1934
      %v2073 = vpop.f32.mrf.mxu0
      %v2074 = vadd.f32 0.0, %v2073
      %v2075 = vpop.f32.mrf.mxu0
      %v2076 = vpop.f32.mrf.mxu0
      %v2077 = vadd.f32 0.0, %v2076
      %v2078 = vpop.f32.mrf.mxu0
      %2079 = vmatprep.mubr.bf16.mxu0 0
      %2080 = vmatmul.mubr.bf16.gmra.mxu0 %v1937
      %v2081 = vpop.f32.mrf.mxu0
      %v2082 = vadd.f32 0.0, %v2081
      %v2083 = vpop.f32.mrf.mxu0
      %v2084 = vpop.f32.mrf.mxu0
      %v2085 = vadd.f32 0.0, %v2084
      %v2086 = vpop.f32.mrf.mxu0
      %2087 = vmatprep.mubr.bf16.mxu0 0
      %2088 = vmatmul.mubr.bf16.gmra.mxu0 %v1940
      %v2089 = vpop.f32.mrf.mxu0
      %v2090 = vadd.f32 0.0, %v2089
      %v2091 = vpop.f32.mrf.mxu0
      %v2092 = vpop.f32.mrf.mxu0
      %v2093 = vadd.f32 0.0, %v2092
      %v2094 = vpop.f32.mrf.mxu0
      %2095 = vmatprep.mubr.bf16.mxu0 0
      %2096 = vmatmul.mubr.bf16.gmra.mxu0 %v1943
      %v2097 = vpop.f32.mrf.mxu0
      %v2098 = vadd.f32 0.0, %v2097
      %v2099 = vpop.f32.mrf.mxu0
      %v2100 = vpop.f32.mrf.mxu0
      %v2101 = vadd.f32 0.0, %v2100
      %v2102 = vpop.f32.mrf.mxu0
      %2103 = vmatprep.mubr.bf16.mxu0 0
      %2104 = vmatmul.mubr.bf16.gmra.mxu0 %v1946
      %v2105 = vpop.f32.mrf.mxu0
      %v2106 = vadd.f32 0.0, %v2105
      %v2107 = vpop.f32.mrf.mxu0
      %v2108 = vpop.f32.mrf.mxu0
      %v2109 = vadd.f32 0.0, %v2108
      %v2110 = vpop.f32.mrf.mxu0
      %2111 = vdwg.mxu0
      %v2112 = vadd.f32 %v1818, %v1986
      %v2113 = vadd.f32 %v1819, %v1989
      %v2114 = vadd.f32 %v1820, %v1994
      %v2115 = vadd.f32 %v1821, %v1997
      %v2116 = vadd.f32 %v1822, %v2002
      %v2117 = vadd.f32 %v1823, %v2005
      %v2118 = vadd.f32 %v1824, %v2010
      %v2119 = vadd.f32 %v1825, %v2013
      %v2120 = vadd.f32 %v1826, %v2018
      %v2121 = vadd.f32 %v1827, %v2021
      %v2122 = vadd.f32 %v1828, %v2026
      %v2123 = vadd.f32 %v1829, %v2029
      %v2124 = vadd.f32 %v1830, %v2034
      %v2125 = vadd.f32 %v1831, %v2037
      %v2126 = vadd.f32 %v1832, %v2042
      %v2127 = vadd.f32 %v1833, %v2045
      %v2128 = vadd.f32 %v1834, %v2050
      %v2129 = vadd.f32 %v1835, %v2053
      %v2130 = vadd.f32 %v1836, %v2058
      %v2131 = vadd.f32 %v1837, %v2061
      %v2132 = vadd.f32 %v1838, %v2066
      %v2133 = vadd.f32 %v1839, %v2069
      %v2134 = vadd.f32 %v1840, %v2074
      %v2135 = vadd.f32 %v1841, %v2077
      %v2136 = vadd.f32 %v1842, %v2082
      %v2137 = vadd.f32 %v1843, %v2085
      %v2138 = vadd.f32 %v1844, %v2090
      %v2139 = vadd.f32 %v1845, %v2093
      %v2140 = vadd.f32 %v1846, %v2098
      %v2141 = vadd.f32 %v1847, %v2101
      %v2142 = vadd.f32 %v1848, %v2106
      %v2143 = vadd.f32 %v1849, %v2109
      %v2144 = vld [vmem:[%s705 + $0x2] sm:$0xff]
      %v2145 = vld [vmem:[%s705 + $0xa] sm:$0xff]
      %v2146 = vld [vmem:[%s705 + $0x1a] sm:$0xff]
      %v2147 = vld [vmem:[%s705 + $0x22] sm:$0xff]
      %v2148 = vld [vmem:[%s705 + $0x32] sm:$0xff]
      %v2149 = vld [vmem:[%s705 + $0x3a] sm:$0xff]
      %v2150 = vld [vmem:[%s705 + $0x4a] sm:$0xff]
      %v2151 = vld [vmem:[%s705 + $0x52] sm:$0xff]
      %v2152 = vld [vmem:[%s705 + $0x62] sm:$0xff]
      %v2153 = vld [vmem:[%s705 + $0x6a] sm:$0xff]
      %v2154 = vld [vmem:[%s705 + $0x7a] sm:$0xff]
      %v2155 = vld [vmem:[%s705 + $0x82] sm:$0xff]
      %v2156 = vld [vmem:[%s705 + $0x92] sm:$0xff]
      %v2157 = vld [vmem:[%s705 + $0x9a] sm:$0xff]
      %v2158 = vld [vmem:[%s705 + $0xaa] sm:$0xff]
      %v2159 = vld [vmem:[%s705 + $0xb2] sm:$0xff]
      %v2160 = vld [vmem:[%s705 + $0xc2] sm:$0xff]
      %v2161 = vld [vmem:[%s705 + $0xca] sm:$0xff]
      %v2162 = vld [vmem:[%s705 + $0xda] sm:$0xff]
      %v2163 = vld [vmem:[%s705 + $0xe2] sm:$0xff]
      %v2164 = vld [vmem:[%s705 + $0xf2] sm:$0xff]
      %v2165 = vld [vmem:[%s705 + $0xfa] sm:$0xff]
      %v2166 = vld [vmem:[%s705 + $0x10a] sm:$0xff]
      %v2167 = vld [vmem:[%s705 + $0x112] sm:$0xff]
      %v2168 = vld [vmem:[%s705 + $0x122] sm:$0xff]
      %v2169 = vld [vmem:[%s705 + $0x12a] sm:$0xff]
      %v2170 = vld [vmem:[%s705 + $0x13a] sm:$0xff]
      %v2171 = vld [vmem:[%s705 + $0x142] sm:$0xff]
      %v2172 = vld [vmem:[%s705 + $0x152] sm:$0xff]
      %v2173 = vld [vmem:[%s705 + $0x15a] sm:$0xff]
      %v2174 = vld [vmem:[%s705 + $0x16a] sm:$0xff]
      %v2175 = vld [vmem:[%s705 + $0x172] sm:$0xff]
      %v2176 = vpack.c.bf16 %v2145, %v2144
      %v2177 = vpack.c.bf16 %v2147, %v2146
      %v2178 = vpack.c.bf16 %v2149, %v2148
      %v2179 = vpack.c.bf16 %v2151, %v2150
      %v2180 = vpack.c.bf16 %v2153, %v2152
      %v2181 = vpack.c.bf16 %v2155, %v2154
      %v2182 = vpack.c.bf16 %v2157, %v2156
      %v2183 = vpack.c.bf16 %v2159, %v2158
      %v2184 = vpack.c.bf16 %v2161, %v2160
      %v2185 = vpack.c.bf16 %v2163, %v2162
      %v2186 = vpack.c.bf16 %v2165, %v2164
      %v2187 = vpack.c.bf16 %v2167, %v2166
      %v2188 = vpack.c.bf16 %v2169, %v2168
      %v2189 = vpack.c.bf16 %v2171, %v2170
      %v2190 = vpack.c.bf16 %v2173, %v2172
      %v2191 = vpack.c.bf16 %v2175, %v2174
      %s2192 = scalar_lea.vmem %s3, 10
      %v2193 = vld [vmem:[%s2192] sm:$0x3]
      %v2195 = vsel %vm649, %v2176, 0
      %v2198 = vsel %vm649, %v2177, 0
      %v2201 = vsel %vm649, %v2178, 0
      %v2204 = vsel %vm649, %v2179, 0
      %v2207 = vsel %vm649, %v2180, 0
      %v2210 = vsel %vm649, %v2181, 0
      %v2213 = vsel %vm649, %v2182, 0
      %v2216 = vsel %vm649, %v2183, 0
      %v2219 = vsel %vm649, %v2184, 0
      %v2222 = vsel %vm649, %v2185, 0
      %v2225 = vsel %vm649, %v2186, 0
      %v2228 = vsel %vm649, %v2187, 0
      %v2231 = vsel %vm649, %v2188, 0
      %v2234 = vsel %vm649, %v2189, 0
      %v2237 = vsel %vm649, %v2190, 0
      %v2240 = vsel %vm649, %v2191, 0
      %v2243 = vsel %vm885, %v2193, 0
      %2245 = vmatprep.subr.bf16.mxu0 0
      %2246 = vmatpush1.bf16.msra.mxu0 0
      %2247 = vmatprep.subr.bf16.mxu0 0
      %2248 = vmatpush1.bf16.msra.mxu0 0
      %2249 = vmatprep.subr.bf16.mxu0 0
      %2250 = vmatpush1.bf16.msra.mxu0 0
      %2251 = vmatprep.subr.bf16.mxu0 0
      %2252 = vmatpush1.bf16.msra.mxu0 0
      %2253 = vmatprep.subr.bf16.mxu0 0
      %2254 = vmatpush1.bf16.msra.mxu0 0
      %2255 = vmatprep.subr.bf16.mxu0 0
      %2256 = vmatpush1.bf16.msra.mxu0 0
      %2257 = vmatprep.subr.bf16.mxu0 0
      %2258 = vmatpush1.bf16.msra.mxu0 0
      %2259 = vmatprep.subr.bf16.mxu0 0
      %2260 = vmatpush1.bf16.msra.mxu0 %v2243
      %2261 = vmatprep.subr.bf16.mxu0 0
      %2262 = vmatpush2.bf16.msra.mxu0 0
      %2263 = vmatprep.subr.bf16.mxu0 0
      %2264 = vmatpush2.bf16.msra.mxu0 0
      %2265 = vmatprep.subr.bf16.mxu0 0
      %2266 = vmatpush2.bf16.msra.mxu0 0
      %2267 = vmatprep.subr.bf16.mxu0 0
      %2268 = vmatpush2.bf16.msra.mxu0 0
      %2269 = vmatprep.subr.bf16.mxu0 0
      %2270 = vmatpush2.bf16.msra.mxu0 0
      %2271 = vmatprep.subr.bf16.mxu0 0
      %2272 = vmatpush2.bf16.msra.mxu0 0
      %2273 = vmatprep.subr.bf16.mxu0 0
      %2274 = vmatpush2.bf16.msra.mxu0 0
      %2275 = vmatprep.subr.bf16.mxu0 0
      %2276 = vmatpush2.bf16.msra.mxu0 0
      %2277 = vmatprep.mubr.bf16.mxu0 0
      %2278 = vmatmul.mubr.bf16.gmra.mxu0 %v2195
      %v2279 = vpop.f32.mrf.mxu0
      %v2280 = vadd.f32 0.0, %v2279
      %v2281 = vpop.f32.mrf.mxu0
      %v2282 = vpop.f32.mrf.mxu0
      %v2283 = vadd.f32 0.0, %v2282
      %v2284 = vpop.f32.mrf.mxu0
      %2285 = vmatprep.mubr.bf16.mxu0 0
      %2286 = vmatmul.mubr.bf16.gmra.mxu0 %v2198
      %v2287 = vpop.f32.mrf.mxu0
      %v2288 = vadd.f32 0.0, %v2287
      %v2289 = vpop.f32.mrf.mxu0
      %v2290 = vpop.f32.mrf.mxu0
      %v2291 = vadd.f32 0.0, %v2290
      %v2292 = vpop.f32.mrf.mxu0
      %2293 = vmatprep.mubr.bf16.mxu0 0
      %2294 = vmatmul.mubr.bf16.gmra.mxu0 %v2201
      %v2295 = vpop.f32.mrf.mxu0
      %v2296 = vadd.f32 0.0, %v2295
      %v2297 = vpop.f32.mrf.mxu0
      %v2298 = vpop.f32.mrf.mxu0
      %v2299 = vadd.f32 0.0, %v2298
      %v2300 = vpop.f32.mrf.mxu0
      %2301 = vmatprep.mubr.bf16.mxu0 0
      %2302 = vmatmul.mubr.bf16.gmra.mxu0 %v2204
      %v2303 = vpop.f32.mrf.mxu0
      %v2304 = vadd.f32 0.0, %v2303
      %v2305 = vpop.f32.mrf.mxu0
      %v2306 = vpop.f32.mrf.mxu0
      %v2307 = vadd.f32 0.0, %v2306
      %v2308 = vpop.f32.mrf.mxu0
      %2309 = vmatprep.mubr.bf16.mxu0 0
      %2310 = vmatmul.mubr.bf16.gmra.mxu0 %v2207
      %v2311 = vpop.f32.mrf.mxu0
      %v2312 = vadd.f32 0.0, %v2311
      %v2313 = vpop.f32.mrf.mxu0
      %v2314 = vpop.f32.mrf.mxu0
      %v2315 = vadd.f32 0.0, %v2314
      %v2316 = vpop.f32.mrf.mxu0
      %2317 = vmatprep.mubr.bf16.mxu0 0
      %2318 = vmatmul.mubr.bf16.gmra.mxu0 %v2210
      %v2319 = vpop.f32.mrf.mxu0
      %v2320 = vadd.f32 0.0, %v2319
      %v2321 = vpop.f32.mrf.mxu0
      %v2322 = vpop.f32.mrf.mxu0
      %v2323 = vadd.f32 0.0, %v2322
      %v2324 = vpop.f32.mrf.mxu0
      %2325 = vmatprep.mubr.bf16.mxu0 0
      %2326 = vmatmul.mubr.bf16.gmra.mxu0 %v2213
      %v2327 = vpop.f32.mrf.mxu0
      %v2328 = vadd.f32 0.0, %v2327
      %v2329 = vpop.f32.mrf.mxu0
      %v2330 = vpop.f32.mrf.mxu0
      %v2331 = vadd.f32 0.0, %v2330
      %v2332 = vpop.f32.mrf.mxu0
      %2333 = vmatprep.mubr.bf16.mxu0 0
      %2334 = vmatmul.mubr.bf16.gmra.mxu0 %v2216
      %v2335 = vpop.f32.mrf.mxu0
      %v2336 = vadd.f32 0.0, %v2335
      %v2337 = vpop.f32.mrf.mxu0
      %v2338 = vpop.f32.mrf.mxu0
      %v2339 = vadd.f32 0.0, %v2338
      %v2340 = vpop.f32.mrf.mxu0
      %2341 = vmatprep.mubr.bf16.mxu0 0
      %2342 = vmatmul.mubr.bf16.gmra.mxu0 %v2219
      %v2343 = vpop.f32.mrf.mxu0
      %v2344 = vadd.f32 0.0, %v2343
      %v2345 = vpop.f32.mrf.mxu0
      %v2346 = vpop.f32.mrf.mxu0
      %v2347 = vadd.f32 0.0, %v2346
      %v2348 = vpop.f32.mrf.mxu0
      %2349 = vmatprep.mubr.bf16.mxu0 0
      %2350 = vmatmul.mubr.bf16.gmra.mxu0 %v2222
      %v2351 = vpop.f32.mrf.mxu0
      %v2352 = vadd.f32 0.0, %v2351
      %v2353 = vpop.f32.mrf.mxu0
      %v2354 = vpop.f32.mrf.mxu0
      %v2355 = vadd.f32 0.0, %v2354
      %v2356 = vpop.f32.mrf.mxu0
      %2357 = vmatprep.mubr.bf16.mxu0 0
      %2358 = vmatmul.mubr.bf16.gmra.mxu0 %v2225
      %v2359 = vpop.f32.mrf.mxu0
      %v2360 = vadd.f32 0.0, %v2359
      %v2361 = vpop.f32.mrf.mxu0
      %v2362 = vpop.f32.mrf.mxu0
      %v2363 = vadd.f32 0.0, %v2362
      %v2364 = vpop.f32.mrf.mxu0
      %2365 = vmatprep.mubr.bf16.mxu0 0
      %2366 = vmatmul.mubr.bf16.gmra.mxu0 %v2228
      %v2367 = vpop.f32.mrf.mxu0
      %v2368 = vadd.f32 0.0, %v2367
      %v2369 = vpop.f32.mrf.mxu0
      %v2370 = vpop.f32.mrf.mxu0
      %v2371 = vadd.f32 0.0, %v2370
      %v2372 = vpop.f32.mrf.mxu0
      %2373 = vmatprep.mubr.bf16.mxu0 0
      %2374 = vmatmul.mubr.bf16.gmra.mxu0 %v2231
      %v2375 = vpop.f32.mrf.mxu0
      %v2376 = vadd.f32 0.0, %v2375
      %v2377 = vpop.f32.mrf.mxu0
      %v2378 = vpop.f32.mrf.mxu0
      %v2379 = vadd.f32 0.0, %v2378
      %v2380 = vpop.f32.mrf.mxu0
      %2381 = vmatprep.mubr.bf16.mxu0 0
      %2382 = vmatmul.mubr.bf16.gmra.mxu0 %v2234
      %v2383 = vpop.f32.mrf.mxu0
      %v2384 = vadd.f32 0.0, %v2383
      %v2385 = vpop.f32.mrf.mxu0
      %v2386 = vpop.f32.mrf.mxu0
      %v2387 = vadd.f32 0.0, %v2386
      %v2388 = vpop.f32.mrf.mxu0
      %2389 = vmatprep.mubr.bf16.mxu0 0
      %2390 = vmatmul.mubr.bf16.gmra.mxu0 %v2237
      %v2391 = vpop.f32.mrf.mxu0
      %v2392 = vadd.f32 0.0, %v2391
      %v2393 = vpop.f32.mrf.mxu0
      %v2394 = vpop.f32.mrf.mxu0
      %v2395 = vadd.f32 0.0, %v2394
      %v2396 = vpop.f32.mrf.mxu0
      %2397 = vmatprep.mubr.bf16.mxu0 0
      %2398 = vmatmul.mubr.bf16.gmra.mxu0 %v2240
      %v2399 = vpop.f32.mrf.mxu0
      %v2400 = vadd.f32 0.0, %v2399
      %v2401 = vpop.f32.mrf.mxu0
      %v2402 = vpop.f32.mrf.mxu0
      %v2403 = vadd.f32 0.0, %v2402
      %v2404 = vpop.f32.mrf.mxu0
      %2405 = vdwg.mxu0
      %v2406 = vadd.f32 %v2112, %v2280
      %v2407 = vadd.f32 %v2113, %v2283
      %v2408 = vadd.f32 %v2114, %v2288
      %v2409 = vadd.f32 %v2115, %v2291
      %v2410 = vadd.f32 %v2116, %v2296
      %v2411 = vadd.f32 %v2117, %v2299
      %v2412 = vadd.f32 %v2118, %v2304
      %v2413 = vadd.f32 %v2119, %v2307
      %v2414 = vadd.f32 %v2120, %v2312
      %v2415 = vadd.f32 %v2121, %v2315
      %v2416 = vadd.f32 %v2122, %v2320
      %v2417 = vadd.f32 %v2123, %v2323
      %v2418 = vadd.f32 %v2124, %v2328
      %v2419 = vadd.f32 %v2125, %v2331
      %v2420 = vadd.f32 %v2126, %v2336
      %v2421 = vadd.f32 %v2127, %v2339
      %v2422 = vadd.f32 %v2128, %v2344
      %v2423 = vadd.f32 %v2129, %v2347
      %v2424 = vadd.f32 %v2130, %v2352
      %v2425 = vadd.f32 %v2131, %v2355
      %v2426 = vadd.f32 %v2132, %v2360
      %v2427 = vadd.f32 %v2133, %v2363
      %v2428 = vadd.f32 %v2134, %v2368
      %v2429 = vadd.f32 %v2135, %v2371
      %v2430 = vadd.f32 %v2136, %v2376
      %v2431 = vadd.f32 %v2137, %v2379
      %v2432 = vadd.f32 %v2138, %v2384
      %v2433 = vadd.f32 %v2139, %v2387
      %v2434 = vadd.f32 %v2140, %v2392
      %v2435 = vadd.f32 %v2141, %v2395
      %v2436 = vadd.f32 %v2142, %v2400
      %v2437 = vadd.f32 %v2143, %v2403
      %s2438 = scalar_lea.vmem [#allocation2], 48
      %v2439 = vld [vmem:[%s2438] sm:$0xff]
      %v2440 = vld [vmem:[%s2438 + $0x8] sm:$0xff]
      %v2441 = vld [vmem:[%s2438 + $0x18] sm:$0xff]
      %v2442 = vld [vmem:[%s2438 + $0x20] sm:$0xff]
      %v2443 = vld [vmem:[%s2438 + $0x30] sm:$0xff]
      %v2444 = vld [vmem:[%s2438 + $0x38] sm:$0xff]
      %v2445 = vld [vmem:[%s2438 + $0x48] sm:$0xff]
      %v2446 = vld [vmem:[%s2438 + $0x50] sm:$0xff]
      %v2447 = vld [vmem:[%s2438 + $0x60] sm:$0xff]
      %v2448 = vld [vmem:[%s2438 + $0x68] sm:$0xff]
      %v2449 = vld [vmem:[%s2438 + $0x78] sm:$0xff]
      %v2450 = vld [vmem:[%s2438 + $0x80] sm:$0xff]
      %v2451 = vld [vmem:[%s2438 + $0x90] sm:$0xff]
      %v2452 = vld [vmem:[%s2438 + $0x98] sm:$0xff]
      %v2453 = vld [vmem:[%s2438 + $0xa8] sm:$0xff]
      %v2454 = vld [vmem:[%s2438 + $0xb0] sm:$0xff]
      %v2455 = vld [vmem:[%s2438 + $0xc0] sm:$0xff]
      %v2456 = vld [vmem:[%s2438 + $0xc8] sm:$0xff]
      %v2457 = vld [vmem:[%s2438 + $0xd8] sm:$0xff]
      %v2458 = vld [vmem:[%s2438 + $0xe0] sm:$0xff]
      %v2459 = vld [vmem:[%s2438 + $0xf0] sm:$0xff]
      %v2460 = vld [vmem:[%s2438 + $0xf8] sm:$0xff]
      %v2461 = vld [vmem:[%s2438 + $0x108] sm:$0xff]
      %v2462 = vld [vmem:[%s2438 + $0x110] sm:$0xff]
      %v2463 = vld [vmem:[%s2438 + $0x120] sm:$0xff]
      %v2464 = vld [vmem:[%s2438 + $0x128] sm:$0xff]
      %v2465 = vld [vmem:[%s2438 + $0x138] sm:$0xff]
      %v2466 = vld [vmem:[%s2438 + $0x140] sm:$0xff]
      %v2467 = vld [vmem:[%s2438 + $0x150] sm:$0xff]
      %v2468 = vld [vmem:[%s2438 + $0x158] sm:$0xff]
      %v2469 = vld [vmem:[%s2438 + $0x168] sm:$0xff]
      %v2470 = vld [vmem:[%s2438 + $0x170] sm:$0xff]
      %v2471 = vpack.c.bf16 %v2440, %v2439
      %v2472 = vpack.c.bf16 %v2442, %v2441
      %v2473 = vpack.c.bf16 %v2444, %v2443
      %v2474 = vpack.c.bf16 %v2446, %v2445
      %v2475 = vpack.c.bf16 %v2448, %v2447
      %v2476 = vpack.c.bf16 %v2450, %v2449
      %v2477 = vpack.c.bf16 %v2452, %v2451
      %v2478 = vpack.c.bf16 %v2454, %v2453
      %v2479 = vpack.c.bf16 %v2456, %v2455
      %v2480 = vpack.c.bf16 %v2458, %v2457
      %v2481 = vpack.c.bf16 %v2460, %v2459
      %v2482 = vpack.c.bf16 %v2462, %v2461
      %v2483 = vpack.c.bf16 %v2464, %v2463
      %v2484 = vpack.c.bf16 %v2466, %v2465
      %v2485 = vpack.c.bf16 %v2468, %v2467
      %v2486 = vpack.c.bf16 %v2470, %v2469
      %s2487 = scalar_lea.vmem %s3, 12
      %v2488 = vld [vmem:[%s2487] sm:$0x3]
      %v2490 = vsel %vm649, %v2471, 0
      %v2493 = vsel %vm649, %v2472, 0
      %v2496 = vsel %vm649, %v2473, 0
      %v2499 = vsel %vm649, %v2474, 0
      %v2502 = vsel %vm649, %v2475, 0
      %v2505 = vsel %vm649, %v2476, 0
      %v2508 = vsel %vm649, %v2477, 0
      %v2511 = vsel %vm649, %v2478, 0
      %v2514 = vsel %vm649, %v2479, 0
      %v2517 = vsel %vm649, %v2480, 0
      %v2520 = vsel %vm649, %v2481, 0
      %v2523 = vsel %vm649, %v2482, 0
      %v2526 = vsel %vm649, %v2483, 0
      %v2529 = vsel %vm649, %v2484, 0
      %v2532 = vsel %vm649, %v2485, 0
      %v2535 = vsel %vm649, %v2486, 0
      %v2538 = vsel %vm885, %v2488, 0
      %2540 = vmatprep.subr.bf16.mxu0 0
      %2541 = vmatpush1.bf16.msra.mxu0 0
      %2542 = vmatprep.subr.bf16.mxu0 0
      %2543 = vmatpush1.bf16.msra.mxu0 0
      %2544 = vmatprep.subr.bf16.mxu0 0
      %2545 = vmatpush1.bf16.msra.mxu0 0
      %2546 = vmatprep.subr.bf16.mxu0 0
      %2547 = vmatpush1.bf16.msra.mxu0 0
      %2548 = vmatprep.subr.bf16.mxu0 0
      %2549 = vmatpush1.bf16.msra.mxu0 0
      %2550 = vmatprep.subr.bf16.mxu0 0
      %2551 = vmatpush1.bf16.msra.mxu0 0
      %2552 = vmatprep.subr.bf16.mxu0 0
      %2553 = vmatpush1.bf16.msra.mxu0 0
      %2554 = vmatprep.subr.bf16.mxu0 0
      %2555 = vmatpush1.bf16.msra.mxu0 %v2538
      %2556 = vmatprep.subr.bf16.mxu0 0
      %2557 = vmatpush2.bf16.msra.mxu0 0
      %2558 = vmatprep.subr.bf16.mxu0 0
      %2559 = vmatpush2.bf16.msra.mxu0 0
      %2560 = vmatprep.subr.bf16.mxu0 0
      %2561 = vmatpush2.bf16.msra.mxu0 0
      %2562 = vmatprep.subr.bf16.mxu0 0
      %2563 = vmatpush2.bf16.msra.mxu0 0
      %2564 = vmatprep.subr.bf16.mxu0 0
      %2565 = vmatpush2.bf16.msra.mxu0 0
      %2566 = vmatprep.subr.bf16.mxu0 0
      %2567 = vmatpush2.bf16.msra.mxu0 0
      %2568 = vmatprep.subr.bf16.mxu0 0
      %2569 = vmatpush2.bf16.msra.mxu0 0
      %2570 = vmatprep.subr.bf16.mxu0 0
      %2571 = vmatpush2.bf16.msra.mxu0 0
      %2572 = vmatprep.mubr.bf16.mxu0 0
      %2573 = vmatmul.mubr.bf16.gmra.mxu0 %v2490
      %v2574 = vpop.f32.mrf.mxu0
      %v2575 = vadd.f32 0.0, %v2574
      %v2576 = vpop.f32.mrf.mxu0
      %v2577 = vpop.f32.mrf.mxu0
      %v2578 = vadd.f32 0.0, %v2577
      %v2579 = vpop.f32.mrf.mxu0
      %2580 = vmatprep.mubr.bf16.mxu0 0
      %2581 = vmatmul.mubr.bf16.gmra.mxu0 %v2493
      %v2582 = vpop.f32.mrf.mxu0
      %v2583 = vadd.f32 0.0, %v2582
      %v2584 = vpop.f32.mrf.mxu0
      %v2585 = vpop.f32.mrf.mxu0
      %v2586 = vadd.f32 0.0, %v2585
      %v2587 = vpop.f32.mrf.mxu0
      %2588 = vmatprep.mubr.bf16.mxu0 0
      %2589 = vmatmul.mubr.bf16.gmra.mxu0 %v2496
      %v2590 = vpop.f32.mrf.mxu0
      %v2591 = vadd.f32 0.0, %v2590
      %v2592 = vpop.f32.mrf.mxu0
      %v2593 = vpop.f32.mrf.mxu0
      %v2594 = vadd.f32 0.0, %v2593
      %v2595 = vpop.f32.mrf.mxu0
      %2596 = vmatprep.mubr.bf16.mxu0 0
      %2597 = vmatmul.mubr.bf16.gmra.mxu0 %v2499
      %v2598 = vpop.f32.mrf.mxu0
      %v2599 = vadd.f32 0.0, %v2598
      %v2600 = vpop.f32.mrf.mxu0
      %v2601 = vpop.f32.mrf.mxu0
      %v2602 = vadd.f32 0.0, %v2601
      %v2603 = vpop.f32.mrf.mxu0
      %2604 = vmatprep.mubr.bf16.mxu0 0
      %2605 = vmatmul.mubr.bf16.gmra.mxu0 %v2502
      %v2606 = vpop.f32.mrf.mxu0
      %v2607 = vadd.f32 0.0, %v2606
      %v2608 = vpop.f32.mrf.mxu0
      %v2609 = vpop.f32.mrf.mxu0
      %v2610 = vadd.f32 0.0, %v2609
      %v2611 = vpop.f32.mrf.mxu0
      %2612 = vmatprep.mubr.bf16.mxu0 0
      %2613 = vmatmul.mubr.bf16.gmra.mxu0 %v2505
      %v2614 = vpop.f32.mrf.mxu0
      %v2615 = vadd.f32 0.0, %v2614
      %v2616 = vpop.f32.mrf.mxu0
      %v2617 = vpop.f32.mrf.mxu0
      %v2618 = vadd.f32 0.0, %v2617
      %v2619 = vpop.f32.mrf.mxu0
      %2620 = vmatprep.mubr.bf16.mxu0 0
      %2621 = vmatmul.mubr.bf16.gmra.mxu0 %v2508
      %v2622 = vpop.f32.mrf.mxu0
      %v2623 = vadd.f32 0.0, %v2622
      %v2624 = vpop.f32.mrf.mxu0
      %v2625 = vpop.f32.mrf.mxu0
      %v2626 = vadd.f32 0.0, %v2625
      %v2627 = vpop.f32.mrf.mxu0
      %2628 = vmatprep.mubr.bf16.mxu0 0
      %2629 = vmatmul.mubr.bf16.gmra.mxu0 %v2511
      %v2630 = vpop.f32.mrf.mxu0
      %v2631 = vadd.f32 0.0, %v2630
      %v2632 = vpop.f32.mrf.mxu0
      %v2633 = vpop.f32.mrf.mxu0
      %v2634 = vadd.f32 0.0, %v2633
      %v2635 = vpop.f32.mrf.mxu0
      %2636 = vmatprep.mubr.bf16.mxu0 0
      %2637 = vmatmul.mubr.bf16.gmra.mxu0 %v2514
      %v2638 = vpop.f32.mrf.mxu0
      %v2639 = vadd.f32 0.0, %v2638
      %v2640 = vpop.f32.mrf.mxu0
      %v2641 = vpop.f32.mrf.mxu0
      %v2642 = vadd.f32 0.0, %v2641
      %v2643 = vpop.f32.mrf.mxu0
      %2644 = vmatprep.mubr.bf16.mxu0 0
      %2645 = vmatmul.mubr.bf16.gmra.mxu0 %v2517
      %v2646 = vpop.f32.mrf.mxu0
      %v2647 = vadd.f32 0.0, %v2646
      %v2648 = vpop.f32.mrf.mxu0
      %v2649 = vpop.f32.mrf.mxu0
      %v2650 = vadd.f32 0.0, %v2649
      %v2651 = vpop.f32.mrf.mxu0
      %2652 = vmatprep.mubr.bf16.mxu0 0
      %2653 = vmatmul.mubr.bf16.gmra.mxu0 %v2520
      %v2654 = vpop.f32.mrf.mxu0
      %v2655 = vadd.f32 0.0, %v2654
      %v2656 = vpop.f32.mrf.mxu0
      %v2657 = vpop.f32.mrf.mxu0
      %v2658 = vadd.f32 0.0, %v2657
      %v2659 = vpop.f32.mrf.mxu0
      %2660 = vmatprep.mubr.bf16.mxu0 0
      %2661 = vmatmul.mubr.bf16.gmra.mxu0 %v2523
      %v2662 = vpop.f32.mrf.mxu0
      %v2663 = vadd.f32 0.0, %v2662
      %v2664 = vpop.f32.mrf.mxu0
      %v2665 = vpop.f32.mrf.mxu0
      %v2666 = vadd.f32 0.0, %v2665
      %v2667 = vpop.f32.mrf.mxu0
      %2668 = vmatprep.mubr.bf16.mxu0 0
      %2669 = vmatmul.mubr.bf16.gmra.mxu0 %v2526
      %v2670 = vpop.f32.mrf.mxu0
      %v2671 = vadd.f32 0.0, %v2670
      %v2672 = vpop.f32.mrf.mxu0
      %v2673 = vpop.f32.mrf.mxu0
      %v2674 = vadd.f32 0.0, %v2673
      %v2675 = vpop.f32.mrf.mxu0
      %2676 = vmatprep.mubr.bf16.mxu0 0
      %2677 = vmatmul.mubr.bf16.gmra.mxu0 %v2529
      %v2678 = vpop.f32.mrf.mxu0
      %v2679 = vadd.f32 0.0, %v2678
      %v2680 = vpop.f32.mrf.mxu0
      %v2681 = vpop.f32.mrf.mxu0
      %v2682 = vadd.f32 0.0, %v2681
      %v2683 = vpop.f32.mrf.mxu0
      %2684 = vmatprep.mubr.bf16.mxu0 0
      %2685 = vmatmul.mubr.bf16.gmra.mxu0 %v2532
      %v2686 = vpop.f32.mrf.mxu0
      %v2687 = vadd.f32 0.0, %v2686
      %v2688 = vpop.f32.mrf.mxu0
      %v2689 = vpop.f32.mrf.mxu0
      %v2690 = vadd.f32 0.0, %v2689
      %v2691 = vpop.f32.mrf.mxu0
      %2692 = vmatprep.mubr.bf16.mxu0 0
      %2693 = vmatmul.mubr.bf16.gmra.mxu0 %v2535
      %v2694 = vpop.f32.mrf.mxu0
      %v2695 = vadd.f32 0.0, %v2694
      %v2696 = vpop.f32.mrf.mxu0
      %v2697 = vpop.f32.mrf.mxu0
      %v2698 = vadd.f32 0.0, %v2697
      %v2699 = vpop.f32.mrf.mxu0
      %2700 = vdwg.mxu0
      %v2701 = vadd.f32 %v2406, %v2575
      %v2702 = vadd.f32 %v2407, %v2578
      %v2703 = vadd.f32 %v2408, %v2583
      %v2704 = vadd.f32 %v2409, %v2586
      %v2705 = vadd.f32 %v2410, %v2591
      %v2706 = vadd.f32 %v2411, %v2594
      %v2707 = vadd.f32 %v2412, %v2599
      %v2708 = vadd.f32 %v2413, %v2602
      %v2709 = vadd.f32 %v2414, %v2607
      %v2710 = vadd.f32 %v2415, %v2610
      %v2711 = vadd.f32 %v2416, %v2615
      %v2712 = vadd.f32 %v2417, %v2618
      %v2713 = vadd.f32 %v2418, %v2623
      %v2714 = vadd.f32 %v2419, %v2626
      %v2715 = vadd.f32 %v2420, %v2631
      %v2716 = vadd.f32 %v2421, %v2634
      %v2717 = vadd.f32 %v2422, %v2639
      %v2718 = vadd.f32 %v2423, %v2642
      %v2719 = vadd.f32 %v2424, %v2647
      %v2720 = vadd.f32 %v2425, %v2650
      %v2721 = vadd.f32 %v2426, %v2655
      %v2722 = vadd.f32 %v2427, %v2658
      %v2723 = vadd.f32 %v2428, %v2663
      %v2724 = vadd.f32 %v2429, %v2666
      %v2725 = vadd.f32 %v2430, %v2671
      %v2726 = vadd.f32 %v2431, %v2674
      %v2727 = vadd.f32 %v2432, %v2679
      %v2728 = vadd.f32 %v2433, %v2682
      %v2729 = vadd.f32 %v2434, %v2687
      %v2730 = vadd.f32 %v2435, %v2690
      %v2731 = vadd.f32 %v2436, %v2695
      %v2732 = vadd.f32 %v2437, %v2698
      %v2733 = vld [vmem:[%s2438 + $0x1] sm:$0xff]
      %v2734 = vld [vmem:[%s2438 + $0x9] sm:$0xff]
      %v2735 = vld [vmem:[%s2438 + $0x19] sm:$0xff]
      %v2736 = vld [vmem:[%s2438 + $0x21] sm:$0xff]
      %v2737 = vld [vmem:[%s2438 + $0x31] sm:$0xff]
      %v2738 = vld [vmem:[%s2438 + $0x39] sm:$0xff]
      %v2739 = vld [vmem:[%s2438 + $0x49] sm:$0xff]
      %v2740 = vld [vmem:[%s2438 + $0x51] sm:$0xff]
      %v2741 = vld [vmem:[%s2438 + $0x61] sm:$0xff]
      %v2742 = vld [vmem:[%s2438 + $0x69] sm:$0xff]
      %v2743 = vld [vmem:[%s2438 + $0x79] sm:$0xff]
      %v2744 = vld [vmem:[%s2438 + $0x81] sm:$0xff]
      %v2745 = vld [vmem:[%s2438 + $0x91] sm:$0xff]
      %v2746 = vld [vmem:[%s2438 + $0x99] sm:$0xff]
      %v2747 = vld [vmem:[%s2438 + $0xa9] sm:$0xff]
      %v2748 = vld [vmem:[%s2438 + $0xb1] sm:$0xff]
      %v2749 = vld [vmem:[%s2438 + $0xc1] sm:$0xff]
      %v2750 = vld [vmem:[%s2438 + $0xc9] sm:$0xff]
      %v2751 = vld [vmem:[%s2438 + $0xd9] sm:$0xff]
      %v2752 = vld [vmem:[%s2438 + $0xe1] sm:$0xff]
      %v2753 = vld [vmem:[%s2438 + $0xf1] sm:$0xff]
      %v2754 = vld [vmem:[%s2438 + $0xf9] sm:$0xff]
      %v2755 = vld [vmem:[%s2438 + $0x109] sm:$0xff]
      %v2756 = vld [vmem:[%s2438 + $0x111] sm:$0xff]
      %v2757 = vld [vmem:[%s2438 + $0x121] sm:$0xff]
      %v2758 = vld [vmem:[%s2438 + $0x129] sm:$0xff]
      %v2759 = vld [vmem:[%s2438 + $0x139] sm:$0xff]
      %v2760 = vld [vmem:[%s2438 + $0x141] sm:$0xff]
      %v2761 = vld [vmem:[%s2438 + $0x151] sm:$0xff]
      %v2762 = vld [vmem:[%s2438 + $0x159] sm:$0xff]
      %v2763 = vld [vmem:[%s2438 + $0x169] sm:$0xff]
      %v2764 = vld [vmem:[%s2438 + $0x171] sm:$0xff]
      %v2765 = vpack.c.bf16 %v2734, %v2733
      %v2766 = vpack.c.bf16 %v2736, %v2735
      %v2767 = vpack.c.bf16 %v2738, %v2737
      %v2768 = vpack.c.bf16 %v2740, %v2739
      %v2769 = vpack.c.bf16 %v2742, %v2741
      %v2770 = vpack.c.bf16 %v2744, %v2743
      %v2771 = vpack.c.bf16 %v2746, %v2745
      %v2772 = vpack.c.bf16 %v2748, %v2747
      %v2773 = vpack.c.bf16 %v2750, %v2749
      %v2774 = vpack.c.bf16 %v2752, %v2751
      %v2775 = vpack.c.bf16 %v2754, %v2753
      %v2776 = vpack.c.bf16 %v2756, %v2755
      %v2777 = vpack.c.bf16 %v2758, %v2757
      %v2778 = vpack.c.bf16 %v2760, %v2759
      %v2779 = vpack.c.bf16 %v2762, %v2761
      %v2780 = vpack.c.bf16 %v2764, %v2763
      %s2781 = scalar_lea.vmem %s3, 14
      %v2782 = vld [vmem:[%s2781] sm:$0x3]
      %v2784 = vsel %vm649, %v2765, 0
      %v2787 = vsel %vm649, %v2766, 0
      %v2790 = vsel %vm649, %v2767, 0
      %v2793 = vsel %vm649, %v2768, 0
      %v2796 = vsel %vm649, %v2769, 0
      %v2799 = vsel %vm649, %v2770, 0
      %v2802 = vsel %vm649, %v2771, 0
      %v2805 = vsel %vm649, %v2772, 0
      %v2808 = vsel %vm649, %v2773, 0
      %v2811 = vsel %vm649, %v2774, 0
      %v2814 = vsel %vm649, %v2775, 0
      %v2817 = vsel %vm649, %v2776, 0
      %v2820 = vsel %vm649, %v2777, 0
      %v2823 = vsel %vm649, %v2778, 0
      %v2826 = vsel %vm649, %v2779, 0
      %v2829 = vsel %vm649, %v2780, 0
      %v2832 = vsel %vm885, %v2782, 0
      %2834 = vmatprep.subr.bf16.mxu0 0
      %2835 = vmatpush1.bf16.msra.mxu0 0
      %2836 = vmatprep.subr.bf16.mxu0 0
      %2837 = vmatpush1.bf16.msra.mxu0 0
      %2838 = vmatprep.subr.bf16.mxu0 0
      %2839 = vmatpush1.bf16.msra.mxu0 0
      %2840 = vmatprep.subr.bf16.mxu0 0
      %2841 = vmatpush1.bf16.msra.mxu0 0
      %2842 = vmatprep.subr.bf16.mxu0 0
      %2843 = vmatpush1.bf16.msra.mxu0 0
      %2844 = vmatprep.subr.bf16.mxu0 0
      %2845 = vmatpush1.bf16.msra.mxu0 0
      %2846 = vmatprep.subr.bf16.mxu0 0
      %2847 = vmatpush1.bf16.msra.mxu0 0
      %2848 = vmatprep.subr.bf16.mxu0 0
      %2849 = vmatpush1.bf16.msra.mxu0 %v2832
      %2850 = vmatprep.subr.bf16.mxu0 0
      %2851 = vmatpush2.bf16.msra.mxu0 0
      %2852 = vmatprep.subr.bf16.mxu0 0
      %2853 = vmatpush2.bf16.msra.mxu0 0
      %2854 = vmatprep.subr.bf16.mxu0 0
      %2855 = vmatpush2.bf16.msra.mxu0 0
      %2856 = vmatprep.subr.bf16.mxu0 0
      %2857 = vmatpush2.bf16.msra.mxu0 0
      %2858 = vmatprep.subr.bf16.mxu0 0
      %2859 = vmatpush2.bf16.msra.mxu0 0
      %2860 = vmatprep.subr.bf16.mxu0 0
      %2861 = vmatpush2.bf16.msra.mxu0 0
      %2862 = vmatprep.subr.bf16.mxu0 0
      %2863 = vmatpush2.bf16.msra.mxu0 0
      %2864 = vmatprep.subr.bf16.mxu0 0
      %2865 = vmatpush2.bf16.msra.mxu0 0
      %2866 = vmatprep.mubr.bf16.mxu0 0
      %2867 = vmatmul.mubr.bf16.gmra.mxu0 %v2784
      %v2868 = vpop.f32.mrf.mxu0
      %v2869 = vadd.f32 0.0, %v2868
      %v2870 = vpop.f32.mrf.mxu0
      %v2871 = vpop.f32.mrf.mxu0
      %v2872 = vadd.f32 0.0, %v2871
      %v2873 = vpop.f32.mrf.mxu0
      %2874 = vmatprep.mubr.bf16.mxu0 0
      %2875 = vmatmul.mubr.bf16.gmra.mxu0 %v2787
      %v2876 = vpop.f32.mrf.mxu0
      %v2877 = vadd.f32 0.0, %v2876
      %v2878 = vpop.f32.mrf.mxu0
      %v2879 = vpop.f32.mrf.mxu0
      %v2880 = vadd.f32 0.0, %v2879
      %v2881 = vpop.f32.mrf.mxu0
      %2882 = vmatprep.mubr.bf16.mxu0 0
      %2883 = vmatmul.mubr.bf16.gmra.mxu0 %v2790
      %v2884 = vpop.f32.mrf.mxu0
      %v2885 = vadd.f32 0.0, %v2884
      %v2886 = vpop.f32.mrf.mxu0
      %v2887 = vpop.f32.mrf.mxu0
      %v2888 = vadd.f32 0.0, %v2887
      %v2889 = vpop.f32.mrf.mxu0
      %2890 = vmatprep.mubr.bf16.mxu0 0
      %2891 = vmatmul.mubr.bf16.gmra.mxu0 %v2793
      %v2892 = vpop.f32.mrf.mxu0
      %v2893 = vadd.f32 0.0, %v2892
      %v2894 = vpop.f32.mrf.mxu0
      %v2895 = vpop.f32.mrf.mxu0
      %v2896 = vadd.f32 0.0, %v2895
      %v2897 = vpop.f32.mrf.mxu0
      %2898 = vmatprep.mubr.bf16.mxu0 0
      %2899 = vmatmul.mubr.bf16.gmra.mxu0 %v2796
      %v2900 = vpop.f32.mrf.mxu0
      %v2901 = vadd.f32 0.0, %v2900
      %v2902 = vpop.f32.mrf.mxu0
      %v2903 = vpop.f32.mrf.mxu0
      %v2904 = vadd.f32 0.0, %v2903
      %v2905 = vpop.f32.mrf.mxu0
      %2906 = vmatprep.mubr.bf16.mxu0 0
      %2907 = vmatmul.mubr.bf16.gmra.mxu0 %v2799
      %v2908 = vpop.f32.mrf.mxu0
      %v2909 = vadd.f32 0.0, %v2908
      %v2910 = vpop.f32.mrf.mxu0
      %v2911 = vpop.f32.mrf.mxu0
      %v2912 = vadd.f32 0.0, %v2911
      %v2913 = vpop.f32.mrf.mxu0
      %2914 = vmatprep.mubr.bf16.mxu0 0
      %2915 = vmatmul.mubr.bf16.gmra.mxu0 %v2802
      %v2916 = vpop.f32.mrf.mxu0
      %v2917 = vadd.f32 0.0, %v2916
      %v2918 = vpop.f32.mrf.mxu0
      %v2919 = vpop.f32.mrf.mxu0
      %v2920 = vadd.f32 0.0, %v2919
      %v2921 = vpop.f32.mrf.mxu0
      %2922 = vmatprep.mubr.bf16.mxu0 0
      %2923 = vmatmul.mubr.bf16.gmra.mxu0 %v2805
      %v2924 = vpop.f32.mrf.mxu0
      %v2925 = vadd.f32 0.0, %v2924
      %v2926 = vpop.f32.mrf.mxu0
      %v2927 = vpop.f32.mrf.mxu0
      %v2928 = vadd.f32 0.0, %v2927
      %v2929 = vpop.f32.mrf.mxu0
      %2930 = vmatprep.mubr.bf16.mxu0 0
      %2931 = vmatmul.mubr.bf16.gmra.mxu0 %v2808
      %v2932 = vpop.f32.mrf.mxu0
      %v2933 = vadd.f32 0.0, %v2932
      %v2934 = vpop.f32.mrf.mxu0
      %v2935 = vpop.f32.mrf.mxu0
      %v2936 = vadd.f32 0.0, %v2935
      %v2937 = vpop.f32.mrf.mxu0
      %2938 = vmatprep.mubr.bf16.mxu0 0
      %2939 = vmatmul.mubr.bf16.gmra.mxu0 %v2811
      %v2940 = vpop.f32.mrf.mxu0
      %v2941 = vadd.f32 0.0, %v2940
      %v2942 = vpop.f32.mrf.mxu0
      %v2943 = vpop.f32.mrf.mxu0
      %v2944 = vadd.f32 0.0, %v2943
      %v2945 = vpop.f32.mrf.mxu0
      %2946 = vmatprep.mubr.bf16.mxu0 0
      %2947 = vmatmul.mubr.bf16.gmra.mxu0 %v2814
      %v2948 = vpop.f32.mrf.mxu0
      %v2949 = vadd.f32 0.0, %v2948
      %v2950 = vpop.f32.mrf.mxu0
      %v2951 = vpop.f32.mrf.mxu0
      %v2952 = vadd.f32 0.0, %v2951
      %v2953 = vpop.f32.mrf.mxu0
      %2954 = vmatprep.mubr.bf16.mxu0 0
      %2955 = vmatmul.mubr.bf16.gmra.mxu0 %v2817
      %v2956 = vpop.f32.mrf.mxu0
      %v2957 = vadd.f32 0.0, %v2956
      %v2958 = vpop.f32.mrf.mxu0
      %v2959 = vpop.f32.mrf.mxu0
      %v2960 = vadd.f32 0.0, %v2959
      %v2961 = vpop.f32.mrf.mxu0
      %2962 = vmatprep.mubr.bf16.mxu0 0
      %2963 = vmatmul.mubr.bf16.gmra.mxu0 %v2820
      %v2964 = vpop.f32.mrf.mxu0
      %v2965 = vadd.f32 0.0, %v2964
      %v2966 = vpop.f32.mrf.mxu0
      %v2967 = vpop.f32.mrf.mxu0
      %v2968 = vadd.f32 0.0, %v2967
      %v2969 = vpop.f32.mrf.mxu0
      %2970 = vmatprep.mubr.bf16.mxu0 0
      %2971 = vmatmul.mubr.bf16.gmra.mxu0 %v2823
      %v2972 = vpop.f32.mrf.mxu0
      %v2973 = vadd.f32 0.0, %v2972
      %v2974 = vpop.f32.mrf.mxu0
      %v2975 = vpop.f32.mrf.mxu0
      %v2976 = vadd.f32 0.0, %v2975
      %v2977 = vpop.f32.mrf.mxu0
      %2978 = vmatprep.mubr.bf16.mxu0 0
      %2979 = vmatmul.mubr.bf16.gmra.mxu0 %v2826
      %v2980 = vpop.f32.mrf.mxu0
      %v2981 = vadd.f32 0.0, %v2980
      %v2982 = vpop.f32.mrf.mxu0
      %v2983 = vpop.f32.mrf.mxu0
      %v2984 = vadd.f32 0.0, %v2983
      %v2985 = vpop.f32.mrf.mxu0
      %2986 = vmatprep.mubr.bf16.mxu0 0
      %2987 = vmatmul.mubr.bf16.gmra.mxu0 %v2829
      %v2988 = vpop.f32.mrf.mxu0
      %v2989 = vadd.f32 0.0, %v2988
      %v2990 = vpop.f32.mrf.mxu0
      %v2991 = vpop.f32.mrf.mxu0
      %v2992 = vadd.f32 0.0, %v2991
      %v2993 = vpop.f32.mrf.mxu0
      %2994 = vdwg.mxu0
      %v2995 = vadd.f32 %v2701, %v2869
      %v2996 = vadd.f32 %v2702, %v2872
      %v2997 = vadd.f32 %v2703, %v2877
      %v2998 = vadd.f32 %v2704, %v2880
      %v2999 = vadd.f32 %v2705, %v2885
      %v3000 = vadd.f32 %v2706, %v2888
      %v3001 = vadd.f32 %v2707, %v2893
      %v3002 = vadd.f32 %v2708, %v2896
      %v3003 = vadd.f32 %v2709, %v2901
      %v3004 = vadd.f32 %v2710, %v2904
      %v3005 = vadd.f32 %v2711, %v2909
      %v3006 = vadd.f32 %v2712, %v2912
      %v3007 = vadd.f32 %v2713, %v2917
      %v3008 = vadd.f32 %v2714, %v2920
      %v3009 = vadd.f32 %v2715, %v2925
      %v3010 = vadd.f32 %v2716, %v2928
      %v3011 = vadd.f32 %v2717, %v2933
      %v3012 = vadd.f32 %v2718, %v2936
      %v3013 = vadd.f32 %v2719, %v2941
      %v3014 = vadd.f32 %v2720, %v2944
      %v3015 = vadd.f32 %v2721, %v2949
      %v3016 = vadd.f32 %v2722, %v2952
      %v3017 = vadd.f32 %v2723, %v2957
      %v3018 = vadd.f32 %v2724, %v2960
      %v3019 = vadd.f32 %v2725, %v2965
      %v3020 = vadd.f32 %v2726, %v2968
      %v3021 = vadd.f32 %v2727, %v2973
      %v3022 = vadd.f32 %v2728, %v2976
      %v3023 = vadd.f32 %v2729, %v2981
      %v3024 = vadd.f32 %v2730, %v2984
      %v3025 = vadd.f32 %v2731, %v2989
      %v3026 = vadd.f32 %v2732, %v2992
      %v3027 = vld [vmem:[%s2438 + $0x2] sm:$0xff]
      %v3028 = vld [vmem:[%s2438 + $0xa] sm:$0xff]
      %v3029 = vld [vmem:[%s2438 + $0x1a] sm:$0xff]
      %v3030 = vld [vmem:[%s2438 + $0x22] sm:$0xff]
      %v3031 = vld [vmem:[%s2438 + $0x32] sm:$0xff]
      %v3032 = vld [vmem:[%s2438 + $0x3a] sm:$0xff]
      %v3033 = vld [vmem:[%s2438 + $0x4a] sm:$0xff]
      %v3034 = vld [vmem:[%s2438 + $0x52] sm:$0xff]
      %v3035 = vld [vmem:[%s2438 + $0x62] sm:$0xff]
      %v3036 = vld [vmem:[%s2438 + $0x6a] sm:$0xff]
      %v3037 = vld [vmem:[%s2438 + $0x7a] sm:$0xff]
      %v3038 = vld [vmem:[%s2438 + $0x82] sm:$0xff]
      %v3039 = vld [vmem:[%s2438 + $0x92] sm:$0xff]
      %v3040 = vld [vmem:[%s2438 + $0x9a] sm:$0xff]
      %v3041 = vld [vmem:[%s2438 + $0xaa] sm:$0xff]
      %v3042 = vld [vmem:[%s2438 + $0xb2] sm:$0xff]
      %v3043 = vld [vmem:[%s2438 + $0xc2] sm:$0xff]
      %v3044 = vld [vmem:[%s2438 + $0xca] sm:$0xff]
      %v3045 = vld [vmem:[%s2438 + $0xda] sm:$0xff]
      %v3046 = vld [vmem:[%s2438 + $0xe2] sm:$0xff]
      %v3047 = vld [vmem:[%s2438 + $0xf2] sm:$0xff]
      %v3048 = vld [vmem:[%s2438 + $0xfa] sm:$0xff]
      %v3049 = vld [vmem:[%s2438 + $0x10a] sm:$0xff]
      %v3050 = vld [vmem:[%s2438 + $0x112] sm:$0xff]
      %v3051 = vld [vmem:[%s2438 + $0x122] sm:$0xff]
      %v3052 = vld [vmem:[%s2438 + $0x12a] sm:$0xff]
      %v3053 = vld [vmem:[%s2438 + $0x13a] sm:$0xff]
      %v3054 = vld [vmem:[%s2438 + $0x142] sm:$0xff]
      %v3055 = vld [vmem:[%s2438 + $0x152] sm:$0xff]
      %v3056 = vld [vmem:[%s2438 + $0x15a] sm:$0xff]
      %v3057 = vld [vmem:[%s2438 + $0x16a] sm:$0xff]
      %v3058 = vld [vmem:[%s2438 + $0x172] sm:$0xff]
      %v3059 = vpack.c.bf16 %v3028, %v3027
      %v3060 = vpack.c.bf16 %v3030, %v3029
      %v3061 = vpack.c.bf16 %v3032, %v3031
      %v3062 = vpack.c.bf16 %v3034, %v3033
      %v3063 = vpack.c.bf16 %v3036, %v3035
      %v3064 = vpack.c.bf16 %v3038, %v3037
      %v3065 = vpack.c.bf16 %v3040, %v3039
      %v3066 = vpack.c.bf16 %v3042, %v3041
      %v3067 = vpack.c.bf16 %v3044, %v3043
      %v3068 = vpack.c.bf16 %v3046, %v3045
      %v3069 = vpack.c.bf16 %v3048, %v3047
      %v3070 = vpack.c.bf16 %v3050, %v3049
      %v3071 = vpack.c.bf16 %v3052, %v3051
      %v3072 = vpack.c.bf16 %v3054, %v3053
      %v3073 = vpack.c.bf16 %v3056, %v3055
      %v3074 = vpack.c.bf16 %v3058, %v3057
      %s3075 = scalar_lea.vmem %s3, 16
      %v3076 = vld [vmem:[%s3075] sm:$0x3]
      %v3078 = vsel %vm649, %v3059, 0
      %v3081 = vsel %vm649, %v3060, 0
      %v3084 = vsel %vm649, %v3061, 0
      %v3087 = vsel %vm649, %v3062, 0
      %v3090 = vsel %vm649, %v3063, 0
      %v3093 = vsel %vm649, %v3064, 0
      %v3096 = vsel %vm649, %v3065, 0
      %v3099 = vsel %vm649, %v3066, 0
      %v3102 = vsel %vm649, %v3067, 0
      %v3105 = vsel %vm649, %v3068, 0
      %v3108 = vsel %vm649, %v3069, 0
      %v3111 = vsel %vm649, %v3070, 0
      %v3114 = vsel %vm649, %v3071, 0
      %v3117 = vsel %vm649, %v3072, 0
      %v3120 = vsel %vm649, %v3073, 0
      %v3123 = vsel %vm649, %v3074, 0
      %v3126 = vsel %vm885, %v3076, 0
      %3128 = vmatprep.subr.bf16.mxu0 0
      %3129 = vmatpush1.bf16.msra.mxu0 0
      %3130 = vmatprep.subr.bf16.mxu0 0
      %3131 = vmatpush1.bf16.msra.mxu0 0
      %3132 = vmatprep.subr.bf16.mxu0 0
      %3133 = vmatpush1.bf16.msra.mxu0 0
      %3134 = vmatprep.subr.bf16.mxu0 0
      %3135 = vmatpush1.bf16.msra.mxu0 0
      %3136 = vmatprep.subr.bf16.mxu0 0
      %3137 = vmatpush1.bf16.msra.mxu0 0
      %3138 = vmatprep.subr.bf16.mxu0 0
      %3139 = vmatpush1.bf16.msra.mxu0 0
      %3140 = vmatprep.subr.bf16.mxu0 0
      %3141 = vmatpush1.bf16.msra.mxu0 0
      %3142 = vmatprep.subr.bf16.mxu0 0
      %3143 = vmatpush1.bf16.msra.mxu0 %v3126
      %3144 = vmatprep.subr.bf16.mxu0 0
      %3145 = vmatpush2.bf16.msra.mxu0 0
      %3146 = vmatprep.subr.bf16.mxu0 0
      %3147 = vmatpush2.bf16.msra.mxu0 0
      %3148 = vmatprep.subr.bf16.mxu0 0
      %3149 = vmatpush2.bf16.msra.mxu0 0
      %3150 = vmatprep.subr.bf16.mxu0 0
      %3151 = vmatpush2.bf16.msra.mxu0 0
      %3152 = vmatprep.subr.bf16.mxu0 0
      %3153 = vmatpush2.bf16.msra.mxu0 0
      %3154 = vmatprep.subr.bf16.mxu0 0
      %3155 = vmatpush2.bf16.msra.mxu0 0
      %3156 = vmatprep.subr.bf16.mxu0 0
      %3157 = vmatpush2.bf16.msra.mxu0 0
      %3158 = vmatprep.subr.bf16.mxu0 0
      %3159 = vmatpush2.bf16.msra.mxu0 0
      %3160 = vmatprep.mubr.bf16.mxu0 0
      %3161 = vmatmul.mubr.bf16.gmra.mxu0 %v3078
      %v3162 = vpop.f32.mrf.mxu0
      %v3163 = vadd.f32 0.0, %v3162
      %v3164 = vpop.f32.mrf.mxu0
      %v3165 = vpop.f32.mrf.mxu0
      %v3166 = vadd.f32 0.0, %v3165
      %v3167 = vpop.f32.mrf.mxu0
      %3168 = vmatprep.mubr.bf16.mxu0 0
      %3169 = vmatmul.mubr.bf16.gmra.mxu0 %v3081
      %v3170 = vpop.f32.mrf.mxu0
      %v3171 = vadd.f32 0.0, %v3170
      %v3172 = vpop.f32.mrf.mxu0
      %v3173 = vpop.f32.mrf.mxu0
      %v3174 = vadd.f32 0.0, %v3173
      %v3175 = vpop.f32.mrf.mxu0
      %3176 = vmatprep.mubr.bf16.mxu0 0
      %3177 = vmatmul.mubr.bf16.gmra.mxu0 %v3084
      %v3178 = vpop.f32.mrf.mxu0
      %v3179 = vadd.f32 0.0, %v3178
      %v3180 = vpop.f32.mrf.mxu0
      %v3181 = vpop.f32.mrf.mxu0
      %v3182 = vadd.f32 0.0, %v3181
      %v3183 = vpop.f32.mrf.mxu0
      %3184 = vmatprep.mubr.bf16.mxu0 0
      %3185 = vmatmul.mubr.bf16.gmra.mxu0 %v3087
      %v3186 = vpop.f32.mrf.mxu0
      %v3187 = vadd.f32 0.0, %v3186
      %v3188 = vpop.f32.mrf.mxu0
      %v3189 = vpop.f32.mrf.mxu0
      %v3190 = vadd.f32 0.0, %v3189
      %v3191 = vpop.f32.mrf.mxu0
      %3192 = vmatprep.mubr.bf16.mxu0 0
      %3193 = vmatmul.mubr.bf16.gmra.mxu0 %v3090
      %v3194 = vpop.f32.mrf.mxu0
      %v3195 = vadd.f32 0.0, %v3194
      %v3196 = vpop.f32.mrf.mxu0
      %v3197 = vpop.f32.mrf.mxu0
      %v3198 = vadd.f32 0.0, %v3197
      %v3199 = vpop.f32.mrf.mxu0
      %3200 = vmatprep.mubr.bf16.mxu0 0
      %3201 = vmatmul.mubr.bf16.gmra.mxu0 %v3093
      %v3202 = vpop.f32.mrf.mxu0
      %v3203 = vadd.f32 0.0, %v3202
      %v3204 = vpop.f32.mrf.mxu0
      %v3205 = vpop.f32.mrf.mxu0
      %v3206 = vadd.f32 0.0, %v3205
      %v3207 = vpop.f32.mrf.mxu0
      %3208 = vmatprep.mubr.bf16.mxu0 0
      %3209 = vmatmul.mubr.bf16.gmra.mxu0 %v3096
      %v3210 = vpop.f32.mrf.mxu0
      %v3211 = vadd.f32 0.0, %v3210
      %v3212 = vpop.f32.mrf.mxu0
      %v3213 = vpop.f32.mrf.mxu0
      %v3214 = vadd.f32 0.0, %v3213
      %v3215 = vpop.f32.mrf.mxu0
      %3216 = vmatprep.mubr.bf16.mxu0 0
      %3217 = vmatmul.mubr.bf16.gmra.mxu0 %v3099
      %v3218 = vpop.f32.mrf.mxu0
      %v3219 = vadd.f32 0.0, %v3218
      %v3220 = vpop.f32.mrf.mxu0
      %v3221 = vpop.f32.mrf.mxu0
      %v3222 = vadd.f32 0.0, %v3221
      %v3223 = vpop.f32.mrf.mxu0
      %3224 = vmatprep.mubr.bf16.mxu0 0
      %3225 = vmatmul.mubr.bf16.gmra.mxu0 %v3102
      %v3226 = vpop.f32.mrf.mxu0
      %v3227 = vadd.f32 0.0, %v3226
      %v3228 = vpop.f32.mrf.mxu0
      %v3229 = vpop.f32.mrf.mxu0
      %v3230 = vadd.f32 0.0, %v3229
      %v3231 = vpop.f32.mrf.mxu0
      %3232 = vmatprep.mubr.bf16.mxu0 0
      %3233 = vmatmul.mubr.bf16.gmra.mxu0 %v3105
      %v3234 = vpop.f32.mrf.mxu0
      %v3235 = vadd.f32 0.0, %v3234
      %v3236 = vpop.f32.mrf.mxu0
      %v3237 = vpop.f32.mrf.mxu0
      %v3238 = vadd.f32 0.0, %v3237
      %v3239 = vpop.f32.mrf.mxu0
      %3240 = vmatprep.mubr.bf16.mxu0 0
      %3241 = vmatmul.mubr.bf16.gmra.mxu0 %v3108
      %v3242 = vpop.f32.mrf.mxu0
      %v3243 = vadd.f32 0.0, %v3242
      %v3244 = vpop.f32.mrf.mxu0
      %v3245 = vpop.f32.mrf.mxu0
      %v3246 = vadd.f32 0.0, %v3245
      %v3247 = vpop.f32.mrf.mxu0
      %3248 = vmatprep.mubr.bf16.mxu0 0
      %3249 = vmatmul.mubr.bf16.gmra.mxu0 %v3111
      %v3250 = vpop.f32.mrf.mxu0
      %v3251 = vadd.f32 0.0, %v3250
      %v3252 = vpop.f32.mrf.mxu0
      %v3253 = vpop.f32.mrf.mxu0
      %v3254 = vadd.f32 0.0, %v3253
      %v3255 = vpop.f32.mrf.mxu0
      %3256 = vmatprep.mubr.bf16.mxu0 0
      %3257 = vmatmul.mubr.bf16.gmra.mxu0 %v3114
      %v3258 = vpop.f32.mrf.mxu0
      %v3259 = vadd.f32 0.0, %v3258
      %v3260 = vpop.f32.mrf.mxu0
      %v3261 = vpop.f32.mrf.mxu0
      %v3262 = vadd.f32 0.0, %v3261
      %v3263 = vpop.f32.mrf.mxu0
      %3264 = vmatprep.mubr.bf16.mxu0 0
      %3265 = vmatmul.mubr.bf16.gmra.mxu0 %v3117
      %v3266 = vpop.f32.mrf.mxu0
      %v3267 = vadd.f32 0.0, %v3266
      %v3268 = vpop.f32.mrf.mxu0
      %v3269 = vpop.f32.mrf.mxu0
      %v3270 = vadd.f32 0.0, %v3269
      %v3271 = vpop.f32.mrf.mxu0
      %3272 = vmatprep.mubr.bf16.mxu0 0
      %3273 = vmatmul.mubr.bf16.gmra.mxu0 %v3120
      %v3274 = vpop.f32.mrf.mxu0
      %v3275 = vadd.f32 0.0, %v3274
      %v3276 = vpop.f32.mrf.mxu0
      %v3277 = vpop.f32.mrf.mxu0
      %v3278 = vadd.f32 0.0, %v3277
      %v3279 = vpop.f32.mrf.mxu0
      %3280 = vmatprep.mubr.bf16.mxu0 0
      %3281 = vmatmul.mubr.bf16.gmra.mxu0 %v3123
      %v3282 = vpop.f32.mrf.mxu0
      %v3283 = vadd.f32 0.0, %v3282
      %v3284 = vpop.f32.mrf.mxu0
      %v3285 = vpop.f32.mrf.mxu0
      %v3286 = vadd.f32 0.0, %v3285
      %v3287 = vpop.f32.mrf.mxu0
      %3288 = vdwg.mxu0
      %v3289 = vadd.f32 %v2995, %v3163
      %v3290 = vadd.f32 %v2996, %v3166
      %v3291 = vadd.f32 %v2997, %v3171
      %v3292 = vadd.f32 %v2998, %v3174
      %v3293 = vadd.f32 %v2999, %v3179
      %v3294 = vadd.f32 %v3000, %v3182
      %v3295 = vadd.f32 %v3001, %v3187
      %v3296 = vadd.f32 %v3002, %v3190
      %v3297 = vadd.f32 %v3003, %v3195
      %v3298 = vadd.f32 %v3004, %v3198
      %v3299 = vadd.f32 %v3005, %v3203
      %v3300 = vadd.f32 %v3006, %v3206
      %v3301 = vadd.f32 %v3007, %v3211
      %v3302 = vadd.f32 %v3008, %v3214
      %v3303 = vadd.f32 %v3009, %v3219
      %v3304 = vadd.f32 %v3010, %v3222
      %v3305 = vadd.f32 %v3011, %v3227
      %v3306 = vadd.f32 %v3012, %v3230
      %v3307 = vadd.f32 %v3013, %v3235
      %v3308 = vadd.f32 %v3014, %v3238
      %v3309 = vadd.f32 %v3015, %v3243
      %v3310 = vadd.f32 %v3016, %v3246
      %v3311 = vadd.f32 %v3017, %v3251
      %v3312 = vadd.f32 %v3018, %v3254
      %v3313 = vadd.f32 %v3019, %v3259
      %v3314 = vadd.f32 %v3020, %v3262
      %v3315 = vadd.f32 %v3021, %v3267
      %v3316 = vadd.f32 %v3022, %v3270
      %v3317 = vadd.f32 %v3023, %v3275
      %v3318 = vadd.f32 %v3024, %v3278
      %v3319 = vadd.f32 %v3025, %v3283
      %v3320 = vadd.f32 %v3026, %v3286
      %v3321 = vld [vmem:[%s4] sm:$0x1]
      %v3323 = vlaneseq
      %v3324 = vshrl.u32 %v3323, 7
      %v3325 = vsub.s32 0, %v3324
      %v3326 = vrot.slane %v3321, %v3325
      %v3328 = vadd.f32 %v3289, %v3326
      %v3329 = vadd.f32 %v3290, %v3326
      %v3330 = vadd.f32 %v3291, %v3326
      %v3331 = vadd.f32 %v3292, %v3326
      %v3332 = vadd.f32 %v3293, %v3326
      %v3333 = vadd.f32 %v3294, %v3326
      %v3334 = vadd.f32 %v3295, %v3326
      %v3335 = vadd.f32 %v3296, %v3326
      %v3336 = vadd.f32 %v3297, %v3326
      %v3337 = vadd.f32 %v3298, %v3326
      %v3338 = vadd.f32 %v3299, %v3326
      %v3339 = vadd.f32 %v3300, %v3326
      %v3340 = vadd.f32 %v3301, %v3326
      %v3341 = vadd.f32 %v3302, %v3326
      %v3342 = vadd.f32 %v3303, %v3326
      %v3343 = vadd.f32 %v3304, %v3326
      %v3344 = vadd.f32 %v3305, %v3326
      %v3345 = vadd.f32 %v3306, %v3326
      %v3346 = vadd.f32 %v3307, %v3326
      %v3347 = vadd.f32 %v3308, %v3326
      %v3348 = vadd.f32 %v3309, %v3326
      %v3349 = vadd.f32 %v3310, %v3326
      %v3350 = vadd.f32 %v3311, %v3326
      %v3351 = vadd.f32 %v3312, %v3326
      %v3352 = vadd.f32 %v3313, %v3326
      %v3353 = vadd.f32 %v3314, %v3326
      %v3354 = vadd.f32 %v3315, %v3326
      %v3355 = vadd.f32 %v3316, %v3326
      %v3356 = vadd.f32 %v3317, %v3326
      %v3357 = vadd.f32 %v3318, %v3326
      %v3358 = vadd.f32 %v3319, %v3326
      %v3359 = vadd.f32 %v3320, %v3326
      %v3360 = vmax.f32 %v3328, 0.0
      %v3361 = vmax.f32 %v3329, 0.0
      %v3362 = vmax.f32 %v3330, 0.0
      %v3363 = vmax.f32 %v3331, 0.0
      %v3364 = vmax.f32 %v3332, 0.0
      %v3365 = vmax.f32 %v3333, 0.0
      %v3366 = vmax.f32 %v3334, 0.0
      %v3367 = vmax.f32 %v3335, 0.0
      %v3368 = vmax.f32 %v3336, 0.0
      %v3369 = vmax.f32 %v3337, 0.0
      %v3370 = vmax.f32 %v3338, 0.0
      %v3371 = vmax.f32 %v3339, 0.0
      %v3372 = vmax.f32 %v3340, 0.0
      %v3373 = vmax.f32 %v3341, 0.0
      %v3374 = vmax.f32 %v3342, 0.0
      %v3375 = vmax.f32 %v3343, 0.0
      %v3376 = vmax.f32 %v3344, 0.0
      %v3377 = vmax.f32 %v3345, 0.0
      %v3378 = vmax.f32 %v3346, 0.0
      %v3379 = vmax.f32 %v3347, 0.0
      %v3380 = vmax.f32 %v3348, 0.0
      %v3381 = vmax.f32 %v3349, 0.0
      %v3382 = vmax.f32 %v3350, 0.0
      %v3383 = vmax.f32 %v3351, 0.0
      %v3384 = vmax.f32 %v3352, 0.0
      %v3385 = vmax.f32 %v3353, 0.0
      %v3386 = vmax.f32 %v3354, 0.0
      %v3387 = vmax.f32 %v3355, 0.0
      %v3388 = vmax.f32 %v3356, 0.0
      %v3389 = vmax.f32 %v3357, 0.0
      %v3390 = vmax.f32 %v3358, 0.0
      %v3391 = vmax.f32 %v3359, 0.0
      %v3392 = vpack.c.bf16 %v3361, %v3360
      %v3393 = vpack.c.bf16 %v3363, %v3362
      %v3394 = vpack.c.bf16 %v3365, %v3364
      %v3395 = vpack.c.bf16 %v3367, %v3366
      %v3396 = vpack.c.bf16 %v3369, %v3368
      %v3397 = vpack.c.bf16 %v3371, %v3370
      %v3398 = vpack.c.bf16 %v3373, %v3372
      %v3399 = vpack.c.bf16 %v3375, %v3374
      %v3400 = vpack.c.bf16 %v3377, %v3376
      %v3401 = vpack.c.bf16 %v3379, %v3378
      %v3402 = vpack.c.bf16 %v3381, %v3380
      %v3403 = vpack.c.bf16 %v3383, %v3382
      %v3404 = vpack.c.bf16 %v3385, %v3384
      %v3405 = vpack.c.bf16 %v3387, %v3386
      %v3406 = vpack.c.bf16 %v3389, %v3388
      %v3407 = vpack.c.bf16 %v3391, %v3390
      %v3408 = vld [vmem:[%s5] sm:$0x3]
      %v3409 = vld [vmem:[%s6] sm:$0x1]
      %v3411 = vlaneseq
      %v3412 = vshrl.u32 %v3411, 7
      %v3413 = vsub.s32 0, %v3412
      %v3414 = vrot.slane %v3409, %v3413
      %v3417 = vsel %vm649, %v3392, 0
      %v3420 = vsel %vm649, %v3393, 0
      %v3423 = vsel %vm649, %v3394, 0
      %v3426 = vsel %vm649, %v3395, 0
      %v3429 = vsel %vm649, %v3396, 0
      %v3432 = vsel %vm649, %v3397, 0
      %v3435 = vsel %vm649, %v3398, 0
      %v3438 = vsel %vm649, %v3399, 0
      %v3441 = vsel %vm649, %v3400, 0
      %v3444 = vsel %vm649, %v3401, 0
      %v3447 = vsel %vm649, %v3402, 0
      %v3450 = vsel %vm649, %v3403, 0
      %v3453 = vsel %vm649, %v3404, 0
      %v3456 = vsel %vm649, %v3405, 0
      %v3459 = vsel %vm649, %v3406, 0
      %v3462 = vsel %vm649, %v3407, 0
      %v3465 = vsel %vm885, %v3408, 0
      %3467 = vmatprep.subr.bf16.mxu0 0
      %3468 = vmatpush1.bf16.msra.mxu0 0
      %3469 = vmatprep.subr.bf16.mxu0 0
      %3470 = vmatpush1.bf16.msra.mxu0 0
      %3471 = vmatprep.subr.bf16.mxu0 0
      %3472 = vmatpush1.bf16.msra.mxu0 0
      %3473 = vmatprep.subr.bf16.mxu0 0
      %3474 = vmatpush1.bf16.msra.mxu0 0
      %3475 = vmatprep.subr.bf16.mxu0 0
      %3476 = vmatpush1.bf16.msra.mxu0 0
      %3477 = vmatprep.subr.bf16.mxu0 0
      %3478 = vmatpush1.bf16.msra.mxu0 0
      %3479 = vmatprep.subr.bf16.mxu0 0
      %3480 = vmatpush1.bf16.msra.mxu0 0
      %3481 = vmatprep.subr.bf16.mxu0 0
      %3482 = vmatpush1.bf16.msra.mxu0 %v3465
      %3483 = vmatprep.subr.bf16.mxu0 0
      %3484 = vmatpush2.bf16.msra.mxu0 0
      %3485 = vmatprep.subr.bf16.mxu0 0
      %3486 = vmatpush2.bf16.msra.mxu0 0
      %3487 = vmatprep.subr.bf16.mxu0 0
      %3488 = vmatpush2.bf16.msra.mxu0 0
      %3489 = vmatprep.subr.bf16.mxu0 0
      %3490 = vmatpush2.bf16.msra.mxu0 0
      %3491 = vmatprep.subr.bf16.mxu0 0
      %3492 = vmatpush2.bf16.msra.mxu0 0
      %3493 = vmatprep.subr.bf16.mxu0 0
      %3494 = vmatpush2.bf16.msra.mxu0 0
      %3495 = vmatprep.subr.bf16.mxu0 0
      %3496 = vmatpush2.bf16.msra.mxu0 0
      %3497 = vmatprep.subr.bf16.mxu0 0
      %3498 = vmatpush2.bf16.msra.mxu0 0
      %3499 = vmatprep.mubr.bf16.mxu0 0
      %3500 = vmatmul.mubr.bf16.gmra.mxu0 %v3417
      %v3501 = vpop.f32.mrf.mxu0
      %v3502 = vadd.f32 %v3414, %v3501
      %v3503 = vpop.f32.mrf.mxu0
      %v3504 = vpop.f32.mrf.mxu0
      %v3505 = vadd.f32 %v3414, %v3504
      %v3506 = vpop.f32.mrf.mxu0
      %3507 = vmatprep.mubr.bf16.mxu0 0
      %3508 = vmatmul.mubr.bf16.gmra.mxu0 %v3420
      %v3509 = vpop.f32.mrf.mxu0
      %v3510 = vadd.f32 %v3414, %v3509
      %v3511 = vpop.f32.mrf.mxu0
      %v3512 = vpop.f32.mrf.mxu0
      %v3513 = vadd.f32 %v3414, %v3512
      %v3514 = vpop.f32.mrf.mxu0
      %3515 = vmatprep.mubr.bf16.mxu0 0
      %3516 = vmatmul.mubr.bf16.gmra.mxu0 %v3423
      %v3517 = vpop.f32.mrf.mxu0
      %v3518 = vadd.f32 %v3414, %v3517
      %v3519 = vpop.f32.mrf.mxu0
      %v3520 = vpop.f32.mrf.mxu0
      %v3521 = vadd.f32 %v3414, %v3520
      %v3522 = vpop.f32.mrf.mxu0
      %3523 = vmatprep.mubr.bf16.mxu0 0
      %3524 = vmatmul.mubr.bf16.gmra.mxu0 %v3426
      %v3525 = vpop.f32.mrf.mxu0
      %v3526 = vadd.f32 %v3414, %v3525
      %v3527 = vpop.f32.mrf.mxu0
      %v3528 = vpop.f32.mrf.mxu0
      %v3529 = vadd.f32 %v3414, %v3528
      %v3530 = vpop.f32.mrf.mxu0
      %3531 = vmatprep.mubr.bf16.mxu0 0
      %3532 = vmatmul.mubr.bf16.gmra.mxu0 %v3429
      %v3533 = vpop.f32.mrf.mxu0
      %v3534 = vadd.f32 %v3414, %v3533
      %v3535 = vpop.f32.mrf.mxu0
      %v3536 = vpop.f32.mrf.mxu0
      %v3537 = vadd.f32 %v3414, %v3536
      %v3538 = vpop.f32.mrf.mxu0
      %3539 = vmatprep.mubr.bf16.mxu0 0
      %3540 = vmatmul.mubr.bf16.gmra.mxu0 %v3432
      %v3541 = vpop.f32.mrf.mxu0
      %v3542 = vadd.f32 %v3414, %v3541
      %v3543 = vpop.f32.mrf.mxu0
      %v3544 = vpop.f32.mrf.mxu0
      %v3545 = vadd.f32 %v3414, %v3544
      %v3546 = vpop.f32.mrf.mxu0
      %3547 = vmatprep.mubr.bf16.mxu0 0
      %3548 = vmatmul.mubr.bf16.gmra.mxu0 %v3435
      %v3549 = vpop.f32.mrf.mxu0
      %v3550 = vadd.f32 %v3414, %v3549
      %v3551 = vpop.f32.mrf.mxu0
      %v3552 = vpop.f32.mrf.mxu0
      %v3553 = vadd.f32 %v3414, %v3552
      %v3554 = vpop.f32.mrf.mxu0
      %3555 = vmatprep.mubr.bf16.mxu0 0
      %3556 = vmatmul.mubr.bf16.gmra.mxu0 %v3438
      %v3557 = vpop.f32.mrf.mxu0
      %v3558 = vadd.f32 %v3414, %v3557
      %v3559 = vpop.f32.mrf.mxu0
      %v3560 = vpop.f32.mrf.mxu0
      %v3561 = vadd.f32 %v3414, %v3560
      %v3562 = vpop.f32.mrf.mxu0
      %3563 = vmatprep.mubr.bf16.mxu0 0
      %3564 = vmatmul.mubr.bf16.gmra.mxu0 %v3441
      %v3565 = vpop.f32.mrf.mxu0
      %v3566 = vadd.f32 %v3414, %v3565
      %v3567 = vpop.f32.mrf.mxu0
      %v3568 = vpop.f32.mrf.mxu0
      %v3569 = vadd.f32 %v3414, %v3568
      %v3570 = vpop.f32.mrf.mxu0
      %3571 = vmatprep.mubr.bf16.mxu0 0
      %3572 = vmatmul.mubr.bf16.gmra.mxu0 %v3444
      %v3573 = vpop.f32.mrf.mxu0
      %v3574 = vadd.f32 %v3414, %v3573
      %v3575 = vpop.f32.mrf.mxu0
      %v3576 = vpop.f32.mrf.mxu0
      %v3577 = vadd.f32 %v3414, %v3576
      %v3578 = vpop.f32.mrf.mxu0
      %3579 = vmatprep.mubr.bf16.mxu0 0
      %3580 = vmatmul.mubr.bf16.gmra.mxu0 %v3447
      %v3581 = vpop.f32.mrf.mxu0
      %v3582 = vadd.f32 %v3414, %v3581
      %v3583 = vpop.f32.mrf.mxu0
      %v3584 = vpop.f32.mrf.mxu0
      %v3585 = vadd.f32 %v3414, %v3584
      %v3586 = vpop.f32.mrf.mxu0
      %3587 = vmatprep.mubr.bf16.mxu0 0
      %3588 = vmatmul.mubr.bf16.gmra.mxu0 %v3450
      %v3589 = vpop.f32.mrf.mxu0
      %v3590 = vadd.f32 %v3414, %v3589
      %v3591 = vpop.f32.mrf.mxu0
      %v3592 = vpop.f32.mrf.mxu0
      %v3593 = vadd.f32 %v3414, %v3592
      %v3594 = vpop.f32.mrf.mxu0
      %3595 = vmatprep.mubr.bf16.mxu0 0
      %3596 = vmatmul.mubr.bf16.gmra.mxu0 %v3453
      %v3597 = vpop.f32.mrf.mxu0
      %v3598 = vadd.f32 %v3414, %v3597
      %v3599 = vpop.f32.mrf.mxu0
      %v3600 = vpop.f32.mrf.mxu0
      %v3601 = vadd.f32 %v3414, %v3600
      %v3602 = vpop.f32.mrf.mxu0
      %3603 = vmatprep.mubr.bf16.mxu0 0
      %3604 = vmatmul.mubr.bf16.gmra.mxu0 %v3456
      %v3605 = vpop.f32.mrf.mxu0
      %v3606 = vadd.f32 %v3414, %v3605
      %v3607 = vpop.f32.mrf.mxu0
      %v3608 = vpop.f32.mrf.mxu0
      %v3609 = vadd.f32 %v3414, %v3608
      %v3610 = vpop.f32.mrf.mxu0
      %3611 = vmatprep.mubr.bf16.mxu0 0
      %3612 = vmatmul.mubr.bf16.gmra.mxu0 %v3459
      %v3613 = vpop.f32.mrf.mxu0
      %v3614 = vadd.f32 %v3414, %v3613
      %v3615 = vpop.f32.mrf.mxu0
      %v3616 = vpop.f32.mrf.mxu0
      %v3617 = vadd.f32 %v3414, %v3616
      %v3618 = vpop.f32.mrf.mxu0
      %3619 = vmatprep.mubr.bf16.mxu0 0
      %3620 = vmatmul.mubr.bf16.gmra.mxu0 %v3462
      %v3621 = vpop.f32.mrf.mxu0
      %v3622 = vadd.f32 %v3414, %v3621
      %v3623 = vpop.f32.mrf.mxu0
      %v3624 = vpop.f32.mrf.mxu0
      %v3625 = vadd.f32 %v3414, %v3624
      %v3626 = vpop.f32.mrf.mxu0
      %3627 = vdwg.mxu0
      %v3628 = vunpack.c.l.bf16 %v280
      %v3629 = vunpack.c.l.bf16 %v281
      %v3630 = vunpack.c.l.bf16 %v282
      %v3631 = vunpack.c.l.bf16 %v283
      %v3632 = vunpack.c.l.bf16 %v284
      %v3633 = vunpack.c.l.bf16 %v285
      %v3634 = vunpack.c.l.bf16 %v286
      %v3635 = vunpack.c.l.bf16 %v287
      %v3636 = vunpack.c.l.bf16 %v288
      %v3637 = vunpack.c.l.bf16 %v289
      %v3638 = vunpack.c.l.bf16 %v290
      %v3639 = vunpack.c.l.bf16 %v291
      %v3640 = vunpack.c.l.bf16 %v292
      %v3641 = vunpack.c.l.bf16 %v293
      %v3642 = vunpack.c.l.bf16 %v294
      %v3643 = vunpack.c.l.bf16 %v295
      %v3644 = vunpack.c.l.bf16 %v296
      %v3645 = vunpack.c.l.bf16 %v297
      %v3646 = vunpack.c.l.bf16 %v298
      %v3647 = vunpack.c.l.bf16 %v299
      %v3648 = vunpack.c.l.bf16 %v300
      %v3649 = vunpack.c.l.bf16 %v301
      %v3650 = vunpack.c.l.bf16 %v302
      %v3651 = vunpack.c.l.bf16 %v303
      %v3652 = vunpack.c.l.bf16 %v304
      %v3653 = vunpack.c.l.bf16 %v305
      %v3654 = vunpack.c.l.bf16 %v306
      %v3655 = vunpack.c.l.bf16 %v307
      %v3656 = vunpack.c.l.bf16 %v308
      %v3657 = vunpack.c.l.bf16 %v309
      %v3658 = vunpack.c.l.bf16 %v310
      %v3659 = vunpack.c.l.bf16 %v311
      %v3660 = vadd.f32 %v3502, %v3628
      %v3661 = vadd.f32 %v3505, %v3629
      %v3662 = vadd.f32 %v3510, %v3630
      %v3663 = vadd.f32 %v3513, %v3631
      %v3664 = vadd.f32 %v3518, %v3632
      %v3665 = vadd.f32 %v3521, %v3633
      %v3666 = vadd.f32 %v3526, %v3634
      %v3667 = vadd.f32 %v3529, %v3635
      %v3668 = vadd.f32 %v3534, %v3636
      %v3669 = vadd.f32 %v3537, %v3637
      %v3670 = vadd.f32 %v3542, %v3638
      %v3671 = vadd.f32 %v3545, %v3639
      %v3672 = vadd.f32 %v3550, %v3640
      %v3673 = vadd.f32 %v3553, %v3641
      %v3674 = vadd.f32 %v3558, %v3642
      %v3675 = vadd.f32 %v3561, %v3643
      %v3676 = vadd.f32 %v3566, %v3644
      %v3677 = vadd.f32 %v3569, %v3645
      %v3678 = vadd.f32 %v3574, %v3646
      %v3679 = vadd.f32 %v3577, %v3647
      %v3680 = vadd.f32 %v3582, %v3648
      %v3681 = vadd.f32 %v3585, %v3649
      %v3682 = vadd.f32 %v3590, %v3650
      %v3683 = vadd.f32 %v3593, %v3651
      %v3684 = vadd.f32 %v3598, %v3652
      %v3685 = vadd.f32 %v3601, %v3653
      %v3686 = vadd.f32 %v3606, %v3654
      %v3687 = vadd.f32 %v3609, %v3655
      %v3688 = vadd.f32 %v3614, %v3656
      %v3689 = vadd.f32 %v3617, %v3657
      %v3690 = vadd.f32 %v3622, %v3658
      %v3691 = vadd.f32 %v3625, %v3659
      %v3692 = vmax.f32 %v3660, 0.0
      %v3693 = vmax.f32 %v3661, 0.0
      %v3694 = vmax.f32 %v3662, 0.0
      %v3695 = vmax.f32 %v3663, 0.0
      %v3696 = vmax.f32 %v3664, 0.0
      %v3697 = vmax.f32 %v3665, 0.0
      %v3698 = vmax.f32 %v3666, 0.0
      %v3699 = vmax.f32 %v3667, 0.0
      %v3700 = vmax.f32 %v3668, 0.0
      %v3701 = vmax.f32 %v3669, 0.0
      %v3702 = vmax.f32 %v3670, 0.0
      %v3703 = vmax.f32 %v3671, 0.0
      %v3704 = vmax.f32 %v3672, 0.0
      %v3705 = vmax.f32 %v3673, 0.0
      %v3706 = vmax.f32 %v3674, 0.0
      %v3707 = vmax.f32 %v3675, 0.0
      %v3708 = vmax.f32 %v3676, 0.0
      %v3709 = vmax.f32 %v3677, 0.0
      %v3710 = vmax.f32 %v3678, 0.0
      %v3711 = vmax.f32 %v3679, 0.0
      %v3712 = vmax.f32 %v3680, 0.0
      %v3713 = vmax.f32 %v3681, 0.0
      %v3714 = vmax.f32 %v3682, 0.0
      %v3715 = vmax.f32 %v3683, 0.0
      %v3716 = vmax.f32 %v3684, 0.0
      %v3717 = vmax.f32 %v3685, 0.0
      %v3718 = vmax.f32 %v3686, 0.0
      %v3719 = vmax.f32 %v3687, 0.0
      %v3720 = vmax.f32 %v3688, 0.0
      %v3721 = vmax.f32 %v3689, 0.0
      %v3722 = vmax.f32 %v3690, 0.0
      %v3723 = vmax.f32 %v3691, 0.0
      %3724 = vst.msk [vmem:[%s278] sm:$0xff] %vm407, %v3692
      %3725 = vst.msk [vmem:[%s278 + $0x8] sm:$0xff] %vm407, %v3693
      %3726 = vst.msk [vmem:[%s278 + $0x10] sm:$0xff] %vm407, %v3694
      %3727 = vst.msk [vmem:[%s278 + $0x18] sm:$0xff] %vm407, %v3695
      %3728 = vst.msk [vmem:[%s278 + $0x20] sm:$0xff] %vm407, %v3696
      %3729 = vst.msk [vmem:[%s278 + $0x28] sm:$0xff] %vm407, %v3697
      %3730 = vst.msk [vmem:[%s278 + $0x30] sm:$0xff] %vm407, %v3698
      %3731 = vst.msk [vmem:[%s278 + $0x38] sm:$0xff] %vm407, %v3699
      %3732 = vst.msk [vmem:[%s278 + $0x40] sm:$0xff] %vm407, %v3700
      %3733 = vst.msk [vmem:[%s278 + $0x48] sm:$0xff] %vm407, %v3701
      %3734 = vst.msk [vmem:[%s278 + $0x50] sm:$0xff] %vm407, %v3702
      %3735 = vst.msk [vmem:[%s278 + $0x58] sm:$0xff] %vm407, %v3703
      %3736 = vst.msk [vmem:[%s278 + $0x60] sm:$0xff] %vm407, %v3704
      %3737 = vst.msk [vmem:[%s278 + $0x68] sm:$0xff] %vm407, %v3705
      %3738 = vst.msk [vmem:[%s278 + $0x70] sm:$0xff] %vm407, %v3706
      %3739 = vst.msk [vmem:[%s278 + $0x78] sm:$0xff] %vm407, %v3707
      %3740 = vst.msk [vmem:[%s278 + $0x80] sm:$0xff] %vm407, %v3708
      %3741 = vst.msk [vmem:[%s278 + $0x88] sm:$0xff] %vm407, %v3709
      %3742 = vst.msk [vmem:[%s278 + $0x90] sm:$0xff] %vm407, %v3710
      %3743 = vst.msk [vmem:[%s278 + $0x98] sm:$0xff] %vm407, %v3711
      %3744 = vst.msk [vmem:[%s278 + $0xa0] sm:$0xff] %vm407, %v3712
      %3745 = vst.msk [vmem:[%s278 + $0xa8] sm:$0xff] %vm407, %v3713
      %3746 = vst.msk [vmem:[%s278 + $0xb0] sm:$0xff] %vm407, %v3714
      %3747 = vst.msk [vmem:[%s278 + $0xb8] sm:$0xff] %vm407, %v3715
      %3748 = vst.msk [vmem:[%s278 + $0xc0] sm:$0xff] %vm407, %v3716
      %3749 = vst.msk [vmem:[%s278 + $0xc8] sm:$0xff] %vm407, %v3717
      %3750 = vst.msk [vmem:[%s278 + $0xd0] sm:$0xff] %vm407, %v3718
      %3751 = vst.msk [vmem:[%s278 + $0xd8] sm:$0xff] %vm407, %v3719
      %3752 = vst.msk [vmem:[%s278 + $0xe0] sm:$0xff] %vm407, %v3720
      %3753 = vst.msk [vmem:[%s278 + $0xe8] sm:$0xff] %vm407, %v3721
      %3754 = vst.msk [vmem:[%s278 + $0xf0] sm:$0xff] %vm407, %v3722
      %3755 = vst.msk [vmem:[%s278 + $0xf8] sm:$0xff] %vm407, %v3723
      %p3756 = scmp.lt.s32.totalorder %s18, 1
      %s3757 = scalar_select %p3756, %s18, 1
      %s3758 = smul.addr %s3757, 32
      %s3759 = smul.addr %s3758, 8
      %s3760 = scalar_lea.vmem %s7, %s3759
      // Predicated region
      $region49: #{bottleneck_forward.1} parent=47 // pred_check
        %p3761 = pneg %p188
      $region50: #{bottleneck_forward.1} parent=47 // pred_check_branch
        %3763 = sbr.rel (%p3761) target = $region52
      $region51: #{bottleneck_forward.1} parent=47 // pred_region
        _
      $region52: #{bottleneck_forward.1} parent=47 // pred_fallthru
        _
    $region48: #{bottleneck_forward.1} parent=5 // pred_fallthru
      _
    %p3764 = scmp.le.s32.totalorder 2, %s13
    // Predicated region
    $region53: #{bottleneck_forward.1} parent=5 // pred_check
      %p3765 = pneg %p3764
    $region54: #{bottleneck_forward.1} parent=5 // pred_check_branch
      %3767 = sbr.rel (%p3765) target = $region56
    $region55: #{bottleneck_forward.1} parent=5 // pred_region
      %s3768 = ssub.s32 %s13, 2
      // Predicated region
      $region57: #{bottleneck_forward.1} parent=55 // pred_check
        %p3769 = pneg %p194
      $region58: #{bottleneck_forward.1} parent=55 // pred_check_branch
        %3771 = sbr.rel (%p3769) target = $region60
      $region59: #{bottleneck_forward.1} parent=55 // pred_region
        %p3772 = scmp.lt.s32.totalorder %s19, 1
        %s3773 = scalar_select %p3772, %s19, 1
        %s3774 = smul.addr %s3773, 32
        %s3775 = smul.addr %s3774, 8
        %s3776 = scalar_lea.vmem %s7, %s3775
      $region60: #{bottleneck_forward.1} parent=55 // pred_fallthru
        _
    $region56: #{bottleneck_forward.1} parent=5 // pred_fallthru
      _
  $region6: #{bottleneck_forward.1} parent=0 // loop_footer
    %s17 = sadd.s32 1, %s13
  $region7: #{bottleneck_forward.1} parent=0 // loop_footer_branch
    %12 = sbr.rel target = $region3
  $region8: #{bottleneck_forward.1} parent=0 // loop_exit
    _

</llo_original>
